<compile_context>
chip_gen: v6e
topology: v6e:2x2x1
jax: 0.10.0
libtpu: 0.0.40
codegen_flags: <defaults>
</compile_context>

<pallas_src>
import functools

import jax
import jax.numpy as jnp
from jax.experimental import pallas as pl
from jax.experimental.pallas import tpu as pltpu

LN_EPS = 1e-5
MASK_BIAS = -1e30


# ----------------------------------------------------------------------------
# Fused encoder-layer kernel.  grid = (B, S // TQ)
# ----------------------------------------------------------------------------
def _encoder_layer_kernel(
        x_q_ref, x_kv_ref, mask_ref, np_ref,
        wq_ref, bq_ref, wk_ref, bk_ref, wv_ref, bv_ref,
        wo_ref, bo_ref, g1_ref, be1_ref,
        w1_ref, c1_ref, w2_ref, c2_ref, g2_ref, be2_ref,
        out_ref, attn_ref,
        *, num_head, dk, dv):
    f32 = jnp.float32
    bf16 = jnp.bfloat16

    x_q = x_q_ref[0]                              # (TQ, E) f32 (residual path)
    x_q_bf = x_q.astype(bf16)
    x_kv_bf = x_kv_ref[0].astype(bf16)            # (S, E)

    # Additive attention-mask bias, shared across heads (no compare+select).
    neg_bias = mask_ref[0] * f32(MASK_BIAS)       # (TQ, S)
    npad = np_ref[0]                              # (TQ, 1)

    # ---- multi-head attention: slice weights per head, accumulate the output
    #      projection head-by-head (no concat of head outputs). ----
    proj = None
    for h in range(num_head):                     # small static head loop
        qh = jnp.dot(x_q_bf, wq_ref[:, h * dk:(h + 1) * dk],
                     preferred_element_type=f32) + bq_ref[:, h * dk:(h + 1) * dk]
        kh = jnp.dot(x_kv_bf, wk_ref[:, h * dk:(h + 1) * dk],
                     preferred_element_type=f32) + bk_ref[:, h * dk:(h + 1) * dk]
        vh = jnp.dot(x_kv_bf, wv_ref[:, h * dv:(h + 1) * dv],
                     preferred_element_type=f32) + bv_ref[:, h * dv:(h + 1) * dv]

        # scores: (TQ, dk) x (S, dk)^T  via dot_general (no explicit transpose)
        scores = jax.lax.dot_general(
            qh.astype(bf16), kh.astype(bf16),
            (((1,), (1,)), ((), ())),
            preferred_element_type=f32) + neg_bias

        m = jnp.max(scores, axis=-1, keepdims=True)
        p = jnp.exp(scores - m)
        attn = p * pl.reciprocal(jnp.sum(p, axis=-1, keepdims=True), approx=True)
        attn_ref[h, 0] = attn.astype(attn_ref.dtype)

        hv = jnp.dot(attn.astype(bf16), vh.astype(bf16),
                     preferred_element_type=f32)                     # (TQ, dv)
        ph = jnp.dot(hv.astype(bf16), wo_ref[h * dv:(h + 1) * dv, :],
                     preferred_element_type=f32)                     # (TQ, E)
        proj = ph if proj is None else proj + ph

    # residual + LayerNorm 1 (single-pass moments), then non-pad mask
    y = proj + bo_ref[...] + x_q
    mu = jnp.mean(y, axis=-1, keepdims=True)
    ms = jnp.mean(y * y, axis=-1, keepdims=True)
    y_n = (y - mu) * jax.lax.rsqrt(ms - mu * mu + LN_EPS)
    mha = (y_n * g1_ref[...] + be1_ref[...]) * npad

    # ---- feed-forward: Linear -> ReLU -> Linear -> residual -> LN2 -> mask ----
    hdd = jnp.dot(mha.astype(bf16), w1_ref[...],
                  preferred_element_type=f32) + c1_ref[...]
    hdd = jnp.maximum(hdd, 0.0)
    y2 = jnp.dot(hdd.astype(bf16), w2_ref[...],
                 preferred_element_type=f32) + c2_ref[...]
    y2 = y2 + mha
    mu2 = jnp.mean(y2, axis=-1, keepdims=True)
    ms2 = jnp.mean(y2 * y2, axis=-1, keepdims=True)
    y2_n = (y2 - mu2) * jax.lax.rsqrt(ms2 - mu2 * mu2 + LN_EPS)
    out_ref[0] = (y2_n * g2_ref[...] + be2_ref[...]) * npad


def _full_spec(arr):
    """BlockSpec for a grid-invariant, fully-resident (weight) array."""
    nd = arr.ndim
    return pl.BlockSpec(arr.shape, lambda b, q, _nd=nd: (0,) * _nd)


# ----------------------------------------------------------------------------
# Wrapper: EncoderLayer forward
# ----------------------------------------------------------------------------
def encoder_layer_forward(params, x, self_attention_mask, non_pad_mask, *,
                          max_tq=128):
    B, S, E = x.shape
    H = params["num_head"]
    dk = params["q_k_out_dim"]
    dv = params["v_out_dim"]
    temperature = float(dk) ** 0.5

    # query-block tile size (second-to-last block dim must divide by 8 or be full)
    TQ = min(S, max_tq)
    if S % TQ != 0 or TQ % 8 != 0:
        TQ = S
    nq = S // TQ

    bf16 = jnp.bfloat16
    # fold 1/temperature into the q projection; cast matmul weights to bf16 once
    weight_args = (
        (params["wq"] / temperature).astype(bf16),
        params["bq"] / temperature,
        params["wk"].astype(bf16), params["bk"],
        params["wv"].astype(bf16), params["bv"],
        params["wo"].astype(bf16), params["bo"],
        params["ln1_g"], params["ln1_b"],
        params["w1"].astype(bf16), params["b1"],
        params["w2"].astype(bf16), params["b2"],
        params["ln2_g"], params["ln2_b"],
    )

    kernel = functools.partial(_encoder_layer_kernel, num_head=H, dk=dk, dv=dv)

    out, attn = pl.pallas_call(
        kernel,
        out_shape=(jax.ShapeDtypeStruct((B, S, E), jnp.float32),
                   jax.ShapeDtypeStruct((H, B, S, S), jnp.float32)),
        grid=(B, nq),
        in_specs=[pl.BlockSpec((1, TQ, E), lambda b, q: (b, q, 0)),   # x (query rows)
                  pl.BlockSpec((1, S, E), lambda b, q: (b, 0, 0)),    # x (keys/values)
                  pl.BlockSpec((1, TQ, S), lambda b, q: (b, q, 0)),   # attention mask
                  pl.BlockSpec((1, TQ, 1), lambda b, q: (b, q, 0))]   # non-pad mask
                 + [_full_spec(w) for w in weight_args],
        out_specs=(pl.BlockSpec((1, TQ, E), lambda b, q: (b, q, 0)),
                   pl.BlockSpec((H, 1, TQ, S), lambda b, q: (0, b, q, 0))),
        compiler_params=pltpu.CompilerParams(
            dimension_semantics=("parallel", "parallel"),
            vmem_limit_bytes=32 * 1024 * 1024),
    )(x, x, self_attention_mask, non_pad_mask, *weight_args)

    # torch returns attention as [num_head * batch, Sq, Skv], head-major
    return out, attn.reshape(H * B, S, S)


# ----------------------------------------------------------------------------
# Pure-JAX reference (mirrors the PyTorch forward, eval mode, f32 everywhere)
# ----------------------------------------------------------------------------
def encoder_layer_reference(params, x, mask, non_pad):
    B, S, E = x.shape
    H, dk, dv = params["num_head"], params["q_k_out_dim"], params["v_out_dim"]
    temp = float(dk) ** 0.5

    def linear(a, w, b):
        return a @ w + b[0]

    q = linear(x, params["wq"], params["bq"]).reshape(B, S, H, dk)
    k = linear(x, params["wk"], params["bk"]).reshape(B, S, H, dk)
    v = linear(x, params["wv"], params["bv"]).reshape(B, S, H, dv)
    q = jnp.transpose(q, (2, 0, 1, 3)).reshape(H * B, S, dk)
    k = jnp.transpose(k, (2, 0, 1, 3)).reshape(H * B, S, dk)
    v = jnp.transpose(v, (2, 0, 1, 3)).reshape(H * B, S, dv)
    mask_r = jnp.tile(mask, (H, 1, 1))

    scores = jnp.einsum("bqd,bkd->bqk", q, k) / temp
    scores = jnp.where(mask_r > 0, -jnp.inf, scores)
    attn = jax.nn.softmax(scores, axis=-1)
    out = jnp.einsum("bqk,bkd->bqd", attn, v)
    out = out.reshape(H, B, S, dv)
    out = jnp.transpose(out, (1, 2, 0, 3)).reshape(B, S, H * dv)
    out = linear(out, params["wo"], params["bo"]) + x

    def ln(y, g, b):
        mu = jnp.mean(y, -1, keepdims=True)
        var = jnp.mean((y - mu) ** 2, -1, keepdims=True)
        return (y - mu) / jnp.sqrt(var + LN_EPS) * g[0] + b[0]

    mha = ln(out, params["ln1_g"], params["ln1_b"]) * non_pad
    h = jax.nn.relu(linear(mha, params["w1"], params["b1"]))
    y = linear(h, params["w2"], params["b2"])
    ffn = ln(y + mha, params["ln2_g"], params["ln2_b"]) * non_pad
    return ffn, attn


# ----------------------------------------------------------------------------
def make_params(key, num_head, embedding_dim, q_k_out_dim, v_out_dim, ff_dim):
    ks = jax.random.split(key, 12)
    E, H, dk, dv, F = embedding_dim, num_head, q_k_out_dim, v_out_dim, ff_dim
    qk_std = (2.0 / (E + dk)) ** 0.5
    v_std = (2.0 / (E + dv)) ** 0.5
    fc_std = (2.0 / (H * dv + E)) ** 0.5      # ~ xavier_normal
    lin_std = 1.0 / (E ** 0.5)
    return {
        "num_head": H, "q_k_out_dim": dk, "v_out_dim": dv,
        "wq": jax.random.normal(ks[0], (E, H * dk), jnp.float32) * qk_std,
        "bq": jax.random.normal(ks[1], (1, H * dk), jnp.float32) * 0.01,
        "wk": jax.random.normal(ks[2], (E, H * dk), jnp.float32) * qk_std,
        "bk": jax.random.normal(ks[3], (1, H * dk), jnp.float32) * 0.01,
        "wv": jax.random.normal(ks[4], (E, H * dv), jnp.float32) * v_std,
        "bv": jax.random.normal(ks[5], (1, H * dv), jnp.float32) * 0.01,
        "wo": jax.random.normal(ks[6], (H * dv, E), jnp.float32) * fc_std,
        "bo": jax.random.normal(ks[7], (1, E), jnp.float32) * 0.01,
        "ln1_g": jnp.ones((1, E), jnp.float32),
        "ln1_b": jnp.zeros((1, E), jnp.float32),
        "w1": jax.random.normal(ks[8], (E, F), jnp.float32) * lin_std,
        "b1": jax.random.normal(ks[9], (1, F), jnp.float32) * 0.01,
        "w2": jax.random.normal(ks[10], (F, E), jnp.float32) * (1.0 / F ** 0.5),
        "b2": jax.random.normal(ks[11], (1, E), jnp.float32) * 0.01,
        "ln2_g": jnp.ones((1, E), jnp.float32),
        "ln2_b": jnp.zeros((1, E), jnp.float32),
    }


if __name__ == "__main__":
    B, S, E = 2, 8, 32
    H, DK, DV, FF = 4, 8, 8, 64

    key = jax.random.PRNGKey(0)
    pkey, xkey = jax.random.split(key)
    params = make_params(pkey, H, E, DK, DV, FF)

    x = jax.random.normal(xkey, (B, S, E), jnp.float32)

    # batch 1 has its last 2 positions padded
    pad = jnp.zeros((B, S), jnp.float32).at[1, S - 2:].set(1.0)   # 1 = pad
    self_attention_mask = jnp.broadcast_to(pad[:, None, :], (B, S, S)).astype(jnp.float32)
    non_pad_mask = (1.0 - pad)[:, :, None].astype(jnp.float32)

    out, attn = encoder_layer_forward(params, x, self_attention_mask, non_pad_mask)
    out = jax.block_until_ready(out)
    attn = jax.block_until_ready(attn)

    ref_out, ref_attn = encoder_layer_reference(params, x, self_attention_mask, non_pad_mask)
    assert out.shape == (B, S, E)
    assert attn.shape == (H * B, S, S)
    assert bool(jnp.all(jnp.isfinite(out)))
    assert bool(jnp.all(jnp.isfinite(attn)))
    # tolerance accounts for bf16 MXU inputs (f32 accumulation) vs. the f32 reference
    assert jnp.allclose(out, ref_out, rtol=5e-2, atol=5e-2)
    assert jnp.allclose(attn, ref_attn, rtol=5e-2, atol=5e-2)

    print("KERNEL_OK")
</pallas_src>

<mosaic_0001>
module attributes {stable_mosaic.version = 11 : i64} {
  func.func @_encoder_layer_kernel(%arg0: i32, %arg1: i32, %arg2: memref<1x8x32xf32, #tpu.memory_space<vmem>>, %arg3: memref<1x8x32xf32, #tpu.memory_space<vmem>>, %arg4: memref<1x8x8xf32, #tpu.memory_space<vmem>>, %arg5: memref<1x8x1xf32, #tpu.memory_space<vmem>>, %arg6: memref<32x32xbf16, #tpu.memory_space<vmem>>, %arg7: memref<1x32xf32, #tpu.memory_space<vmem>>, %arg8: memref<32x32xbf16, #tpu.memory_space<vmem>>, %arg9: memref<1x32xf32, #tpu.memory_space<vmem>>, %arg10: memref<32x32xbf16, #tpu.memory_space<vmem>>, %arg11: memref<1x32xf32, #tpu.memory_space<vmem>>, %arg12: memref<32x32xbf16, #tpu.memory_space<vmem>>, %arg13: memref<1x32xf32, #tpu.memory_space<vmem>>, %arg14: memref<1x32xf32, #tpu.memory_space<vmem>>, %arg15: memref<1x32xf32, #tpu.memory_space<vmem>>, %arg16: memref<32x64xbf16, #tpu.memory_space<vmem>>, %arg17: memref<1x64xf32, #tpu.memory_space<vmem>>, %arg18: memref<64x32xbf16, #tpu.memory_space<vmem>>, %arg19: memref<1x32xf32, #tpu.memory_space<vmem>>, %arg20: memref<1x32xf32, #tpu.memory_space<vmem>>, %arg21: memref<1x32xf32, #tpu.memory_space<vmem>>, %arg22: memref<1x8x32xf32, #tpu.memory_space<vmem>>, %arg23: memref<4x1x8x8xf32, #tpu.memory_space<vmem>>) attributes {dimension_semantics = [#tpu.dimension_semantics<parallel>, #tpu.dimension_semantics<parallel>], iteration_bounds = array<i64: 2, 1>, scalar_prefetch = 0 : i64, scratch_operands = 0 : i64, tpu.core_type = #tpu.core_type<tc>, window_params = [{transform_indices = @transform_0, window_bounds = array<i64: 1, 8, 32>}, {transform_indices = @transform_1, window_bounds = array<i64: 1, 8, 32>}, {transform_indices = @transform_2, window_bounds = array<i64: 1, 8, 8>}, {transform_indices = @transform_3, window_bounds = array<i64: 1, 8, 1>}, {pipeline_mode = #tpu.pipeline_mode<synchronous>, transform_indices = @transform_4, window_bounds = array<i64: 32, 32>}, {pipeline_mode = #tpu.pipeline_mode<synchronous>, transform_indices = @transform_5, window_bounds = array<i64: 1, 32>}, {pipeline_mode = #tpu.pipeline_mode<synchronous>, transform_indices = @transform_6, window_bounds = array<i64: 32, 32>}, {pipeline_mode = #tpu.pipeline_mode<synchronous>, transform_indices = @transform_7, window_bounds = array<i64: 1, 32>}, {pipeline_mode = #tpu.pipeline_mode<synchronous>, transform_indices = @transform_8, window_bounds = array<i64: 32, 32>}, {pipeline_mode = #tpu.pipeline_mode<synchronous>, transform_indices = @transform_9, window_bounds = array<i64: 1, 32>}, {pipeline_mode = #tpu.pipeline_mode<synchronous>, transform_indices = @transform_10, window_bounds = array<i64: 32, 32>}, {pipeline_mode = #tpu.pipeline_mode<synchronous>, transform_indices = @transform_11, window_bounds = array<i64: 1, 32>}, {pipeline_mode = #tpu.pipeline_mode<synchronous>, transform_indices = @transform_12, window_bounds = array<i64: 1, 32>}, {pipeline_mode = #tpu.pipeline_mode<synchronous>, transform_indices = @transform_13, window_bounds = array<i64: 1, 32>}, {pipeline_mode = #tpu.pipeline_mode<synchronous>, transform_indices = @transform_14, window_bounds = array<i64: 32, 64>}, {pipeline_mode = #tpu.pipeline_mode<synchronous>, transform_indices = @transform_15, window_bounds = array<i64: 1, 64>}, {pipeline_mode = #tpu.pipeline_mode<synchronous>, transform_indices = @transform_16, window_bounds = array<i64: 64, 32>}, {pipeline_mode = #tpu.pipeline_mode<synchronous>, transform_indices = @transform_17, window_bounds = array<i64: 1, 32>}, {pipeline_mode = #tpu.pipeline_mode<synchronous>, transform_indices = @transform_18, window_bounds = array<i64: 1, 32>}, {pipeline_mode = #tpu.pipeline_mode<synchronous>, transform_indices = @transform_19, window_bounds = array<i64: 1, 32>}, {transform_indices = @transform_20, window_bounds = array<i64: 1, 8, 32>}, {transform_indices = @transform_21, window_bounds = array<i64: 4, 1, 8, 8>}]} {
    %c0 = arith.constant 0 : index
    %c0_0 = arith.constant 0 : index
    %c0_1 = arith.constant 0 : index
    %0 = vector.load %arg2[%c0, %c0_0, %c0_1] : memref<1x8x32xf32, #tpu.memory_space<vmem>>, vector<1x8x32xf32>
    %1 = vector.shape_cast %0 : vector<1x8x32xf32> to vector<8x32xf32>
    %2 = arith.truncf %1 : vector<8x32xf32> to vector<8x32xbf16>
    %c0_2 = arith.constant 0 : index
    %c0_3 = arith.constant 0 : index
    %c0_4 = arith.constant 0 : index
    %3 = vector.load %arg3[%c0_2, %c0_3, %c0_4] : memref<1x8x32xf32, #tpu.memory_space<vmem>>, vector<1x8x32xf32>
    %4 = vector.shape_cast %3 : vector<1x8x32xf32> to vector<8x32xf32>
    %5 = arith.truncf %4 : vector<8x32xf32> to vector<8x32xbf16>
    %c0_5 = arith.constant 0 : index
    %c0_6 = arith.constant 0 : index
    %c0_7 = arith.constant 0 : index
    %6 = vector.load %arg4[%c0_5, %c0_6, %c0_7] : memref<1x8x8xf32, #tpu.memory_space<vmem>>, vector<1x8x8xf32>
    %7 = vector.shape_cast %6 : vector<1x8x8xf32> to vector<8x8xf32>
    %cst = arith.constant -1.000000e+30 : f32
    %8 = vector.broadcast %cst : f32 to vector<8x8xf32>
    %9 = arith.mulf %7, %8 : vector<8x8xf32>
    %c0_8 = arith.constant 0 : index
    %c0_9 = arith.constant 0 : index
    %c0_10 = arith.constant 0 : index
    %10 = vector.load %arg5[%c0_8, %c0_9, %c0_10] : memref<1x8x1xf32, #tpu.memory_space<vmem>>, vector<1x8x1xf32>
    %11 = vector.shape_cast %10 : vector<1x8x1xf32> to vector<8x1xf32>
    %c0_11 = arith.constant 0 : index
    %c0_12 = arith.constant 0 : index
    %12 = vector.load %arg6[%c0_11, %c0_12] : memref<32x32xbf16, #tpu.memory_space<vmem>>, vector<32x8xbf16>
    %cst_13 = arith.constant dense<0.000000e+00> : vector<8x8xf32>
    %13 = tpu.matmul %2, %12, %cst_13 {dimension_numbers = #tpu.dot_dimension_numbers<[1], [0], [0], [1], [0, 0, 1, 1], [], []>} : vector<8x32xbf16>, vector<32x8xbf16>, vector<8x8xf32> -> vector<8x8xf32>
    %c0_14 = arith.constant 0 : index
    %c0_15 = arith.constant 0 : index
    %14 = vector.load %arg7[%c0_14, %c0_15] : memref<1x32xf32, #tpu.memory_space<vmem>>, vector<1x8xf32>
    %15 = vector.broadcast %14 : vector<1x8xf32> to vector<8x8xf32>
    %16 = arith.addf %13, %15 : vector<8x8xf32>
    %c0_16 = arith.constant 0 : index
    %c0_17 = arith.constant 0 : index
    %17 = vector.load %arg8[%c0_16, %c0_17] : memref<32x32xbf16, #tpu.memory_space<vmem>>, vector<32x8xbf16>
    %cst_18 = arith.constant dense<0.000000e+00> : vector<8x8xf32>
    %18 = tpu.matmul %5, %17, %cst_18 {dimension_numbers = #tpu.dot_dimension_numbers<[1], [0], [0], [1], [0, 0, 1, 1], [], []>} : vector<8x32xbf16>, vector<32x8xbf16>, vector<8x8xf32> -> vector<8x8xf32>
    %c0_19 = arith.constant 0 : index
    %c0_20 = arith.constant 0 : index
    %19 = vector.load %arg9[%c0_19, %c0_20] : memref<1x32xf32, #tpu.memory_space<vmem>>, vector<1x8xf32>
    %20 = vector.broadcast %19 : vector<1x8xf32> to vector<8x8xf32>
    %21 = arith.addf %18, %20 : vector<8x8xf32>
    %c0_21 = arith.constant 0 : index
    %c0_22 = arith.constant 0 : index
    %22 = vector.load %arg10[%c0_21, %c0_22] : memref<32x32xbf16, #tpu.memory_space<vmem>>, vector<32x8xbf16>
    %cst_23 = arith.constant dense<0.000000e+00> : vector<8x8xf32>
    %23 = tpu.matmul %5, %22, %cst_23 {dimension_numbers = #tpu.dot_dimension_numbers<[1], [0], [0], [1], [0, 0, 1, 1], [], []>} : vector<8x32xbf16>, vector<32x8xbf16>, vector<8x8xf32> -> vector<8x8xf32>
    %c0_24 = arith.constant 0 : index
    %c0_25 = arith.constant 0 : index
    %24 = vector.load %arg11[%c0_24, %c0_25] : memref<1x32xf32, #tpu.memory_space<vmem>>, vector<1x8xf32>
    %25 = vector.broadcast %24 : vector<1x8xf32> to vector<8x8xf32>
    %26 = arith.addf %23, %25 : vector<8x8xf32>
    %27 = arith.truncf %16 : vector<8x8xf32> to vector<8x8xbf16>
    %28 = arith.truncf %21 : vector<8x8xf32> to vector<8x8xbf16>
    %cst_26 = arith.constant dense<0.000000e+00> : vector<8x8xf32>
    %29 = tpu.matmul %27, %28, %cst_26 {dimension_numbers = #tpu.dot_dimension_numbers<[1], [1], [0], [0], [0, 0, 1, 0], [], []>} : vector<8x8xbf16>, vector<8x8xbf16>, vector<8x8xf32> -> vector<8x8xf32>
    %30 = arith.addf %29, %9 : vector<8x8xf32>
    %cst_27 = arith.constant dense<0xFF800000> : vector<8xf32>
    %31 = vector.multi_reduction <maximumf>, %30, %cst_27 [1] : vector<8x8xf32> to vector<8xf32>
    %32 = vector.shape_cast %31 : vector<8xf32> to vector<8x1xf32>
    %33 = vector.broadcast %32 : vector<8x1xf32> to vector<8x8xf32>
    %34 = arith.subf %30, %33 : vector<8x8xf32>
    %35 = math.exp %34 : vector<8x8xf32>
    %cst_28 = arith.constant dense<0.000000e+00> : vector<8xf32>
    %36 = vector.multi_reduction <add>, %35, %cst_28 [1] : vector<8x8xf32> to vector<8xf32>
    %37 = vector.shape_cast %36 : vector<8xf32> to vector<8x1xf32>
    %38 = tpu.reciprocal %37 {approx = true} : vector<8x1xf32> -> vector<8x1xf32>
    %39 = vector.broadcast %38 : vector<8x1xf32> to vector<8x8xf32>
    %40 = arith.mulf %35, %39 : vector<8x8xf32>
    %c0_29 = arith.constant 0 : index
    %c0_30 = arith.constant 0 : index
    %c0_31 = arith.constant 0 : index
    %c0_32 = arith.constant 0 : index
    %41 = vector.load %arg23[%c0_29, %c0_30, %c0_31, %c0_32] : memref<4x1x8x8xf32, #tpu.memory_space<vmem>>, vector<1x1x8x8xf32>
    %42 = vector.shape_cast %41 : vector<1x1x8x8xf32> to vector<8x8xf32>
    %43 = vector.shape_cast %40 : vector<8x8xf32> to vector<1x1x8x8xf32>
    tpu.vector_store %arg23[%c0_29, %c0_30, %c0_31, %c0_32], %43 {strides = array<i32>} : memref<4x1x8x8xf32, #tpu.memory_space<vmem>>, vector<1x1x8x8xf32>,
    %44 = arith.truncf %40 : vector<8x8xf32> to vector<8x8xbf16>
    %45 = arith.truncf %26 : vector<8x8xf32> to vector<8x8xbf16>
    %cst_33 = arith.constant dense<0.000000e+00> : vector<8x8xf32>
    %46 = tpu.matmul %44, %45, %cst_33 {dimension_numbers = #tpu.dot_dimension_numbers<[1], [0], [0], [1], [0, 0, 1, 1], [], []>} : vector<8x8xbf16>, vector<8x8xbf16>, vector<8x8xf32> -> vector<8x8xf32>
    %47 = arith.truncf %46 : vector<8x8xf32> to vector<8x8xbf16>
    %c0_34 = arith.constant 0 : index
    %c0_35 = arith.constant 0 : index
    %48 = vector.load %arg12[%c0_34, %c0_35] : memref<32x32xbf16, #tpu.memory_space<vmem>>, vector<8x32xbf16>
    %cst_36 = arith.constant dense<0.000000e+00> : vector<8x32xf32>
    %49 = tpu.matmul %47, %48, %cst_36 {dimension_numbers = #tpu.dot_dimension_numbers<[1], [0], [0], [1], [0, 0, 1, 1], [], []>} : vector<8x8xbf16>, vector<8x32xbf16>, vector<8x32xf32> -> vector<8x32xf32>
    %c0_37 = arith.constant 0 : index
    %c8 = arith.constant 8 : index
    %50 = vector.load %arg6[%c0_37, %c8] : memref<32x32xbf16, #tpu.memory_space<vmem>>, vector<32x8xbf16>
    %cst_38 = arith.constant dense<0.000000e+00> : vector<8x8xf32>
    %51 = tpu.matmul %2, %50, %cst_38 {dimension_numbers = #tpu.dot_dimension_numbers<[1], [0], [0], [1], [0, 0, 1, 1], [], []>} : vector<8x32xbf16>, vector<32x8xbf16>, vector<8x8xf32> -> vector<8x8xf32>
    %c0_39 = arith.constant 0 : index
    %c8_40 = arith.constant 8 : index
    %52 = vector.load %arg7[%c0_39, %c8_40] : memref<1x32xf32, #tpu.memory_space<vmem>>, vector<1x8xf32>
    %53 = vector.broadcast %52 : vector<1x8xf32> to vector<8x8xf32>
    %54 = arith.addf %51, %53 : vector<8x8xf32>
    %c0_41 = arith.constant 0 : index
    %c8_42 = arith.constant 8 : index
    %55 = vector.load %arg8[%c0_41, %c8_42] : memref<32x32xbf16, #tpu.memory_space<vmem>>, vector<32x8xbf16>
    %cst_43 = arith.constant dense<0.000000e+00> : vector<8x8xf32>
    %56 = tpu.matmul %5, %55, %cst_43 {dimension_numbers = #tpu.dot_dimension_numbers<[1], [0], [0], [1], [0, 0, 1, 1], [], []>} : vector<8x32xbf16>, vector<32x8xbf16>, vector<8x8xf32> -> vector<8x8xf32>
    %c0_44 = arith.constant 0 : index
    %c8_45 = arith.constant 8 : index
    %57 = vector.load %arg9[%c0_44, %c8_45] : memref<1x32xf32, #tpu.memory_space<vmem>>, vector<1x8xf32>
    %58 = vector.broadcast %57 : vector<1x8xf32> to vector<8x8xf32>
    %59 = arith.addf %56, %58 : vector<8x8xf32>
    %c0_46 = arith.constant 0 : index
    %c8_47 = arith.constant 8 : index
    %60 = vector.load %arg10[%c0_46, %c8_47] : memref<32x32xbf16, #tpu.memory_space<vmem>>, vector<32x8xbf16>
    %cst_48 = arith.constant dense<0.000000e+00> : vector<8x8xf32>
    %61 = tpu.matmul %5, %60, %cst_48 {dimension_numbers = #tpu.dot_dimension_numbers<[1], [0], [0], [1], [0, 0, 1, 1], [], []>} : vector<8x32xbf16>, vector<32x8xbf16>, vector<8x8xf32> -> vector<8x8xf32>
    %c0_49 = arith.constant 0 : index
    %c8_50 = arith.constant 8 : index
    %62 = vector.load %arg11[%c0_49, %c8_50] : memref<1x32xf32, #tpu.memory_space<vmem>>, vector<1x8xf32>
    %63 = vector.broadcast %62 : vector<1x8xf32> to vector<8x8xf32>
    %64 = arith.addf %61, %63 : vector<8x8xf32>
    %65 = arith.truncf %54 : vector<8x8xf32> to vector<8x8xbf16>
    %66 = arith.truncf %59 : vector<8x8xf32> to vector<8x8xbf16>
    %cst_51 = arith.constant dense<0.000000e+00> : vector<8x8xf32>
    %67 = tpu.matmul %65, %66, %cst_51 {dimension_numbers = #tpu.dot_dimension_numbers<[1], [1], [0], [0], [0, 0, 1, 0], [], []>} : vector<8x8xbf16>, vector<8x8xbf16>, vector<8x8xf32> -> vector<8x8xf32>
    %68 = arith.addf %67, %9 : vector<8x8xf32>
    %cst_52 = arith.constant dense<0xFF800000> : vector<8xf32>
    %69 = vector.multi_reduction <maximumf>, %68, %cst_52 [1] : vector<8x8xf32> to vector<8xf32>
    %70 = vector.shape_cast %69 : vector<8xf32> to vector<8x1xf32>
    %71 = vector.broadcast %70 : vector<8x1xf32> to vector<8x8xf32>
    %72 = arith.subf %68, %71 : vector<8x8xf32>
    %73 = math.exp %72 : vector<8x8xf32>
    %cst_53 = arith.constant dense<0.000000e+00> : vector<8xf32>
    %74 = vector.multi_reduction <add>, %73, %cst_53 [1] : vector<8x8xf32> to vector<8xf32>
    %75 = vector.shape_cast %74 : vector<8xf32> to vector<8x1xf32>
    %76 = tpu.reciprocal %75 {approx = true} : vector<8x1xf32> -> vector<8x1xf32>
    %77 = vector.broadcast %76 : vector<8x1xf32> to vector<8x8xf32>
    %78 = arith.mulf %73, %77 : vector<8x8xf32>
    %c1 = arith.constant 1 : index
    %c0_54 = arith.constant 0 : index
    %c0_55 = arith.constant 0 : index
    %c0_56 = arith.constant 0 : index
    %79 = vector.load %arg23[%c1, %c0_54, %c0_55, %c0_56] : memref<4x1x8x8xf32, #tpu.memory_space<vmem>>, vector<1x1x8x8xf32>
    %80 = vector.shape_cast %79 : vector<1x1x8x8xf32> to vector<8x8xf32>
    %81 = vector.shape_cast %78 : vector<8x8xf32> to vector<1x1x8x8xf32>
    tpu.vector_store %arg23[%c1, %c0_54, %c0_55, %c0_56], %81 {strides = array<i32>} : memref<4x1x8x8xf32, #tpu.memory_space<vmem>>, vector<1x1x8x8xf32>,
    %82 = arith.truncf %78 : vector<8x8xf32> to vector<8x8xbf16>
    %83 = arith.truncf %64 : vector<8x8xf32> to vector<8x8xbf16>
    %cst_57 = arith.constant dense<0.000000e+00> : vector<8x8xf32>
    %84 = tpu.matmul %82, %83, %cst_57 {dimension_numbers = #tpu.dot_dimension_numbers<[1], [0], [0], [1], [0, 0, 1, 1], [], []>} : vector<8x8xbf16>, vector<8x8xbf16>, vector<8x8xf32> -> vector<8x8xf32>
    %85 = arith.truncf %84 : vector<8x8xf32> to vector<8x8xbf16>
    %c8_58 = arith.constant 8 : index
    %c0_59 = arith.constant 0 : index
    %86 = vector.load %arg12[%c8_58, %c0_59] : memref<32x32xbf16, #tpu.memory_space<vmem>>, vector<8x32xbf16>
    %cst_60 = arith.constant dense<0.000000e+00> : vector<8x32xf32>
    %87 = tpu.matmul %85, %86, %cst_60 {dimension_numbers = #tpu.dot_dimension_numbers<[1], [0], [0], [1], [0, 0, 1, 1], [], []>} : vector<8x8xbf16>, vector<8x32xbf16>, vector<8x32xf32> -> vector<8x32xf32>
    %88 = arith.addf %49, %87 : vector<8x32xf32>
    %c0_61 = arith.constant 0 : index
    %c16 = arith.constant 16 : index
    %89 = vector.load %arg6[%c0_61, %c16] : memref<32x32xbf16, #tpu.memory_space<vmem>>, vector<32x8xbf16>
    %cst_62 = arith.constant dense<0.000000e+00> : vector<8x8xf32>
    %90 = tpu.matmul %2, %89, %cst_62 {dimension_numbers = #tpu.dot_dimension_numbers<[1], [0], [0], [1], [0, 0, 1, 1], [], []>} : vector<8x32xbf16>, vector<32x8xbf16>, vector<8x8xf32> -> vector<8x8xf32>
    %c0_63 = arith.constant 0 : index
    %c16_64 = arith.constant 16 : index
    %91 = vector.load %arg7[%c0_63, %c16_64] : memref<1x32xf32, #tpu.memory_space<vmem>>, vector<1x8xf32>
    %92 = vector.broadcast %91 : vector<1x8xf32> to vector<8x8xf32>
    %93 = arith.addf %90, %92 : vector<8x8xf32>
    %c0_65 = arith.constant 0 : index
    %c16_66 = arith.constant 16 : index
    %94 = vector.load %arg8[%c0_65, %c16_66] : memref<32x32xbf16, #tpu.memory_space<vmem>>, vector<32x8xbf16>
    %cst_67 = arith.constant dense<0.000000e+00> : vector<8x8xf32>
    %95 = tpu.matmul %5, %94, %cst_67 {dimension_numbers = #tpu.dot_dimension_numbers<[1], [0], [0], [1], [0, 0, 1, 1], [], []>} : vector<8x32xbf16>, vector<32x8xbf16>, vector<8x8xf32> -> vector<8x8xf32>
    %c0_68 = arith.constant 0 : index
    %c16_69 = arith.constant 16 : index
    %96 = vector.load %arg9[%c0_68, %c16_69] : memref<1x32xf32, #tpu.memory_space<vmem>>, vector<1x8xf32>
    %97 = vector.broadcast %96 : vector<1x8xf32> to vector<8x8xf32>
    %98 = arith.addf %95, %97 : vector<8x8xf32>
    %c0_70 = arith.constant 0 : index
    %c16_71 = arith.constant 16 : index
    %99 = vector.load %arg10[%c0_70, %c16_71] : memref<32x32xbf16, #tpu.memory_space<vmem>>, vector<32x8xbf16>
    %cst_72 = arith.constant dense<0.000000e+00> : vector<8x8xf32>
    %100 = tpu.matmul %5, %99, %cst_72 {dimension_numbers = #tpu.dot_dimension_numbers<[1], [0], [0], [1], [0, 0, 1, 1], [], []>} : vector<8x32xbf16>, vector<32x8xbf16>, vector<8x8xf32> -> vector<8x8xf32>
    %c0_73 = arith.constant 0 : index
    %c16_74 = arith.constant 16 : index
    %101 = vector.load %arg11[%c0_73, %c16_74] : memref<1x32xf32, #tpu.memory_space<vmem>>, vector<1x8xf32>
    %102 = vector.broadcast %101 : vector<1x8xf32> to vector<8x8xf32>
    %103 = arith.addf %100, %102 : vector<8x8xf32>
    %104 = arith.truncf %93 : vector<8x8xf32> to vector<8x8xbf16>
    %105 = arith.truncf %98 : vector<8x8xf32> to vector<8x8xbf16>
    %cst_75 = arith.constant dense<0.000000e+00> : vector<8x8xf32>
    %106 = tpu.matmul %104, %105, %cst_75 {dimension_numbers = #tpu.dot_dimension_numbers<[1], [1], [0], [0], [0, 0, 1, 0], [], []>} : vector<8x8xbf16>, vector<8x8xbf16>, vector<8x8xf32> -> vector<8x8xf32>
    %107 = arith.addf %106, %9 : vector<8x8xf32>
    %cst_76 = arith.constant dense<0xFF800000> : vector<8xf32>
    %108 = vector.multi_reduction <maximumf>, %107, %cst_76 [1] : vector<8x8xf32> to vector<8xf32>
    %109 = vector.shape_cast %108 : vector<8xf32> to vector<8x1xf32>
    %110 = vector.broadcast %109 : vector<8x1xf32> to vector<8x8xf32>
    %111 = arith.subf %107, %110 : vector<8x8xf32>
    %112 = math.exp %111 : vector<8x8xf32>
    %cst_77 = arith.constant dense<0.000000e+00> : vector<8xf32>
    %113 = vector.multi_reduction <add>, %112, %cst_77 [1] : vector<8x8xf32> to vector<8xf32>
    %114 = vector.shape_cast %113 : vector<8xf32> to vector<8x1xf32>
    %115 = tpu.reciprocal %114 {approx = true} : vector<8x1xf32> -> vector<8x1xf32>
    %116 = vector.broadcast %115 : vector<8x1xf32> to vector<8x8xf32>
    %117 = arith.mulf %112, %116 : vector<8x8xf32>
    %c2 = arith.constant 2 : index
    %c0_78 = arith.constant 0 : index
    %c0_79 = arith.constant 0 : index
    %c0_80 = arith.constant 0 : index
    %118 = vector.load %arg23[%c2, %c0_78, %c0_79, %c0_80] : memref<4x1x8x8xf32, #tpu.memory_space<vmem>>, vector<1x1x8x8xf32>
    %119 = vector.shape_cast %118 : vector<1x1x8x8xf32> to vector<8x8xf32>
    %120 = vector.shape_cast %117 : vector<8x8xf32> to vector<1x1x8x8xf32>
    tpu.vector_store %arg23[%c2, %c0_78, %c0_79, %c0_80], %120 {strides = array<i32>} : memref<4x1x8x8xf32, #tpu.memory_space<vmem>>, vector<1x1x8x8xf32>,
    %121 = arith.truncf %117 : vector<8x8xf32> to vector<8x8xbf16>
    %122 = arith.truncf %103 : vector<8x8xf32> to vector<8x8xbf16>
    %cst_81 = arith.constant dense<0.000000e+00> : vector<8x8xf32>
    %123 = tpu.matmul %121, %122, %cst_81 {dimension_numbers = #tpu.dot_dimension_numbers<[1], [0], [0], [1], [0, 0, 1, 1], [], []>} : vector<8x8xbf16>, vector<8x8xbf16>, vector<8x8xf32> -> vector<8x8xf32>
    %124 = arith.truncf %123 : vector<8x8xf32> to vector<8x8xbf16>
    %c16_82 = arith.constant 16 : index
    %c0_83 = arith.constant 0 : index
    %125 = vector.load %arg12[%c16_82, %c0_83] : memref<32x32xbf16, #tpu.memory_space<vmem>>, vector<8x32xbf16>
    %cst_84 = arith.constant dense<0.000000e+00> : vector<8x32xf32>
    %126 = tpu.matmul %124, %125, %cst_84 {dimension_numbers = #tpu.dot_dimension_numbers<[1], [0], [0], [1], [0, 0, 1, 1], [], []>} : vector<8x8xbf16>, vector<8x32xbf16>, vector<8x32xf32> -> vector<8x32xf32>
    %127 = arith.addf %88, %126 : vector<8x32xf32>
    %c0_85 = arith.constant 0 : index
    %c24 = arith.constant 24 : index
    %128 = vector.load %arg6[%c0_85, %c24] : memref<32x32xbf16, #tpu.memory_space<vmem>>, vector<32x8xbf16>
    %cst_86 = arith.constant dense<0.000000e+00> : vector<8x8xf32>
    %129 = tpu.matmul %2, %128, %cst_86 {dimension_numbers = #tpu.dot_dimension_numbers<[1], [0], [0], [1], [0, 0, 1, 1], [], []>} : vector<8x32xbf16>, vector<32x8xbf16>, vector<8x8xf32> -> vector<8x8xf32>
    %c0_87 = arith.constant 0 : index
    %c24_88 = arith.constant 24 : index
    %130 = vector.load %arg7[%c0_87, %c24_88] : memref<1x32xf32, #tpu.memory_space<vmem>>, vector<1x8xf32>
    %131 = vector.broadcast %130 : vector<1x8xf32> to vector<8x8xf32>
    %132 = arith.addf %129, %131 : vector<8x8xf32>
    %c0_89 = arith.constant 0 : index
    %c24_90 = arith.constant 24 : index
    %133 = vector.load %arg8[%c0_89, %c24_90] : memref<32x32xbf16, #tpu.memory_space<vmem>>, vector<32x8xbf16>
    %cst_91 = arith.constant dense<0.000000e+00> : vector<8x8xf32>
    %134 = tpu.matmul %5, %133, %cst_91 {dimension_numbers = #tpu.dot_dimension_numbers<[1], [0], [0], [1], [0, 0, 1, 1], [], []>} : vector<8x32xbf16>, vector<32x8xbf16>, vector<8x8xf32> -> vector<8x8xf32>
    %c0_92 = arith.constant 0 : index
    %c24_93 = arith.constant 24 : index
    %135 = vector.load %arg9[%c0_92, %c24_93] : memref<1x32xf32, #tpu.memory_space<vmem>>, vector<1x8xf32>
    %136 = vector.broadcast %135 : vector<1x8xf32> to vector<8x8xf32>
    %137 = arith.addf %134, %136 : vector<8x8xf32>
    %c0_94 = arith.constant 0 : index
    %c24_95 = arith.constant 24 : index
    %138 = vector.load %arg10[%c0_94, %c24_95] : memref<32x32xbf16, #tpu.memory_space<vmem>>, vector<32x8xbf16>
    %cst_96 = arith.constant dense<0.000000e+00> : vector<8x8xf32>
    %139 = tpu.matmul %5, %138, %cst_96 {dimension_numbers = #tpu.dot_dimension_numbers<[1], [0], [0], [1], [0, 0, 1, 1], [], []>} : vector<8x32xbf16>, vector<32x8xbf16>, vector<8x8xf32> -> vector<8x8xf32>
    %c0_97 = arith.constant 0 : index
    %c24_98 = arith.constant 24 : index
    %140 = vector.load %arg11[%c0_97, %c24_98] : memref<1x32xf32, #tpu.memory_space<vmem>>, vector<1x8xf32>
    %141 = vector.broadcast %140 : vector<1x8xf32> to vector<8x8xf32>
    %142 = arith.addf %139, %141 : vector<8x8xf32>
    %143 = arith.truncf %132 : vector<8x8xf32> to vector<8x8xbf16>
    %144 = arith.truncf %137 : vector<8x8xf32> to vector<8x8xbf16>
    %cst_99 = arith.constant dense<0.000000e+00> : vector<8x8xf32>
    %145 = tpu.matmul %143, %144, %cst_99 {dimension_numbers = #tpu.dot_dimension_numbers<[1], [1], [0], [0], [0, 0, 1, 0], [], []>} : vector<8x8xbf16>, vector<8x8xbf16>, vector<8x8xf32> -> vector<8x8xf32>
    %146 = arith.addf %145, %9 : vector<8x8xf32>
    %cst_100 = arith.constant dense<0xFF800000> : vector<8xf32>
    %147 = vector.multi_reduction <maximumf>, %146, %cst_100 [1] : vector<8x8xf32> to vector<8xf32>
    %148 = vector.shape_cast %147 : vector<8xf32> to vector<8x1xf32>
    %149 = vector.broadcast %148 : vector<8x1xf32> to vector<8x8xf32>
    %150 = arith.subf %146, %149 : vector<8x8xf32>
    %151 = math.exp %150 : vector<8x8xf32>
    %cst_101 = arith.constant dense<0.000000e+00> : vector<8xf32>
    %152 = vector.multi_reduction <add>, %151, %cst_101 [1] : vector<8x8xf32> to vector<8xf32>
    %153 = vector.shape_cast %152 : vector<8xf32> to vector<8x1xf32>
    %154 = tpu.reciprocal %153 {approx = true} : vector<8x1xf32> -> vector<8x1xf32>
    %155 = vector.broadcast %154 : vector<8x1xf32> to vector<8x8xf32>
    %156 = arith.mulf %151, %155 : vector<8x8xf32>
    %c3 = arith.constant 3 : index
    %c0_102 = arith.constant 0 : index
    %c0_103 = arith.constant 0 : index
    %c0_104 = arith.constant 0 : index
    %157 = vector.load %arg23[%c3, %c0_102, %c0_103, %c0_104] : memref<4x1x8x8xf32, #tpu.memory_space<vmem>>, vector<1x1x8x8xf32>
    %158 = vector.shape_cast %157 : vector<1x1x8x8xf32> to vector<8x8xf32>
    %159 = vector.shape_cast %156 : vector<8x8xf32> to vector<1x1x8x8xf32>
    tpu.vector_store %arg23[%c3, %c0_102, %c0_103, %c0_104], %159 {strides = array<i32>} : memref<4x1x8x8xf32, #tpu.memory_space<vmem>>, vector<1x1x8x8xf32>,
    %160 = arith.truncf %156 : vector<8x8xf32> to vector<8x8xbf16>
    %161 = arith.truncf %142 : vector<8x8xf32> to vector<8x8xbf16>
    %cst_105 = arith.constant dense<0.000000e+00> : vector<8x8xf32>
    %162 = tpu.matmul %160, %161, %cst_105 {dimension_numbers = #tpu.dot_dimension_numbers<[1], [0], [0], [1], [0, 0, 1, 1], [], []>} : vector<8x8xbf16>, vector<8x8xbf16>, vector<8x8xf32> -> vector<8x8xf32>
    %163 = arith.truncf %162 : vector<8x8xf32> to vector<8x8xbf16>
    %c24_106 = arith.constant 24 : index
    %c0_107 = arith.constant 0 : index
    %164 = vector.load %arg12[%c24_106, %c0_107] : memref<32x32xbf16, #tpu.memory_space<vmem>>, vector<8x32xbf16>
    %cst_108 = arith.constant dense<0.000000e+00> : vector<8x32xf32>
    %165 = tpu.matmul %163, %164, %cst_108 {dimension_numbers = #tpu.dot_dimension_numbers<[1], [0], [0], [1], [0, 0, 1, 1], [], []>} : vector<8x8xbf16>, vector<8x32xbf16>, vector<8x32xf32> -> vector<8x32xf32>
    %166 = arith.addf %127, %165 : vector<8x32xf32>
    %c0_109 = arith.constant 0 : index
    %c0_110 = arith.constant 0 : index
    %167 = vector.load %arg13[%c0_109, %c0_110] : memref<1x32xf32, #tpu.memory_space<vmem>>, vector<1x32xf32>
    %168 = vector.broadcast %167 : vector<1x32xf32> to vector<8x32xf32>
    %169 = arith.addf %166, %168 : vector<8x32xf32>
    %170 = arith.addf %169, %1 : vector<8x32xf32>
    %cst_111 = arith.constant dense<0.000000e+00> : vector<8xf32>
    %171 = vector.multi_reduction <add>, %170, %cst_111 [1] : vector<8x32xf32> to vector<8xf32>
    %172 = vector.shape_cast %171 : vector<8xf32> to vector<8x1xf32>
    %cst_112 = arith.constant 3.200000e+01 : f32
    %173 = vector.broadcast %cst_112 : f32 to vector<8x1xf32>
    %174 = arith.divf %172, %173 : vector<8x1xf32>
    %175 = arith.mulf %170, %170 : vector<8x32xf32>
    %cst_113 = arith.constant dense<0.000000e+00> : vector<8xf32>
    %176 = vector.multi_reduction <add>, %175, %cst_113 [1] : vector<8x32xf32> to vector<8xf32>
    %177 = vector.shape_cast %176 : vector<8xf32> to vector<8x1xf32>
    %cst_114 = arith.constant 3.200000e+01 : f32
    %178 = vector.broadcast %cst_114 : f32 to vector<8x1xf32>
    %179 = arith.divf %177, %178 : vector<8x1xf32>
    %180 = vector.broadcast %174 : vector<8x1xf32> to vector<8x32xf32>
    %181 = arith.subf %170, %180 : vector<8x32xf32>
    %182 = arith.mulf %174, %174 : vector<8x1xf32>
    %183 = arith.subf %179, %182 : vector<8x1xf32>
    %cst_115 = arith.constant 9.99999974E-6 : f32
    %184 = vector.broadcast %cst_115 : f32 to vector<8x1xf32>
    %185 = arith.addf %183, %184 : vector<8x1xf32>
    %186 = math.rsqrt %185 : vector<8x1xf32>
    %187 = vector.broadcast %186 : vector<8x1xf32> to vector<8x32xf32>
    %188 = arith.mulf %181, %187 : vector<8x32xf32>
    %c0_116 = arith.constant 0 : index
    %c0_117 = arith.constant 0 : index
    %189 = vector.load %arg14[%c0_116, %c0_117] : memref<1x32xf32, #tpu.memory_space<vmem>>, vector<1x32xf32>
    %190 = vector.broadcast %189 : vector<1x32xf32> to vector<8x32xf32>
    %191 = arith.mulf %188, %190 : vector<8x32xf32>
    %c0_118 = arith.constant 0 : index
    %c0_119 = arith.constant 0 : index
    %192 = vector.load %arg15[%c0_118, %c0_119] : memref<1x32xf32, #tpu.memory_space<vmem>>, vector<1x32xf32>
    %193 = vector.broadcast %192 : vector<1x32xf32> to vector<8x32xf32>
    %194 = arith.addf %191, %193 : vector<8x32xf32>
    %195 = vector.broadcast %11 : vector<8x1xf32> to vector<8x32xf32>
    %196 = arith.mulf %194, %195 : vector<8x32xf32>
    %197 = arith.truncf %196 : vector<8x32xf32> to vector<8x32xbf16>
    %c0_120 = arith.constant 0 : index
    %c0_121 = arith.constant 0 : index
    %198 = vector.load %arg16[%c0_120, %c0_121] : memref<32x64xbf16, #tpu.memory_space<vmem>>, vector<32x64xbf16>
    %cst_122 = arith.constant dense<0.000000e+00> : vector<8x64xf32>
    %199 = tpu.matmul %197, %198, %cst_122 {dimension_numbers = #tpu.dot_dimension_numbers<[1], [0], [0], [1], [0, 0, 1, 1], [], []>} : vector<8x32xbf16>, vector<32x64xbf16>, vector<8x64xf32> -> vector<8x64xf32>
    %c0_123 = arith.constant 0 : index
    %c0_124 = arith.constant 0 : index
    %200 = vector.load %arg17[%c0_123, %c0_124] : memref<1x64xf32, #tpu.memory_space<vmem>>, vector<1x64xf32>
    %201 = vector.broadcast %200 : vector<1x64xf32> to vector<8x64xf32>
    %202 = arith.addf %199, %201 : vector<8x64xf32>
    %cst_125 = arith.constant 0.000000e+00 : f32
    %203 = vector.broadcast %cst_125 : f32 to vector<8x64xf32>
    %204 = arith.maximumf %202, %203 : vector<8x64xf32>
    %205 = arith.truncf %204 : vector<8x64xf32> to vector<8x64xbf16>
    %c0_126 = arith.constant 0 : index
    %c0_127 = arith.constant 0 : index
    %206 = vector.load %arg18[%c0_126, %c0_127] : memref<64x32xbf16, #tpu.memory_space<vmem>>, vector<64x32xbf16>
    %cst_128 = arith.constant dense<0.000000e+00> : vector<8x32xf32>
    %207 = tpu.matmul %205, %206, %cst_128 {dimension_numbers = #tpu.dot_dimension_numbers<[1], [0], [0], [1], [0, 0, 1, 1], [], []>} : vector<8x64xbf16>, vector<64x32xbf16>, vector<8x32xf32> -> vector<8x32xf32>
    %c0_129 = arith.constant 0 : index
    %c0_130 = arith.constant 0 : index
    %208 = vector.load %arg19[%c0_129, %c0_130] : memref<1x32xf32, #tpu.memory_space<vmem>>, vector<1x32xf32>
    %209 = vector.broadcast %208 : vector<1x32xf32> to vector<8x32xf32>
    %210 = arith.addf %207, %209 : vector<8x32xf32>
    %211 = arith.addf %210, %196 : vector<8x32xf32>
    %cst_131 = arith.constant dense<0.000000e+00> : vector<8xf32>
    %212 = vector.multi_reduction <add>, %211, %cst_131 [1] : vector<8x32xf32> to vector<8xf32>
    %213 = vector.shape_cast %212 : vector<8xf32> to vector<8x1xf32>
    %cst_132 = arith.constant 3.200000e+01 : f32
    %214 = vector.broadcast %cst_132 : f32 to vector<8x1xf32>
    %215 = arith.divf %213, %214 : vector<8x1xf32>
    %216 = arith.mulf %211, %211 : vector<8x32xf32>
    %cst_133 = arith.constant dense<0.000000e+00> : vector<8xf32>
    %217 = vector.multi_reduction <add>, %216, %cst_133 [1] : vector<8x32xf32> to vector<8xf32>
    %218 = vector.shape_cast %217 : vector<8xf32> to vector<8x1xf32>
    %cst_134 = arith.constant 3.200000e+01 : f32
    %219 = vector.broadcast %cst_134 : f32 to vector<8x1xf32>
    %220 = arith.divf %218, %219 : vector<8x1xf32>
    %221 = vector.broadcast %215 : vector<8x1xf32> to vector<8x32xf32>
    %222 = arith.subf %211, %221 : vector<8x32xf32>
    %223 = arith.mulf %215, %215 : vector<8x1xf32>
    %224 = arith.subf %220, %223 : vector<8x1xf32>
    %cst_135 = arith.constant 9.99999974E-6 : f32
    %225 = vector.broadcast %cst_135 : f32 to vector<8x1xf32>
    %226 = arith.addf %224, %225 : vector<8x1xf32>
    %227 = math.rsqrt %226 : vector<8x1xf32>
    %228 = vector.broadcast %227 : vector<8x1xf32> to vector<8x32xf32>
    %229 = arith.mulf %222, %228 : vector<8x32xf32>
    %c0_136 = arith.constant 0 : index
    %c0_137 = arith.constant 0 : index
    %230 = vector.load %arg20[%c0_136, %c0_137] : memref<1x32xf32, #tpu.memory_space<vmem>>, vector<1x32xf32>
    %231 = vector.broadcast %230 : vector<1x32xf32> to vector<8x32xf32>
    %232 = arith.mulf %229, %231 : vector<8x32xf32>
    %c0_138 = arith.constant 0 : index
    %c0_139 = arith.constant 0 : index
    %233 = vector.load %arg21[%c0_138, %c0_139] : memref<1x32xf32, #tpu.memory_space<vmem>>, vector<1x32xf32>
    %234 = vector.broadcast %233 : vector<1x32xf32> to vector<8x32xf32>
    %235 = arith.addf %232, %234 : vector<8x32xf32>
    %236 = vector.broadcast %11 : vector<8x1xf32> to vector<8x32xf32>
    %237 = arith.mulf %235, %236 : vector<8x32xf32>
    %c0_140 = arith.constant 0 : index
    %c0_141 = arith.constant 0 : index
    %c0_142 = arith.constant 0 : index
    %238 = vector.load %arg22[%c0_140, %c0_141, %c0_142] : memref<1x8x32xf32, #tpu.memory_space<vmem>>, vector<1x8x32xf32>
    %239 = vector.shape_cast %238 : vector<1x8x32xf32> to vector<8x32xf32>
    %240 = vector.shape_cast %237 : vector<8x32xf32> to vector<1x8x32xf32>
    tpu.vector_store %arg22[%c0_140, %c0_141, %c0_142], %240 {strides = array<i32>} : memref<1x8x32xf32, #tpu.memory_space<vmem>>, vector<1x8x32xf32>,
    return
  }
  func.func @transform_0(%arg0: i32, %arg1: i32) -> (i32, i32, i32) {
    %c0_i32 = arith.constant 0 : i32
    %c0_i32_0 = arith.constant 0 : i32
    return %arg0, %arg1, %c0_i32 : i32, i32, i32
  }
  func.func @transform_1(%arg0: i32, %arg1: i32) -> (i32, i32, i32) {
    %c0_i32 = arith.constant 0 : i32
    %c0_i32_0 = arith.constant 0 : i32
    %c0_i32_1 = arith.constant 0 : i32
    return %arg0, %c0_i32, %c0_i32_0 : i32, i32, i32
  }
  func.func @transform_2(%arg0: i32, %arg1: i32) -> (i32, i32, i32) {
    %c0_i32 = arith.constant 0 : i32
    %c0_i32_0 = arith.constant 0 : i32
    return %arg0, %arg1, %c0_i32 : i32, i32, i32
  }
  func.func @transform_3(%arg0: i32, %arg1: i32) -> (i32, i32, i32) {
    %c0_i32 = arith.constant 0 : i32
    %c0_i32_0 = arith.constant 0 : i32
    return %arg0, %arg1, %c0_i32 : i32, i32, i32
  }
  func.func @transform_4(%arg0: i32, %arg1: i32) -> (i32, i32) {
    %c0_i32 = arith.constant 0 : i32
    %c0_i32_0 = arith.constant 0 : i32
    %c0_i32_1 = arith.constant 0 : i32
    return %c0_i32, %c0_i32_0 : i32, i32
  }
  func.func @transform_5(%arg0: i32, %arg1: i32) -> (i32, i32) {
    %c0_i32 = arith.constant 0 : i32
    %c0_i32_0 = arith.constant 0 : i32
    %c0_i32_1 = arith.constant 0 : i32
    return %c0_i32, %c0_i32_0 : i32, i32
  }
  func.func @transform_6(%arg0: i32, %arg1: i32) -> (i32, i32) {
    %c0_i32 = arith.constant 0 : i32
    %c0_i32_0 = arith.constant 0 : i32
    %c0_i32_1 = arith.constant 0 : i32
    return %c0_i32, %c0_i32_0 : i32, i32
  }
  func.func @transform_7(%arg0: i32, %arg1: i32) -> (i32, i32) {
    %c0_i32 = arith.constant 0 : i32
    %c0_i32_0 = arith.constant 0 : i32
    %c0_i32_1 = arith.constant 0 : i32
    return %c0_i32, %c0_i32_0 : i32, i32
  }
  func.func @transform_8(%arg0: i32, %arg1: i32) -> (i32, i32) {
    %c0_i32 = arith.constant 0 : i32
    %c0_i32_0 = arith.constant 0 : i32
    %c0_i32_1 = arith.constant 0 : i32
    return %c0_i32, %c0_i32_0 : i32, i32
  }
  func.func @transform_9(%arg0: i32, %arg1: i32) -> (i32, i32) {
    %c0_i32 = arith.constant 0 : i32
    %c0_i32_0 = arith.constant 0 : i32
    %c0_i32_1 = arith.constant 0 : i32
    return %c0_i32, %c0_i32_0 : i32, i32
  }
  func.func @transform_10(%arg0: i32, %arg1: i32) -> (i32, i32) {
    %c0_i32 = arith.constant 0 : i32
    %c0_i32_0 = arith.constant 0 : i32
    %c0_i32_1 = arith.constant 0 : i32
    return %c0_i32, %c0_i32_0 : i32, i32
  }
  func.func @transform_11(%arg0: i32, %arg1: i32) -> (i32, i32) {
    %c0_i32 = arith.constant 0 : i32
    %c0_i32_0 = arith.constant 0 : i32
    %c0_i32_1 = arith.constant 0 : i32
    return %c0_i32, %c0_i32_0 : i32, i32
  }
  func.func @transform_12(%arg0: i32, %arg1: i32) -> (i32, i32) {
    %c0_i32 = arith.constant 0 : i32
    %c0_i32_0 = arith.constant 0 : i32
    %c0_i32_1 = arith.constant 0 : i32
    return %c0_i32, %c0_i32_0 : i32, i32
  }
  func.func @transform_13(%arg0: i32, %arg1: i32) -> (i32, i32) {
    %c0_i32 = arith.constant 0 : i32
    %c0_i32_0 = arith.constant 0 : i32
    %c0_i32_1 = arith.constant 0 : i32
    return %c0_i32, %c0_i32_0 : i32, i32
  }
  func.func @transform_14(%arg0: i32, %arg1: i32) -> (i32, i32) {
    %c0_i32 = arith.constant 0 : i32
    %c0_i32_0 = arith.constant 0 : i32
    %c0_i32_1 = arith.constant 0 : i32
    return %c0_i32, %c0_i32_0 : i32, i32
  }
  func.func @transform_15(%arg0: i32, %arg1: i32) -> (i32, i32) {
    %c0_i32 = arith.constant 0 : i32
    %c0_i32_0 = arith.constant 0 : i32
    %c0_i32_1 = arith.constant 0 : i32
    return %c0_i32, %c0_i32_0 : i32, i32
  }
  func.func @transform_16(%arg0: i32, %arg1: i32) -> (i32, i32) {
    %c0_i32 = arith.constant 0 : i32
    %c0_i32_0 = arith.constant 0 : i32
    %c0_i32_1 = arith.constant 0 : i32
    return %c0_i32, %c0_i32_0 : i32, i32
  }
  func.func @transform_17(%arg0: i32, %arg1: i32) -> (i32, i32) {
    %c0_i32 = arith.constant 0 : i32
    %c0_i32_0 = arith.constant 0 : i32
    %c0_i32_1 = arith.constant 0 : i32
    return %c0_i32, %c0_i32_0 : i32, i32
  }
  func.func @transform_18(%arg0: i32, %arg1: i32) -> (i32, i32) {
    %c0_i32 = arith.constant 0 : i32
    %c0_i32_0 = arith.constant 0 : i32
    %c0_i32_1 = arith.constant 0 : i32
    return %c0_i32, %c0_i32_0 : i32, i32
  }
  func.func @transform_19(%arg0: i32, %arg1: i32) -> (i32, i32) {
    %c0_i32 = arith.constant 0 : i32
    %c0_i32_0 = arith.constant 0 : i32
    %c0_i32_1 = arith.constant 0 : i32
    return %c0_i32, %c0_i32_0 : i32, i32
  }
  func.func @transform_20(%arg0: i32, %arg1: i32) -> (i32, i32, i32) {
    %c0_i32 = arith.constant 0 : i32
    %c0_i32_0 = arith.constant 0 : i32
    return %arg0, %arg1, %c0_i32 : i32, i32, i32
  }
  func.func @transform_21(%arg0: i32, %arg1: i32) -> (i32, i32, i32, i32) {
    %c0_i32 = arith.constant 0 : i32
    %c0_i32_0 = arith.constant 0 : i32
    %c0_i32_1 = arith.constant 0 : i32
    return %c0_i32, %arg0, %arg1, %c0_i32_0 : i32, i32, i32, i32
  }
}

</mosaic_0001>

<llo_original>
// kernel: tpu_custom_call.1
$region0: #{tpu_custom_call.1}
  #allocation0 [shape = 'u32[]', space=smem, size = 0x4, offset = 0x4, fixed_abs, tag = 'smem constant byte address 0x4 - core index']
  #allocation1 [shape = 'u32[144,128]{1,0:T(1,128)}', space=vmem, size = 0x12000, scoped, tag = 'internal scratch']
  %s0 = inlined_call_operand.vmem [shape: f32[2,8,32], index: 0, kind: input, shape index: {}]
  %s1 = inlined_call_operand.vmem [shape: f32[2,8,32], index: 1, kind: input, shape index: {}]
  %s2 = inlined_call_operand.vmem [shape: f32[2,8,8], index: 2, kind: input, shape index: {}]
  %s3 = inlined_call_operand.vmem [shape: f32[2,8,1], index: 3, kind: input, shape index: {}]
  %s4 = inlined_call_operand.vmem [shape: bf16[32,32], index: 4, kind: input, shape index: {}]
  %s5 = inlined_call_operand.hbm [shape: f32[1,32], index: 5, kind: input, shape index: {}]
  %s6 = inlined_call_operand.hbm [shape: bf16[32,32], index: 6, kind: input, shape index: {}]
  %s7 = inlined_call_operand.hbm [shape: f32[1,32], index: 7, kind: input, shape index: {}]
  %s8 = inlined_call_operand.hbm [shape: bf16[32,32], index: 8, kind: input, shape index: {}]
  %s9 = inlined_call_operand.vmem [shape: f32[1,32], index: 9, kind: input, shape index: {}]
  %s10 = inlined_call_operand.hbm [shape: bf16[32,32], index: 10, kind: input, shape index: {}]
  %s11 = inlined_call_operand.vmem [shape: f32[1,32], index: 11, kind: input, shape index: {}]
  %s12 = inlined_call_operand.vmem [shape: f32[1,32], index: 12, kind: input, shape index: {}]
  %s13 = inlined_call_operand.vmem [shape: f32[1,32], index: 13, kind: input, shape index: {}]
  %s14 = inlined_call_operand.hbm [shape: bf16[32,64], index: 14, kind: input, shape index: {}]
  %s15 = inlined_call_operand.vmem [shape: f32[1,64], index: 15, kind: input, shape index: {}]
  %s16 = inlined_call_operand.vmem [shape: bf16[64,32], index: 16, kind: input, shape index: {}]
  %s17 = inlined_call_operand.vmem [shape: f32[1,32], index: 17, kind: input, shape index: {}]
  %s18 = inlined_call_operand.vmem [shape: f32[1,32], index: 18, kind: input, shape index: {}]
  %s19 = inlined_call_operand.vmem [shape: f32[1,32], index: 19, kind: input, shape index: {}]
  %s20 = inlined_call_operand.hbm [shape: f32[2,8,32], index: 20, kind: output, shape index: {0}]
  %s21 = inlined_call_operand.hbm [shape: f32[4,2,8,8], index: 21, kind: output, shape index: {1}]
  %22 = xla_tuple %s20, %s21
  %s23 = sld [smem:[#allocation0]]
  $region145: #{tpu_custom_call.1} parent=0
    _
  %s25 = ssub.s32 1, %s23
  %s26 = scalar_select 0, %s25, %s23
  $region1: #{tpu_custom_call.1} parent=0
    #allocation2 [shape = 'u8[512]{0}', space=vmem, size = 0x400, scoped, tag = 'input window, operand 5, single buffered']
    #allocation3 [shape = 's32[2]{0}', space=sflag, size = 0x8, scoped, tag = 'scoped memory for tpu_custom_call.1']
    #allocation4 [shape = 's32[2]{0}', space=sflag, size = 0x8, scoped, tag = 'scoped memory for tpu_custom_call.1']
    #allocation5 [shape = 'u8[8192]{0}', space=vmem, size = 0x2000, scoped, tag = 'input window, operand 6, single buffered']
    #allocation6 [shape = 's32[1]{0}', space=sflag, size = 0x4, scoped, tag = 'scoped memory for tpu_custom_call.1']
    #allocation7 [shape = 'u8[512]{0}', space=vmem, size = 0x400, scoped, tag = 'input window, operand 7, single buffered']
    #allocation8 [shape = 'u8[8192]{0}', space=vmem, size = 0x2000, scoped, tag = 'input window, operand 8, single buffered']
    #allocation9 [shape = 's32[1]{0}', space=sflag, size = 0x4, scoped, tag = 'scoped memory for tpu_custom_call.1']
    #allocation10 [shape = 'u8[8192]{0}', space=vmem, size = 0x2000, scoped, tag = 'input window, operand 10, single buffered']
    #allocation11 [shape = 'u8[8192]{0}', space=vmem, size = 0x2000, scoped, tag = 'input window, operand 14, single buffered']
    #allocation12 [shape = 's32[1]{0}', space=sflag, size = 0x4, scoped, tag = 'scoped memory for tpu_custom_call.1']
    #allocation13 [shape = 'u8[8192]{0}', space=vmem, size = 0x2000, scoped, tag = 'output window, operand 0']
    #allocation14 [shape = 'u8[32768]{0}', space=vmem, size = 0x8000, scoped, tag = 'output window, operand 1']
    #allocation15 [shape = 's32[2]{0}', space=sflag, size = 0x8, scoped, tag = 'scoped memory for tpu_custom_call.1']
    %27 = vsyncpa [#allocation3], 0
    %28 = vsyncpa [#allocation6], 0
    %29 = vsyncpa [#allocation9], 0
    %30 = vsyncpa [#allocation12], 0
    %31 = vsyncpa [#allocation4], 0
    %s32 = scalar_lea.sflag [#allocation4], 1
    %33 = vsyncpa %s32, 0
    %34 = vsyncpa [#allocation15], 0
    %s35 = scalar_lea.sflag [#allocation15], 1
    %36 = vsyncpa %s35, 0
    loop: start=0, step=1, limit=4
    $region2: #{tpu_custom_call.1} parent=1 // loop_pre_header
      _
    $region3: #{tpu_custom_call.1} parent=1 // loop_header
      %s38 = sphi 0, %s42
      %p39 = scmp.ge.s32.totalorder %s38, 4
      %s45 = sphi 0, %s57
      %s46 = sphi 0, %s53
      %s47 = sphi 0, %s45
      %s48 = sphi 0, %s46
      %s49 = sphi 0, %s47
      %s50 = sphi 0, %s48
      %s62 = sphi 0, %s64
      %s65 = sphi 0, %s62
      %s66 = sphi 0, %s65
      %s82 = sphi 0, %s66
      %s88 = sphi 0, %s90
      %s91 = sphi 0, %s88
      %s92 = sphi 0, %s91
      %s108 = sphi 0, %s92
      %s116 = sphi 0, %s118
      %s119 = sphi 0, %s116
      %s120 = sphi 0, %s119
      %s136 = sphi 0, %s120
      %s144 = sphi 0, %s146
      %s147 = sphi 0, %s144
      %s148 = sphi 0, %s147
      %s164 = sphi 0, %s148
      %s168 = sphi 0, %s168
      %s170 = sphi 0, %s168
      %s171 = sphi 0, %s170
      %s185 = sphi 0, %s171
      %s189 = sphi 0, %s189
      %s191 = sphi 0, %s189
      %s192 = sphi 0, %s191
      %s206 = sphi 0, %s192
      %s210 = sphi 0, %s210
      %s212 = sphi 0, %s210
      %s213 = sphi 0, %s212
      %s227 = sphi 0, %s213
      %s231 = sphi 0, %s231
      %s233 = sphi 0, %s231
      %s234 = sphi 0, %s233
      %s248 = sphi 0, %s234
      %s252 = sphi 0, %s252
      %s254 = sphi 0, %s252
      %s255 = sphi 0, %s254
      %s269 = sphi 0, %s255
      %s273 = sphi 0, %s273
      %s275 = sphi 0, %s273
      %s276 = sphi 0, %s275
      %s290 = sphi 0, %s276
      %s294 = sphi 0, %s294
      %s296 = sphi 0, %s294
      %s297 = sphi 0, %s296
      %s311 = sphi 0, %s297
      %s315 = sphi 0, %s315
      %s317 = sphi 0, %s315
      %s318 = sphi 0, %s317
      %s332 = sphi 0, %s318
      %s336 = sphi 0, %s336
      %s338 = sphi 0, %s336
      %s339 = sphi 0, %s338
      %s353 = sphi 0, %s339
      %s357 = sphi 0, %s357
      %s359 = sphi 0, %s357
      %s360 = sphi 0, %s359
      %s374 = sphi 0, %s360
      %s378 = sphi 0, %s378
      %s380 = sphi 0, %s378
      %s381 = sphi 0, %s380
      %s395 = sphi 0, %s381
      %s399 = sphi 0, %s399
      %s401 = sphi 0, %s399
      %s402 = sphi 0, %s401
      %s416 = sphi 0, %s402
      %s420 = sphi 0, %s420
      %s422 = sphi 0, %s420
      %s423 = sphi 0, %s422
      %s437 = sphi 0, %s423
      %s441 = sphi 0, %s441
      %s443 = sphi 0, %s441
      %s444 = sphi 0, %s443
      %s458 = sphi 0, %s444
      %s462 = sphi 0, %s462
      %s464 = sphi 0, %s462
      %s465 = sphi 0, %s464
      %s479 = sphi 0, %s465
      %s483 = sphi 0, %s483
      %s485 = sphi 0, %s483
      %s486 = sphi 0, %s485
      %s500 = sphi 0, %s486
      %s508 = sphi 0, %s510
      %s511 = sphi 0, %s508
      %s512 = sphi 0, %s511
      %s528 = sphi 0, %s512
      %s536 = sphi 0, %s538
      %s539 = sphi 0, %s536
      %s540 = sphi 0, %s539
      %s556 = sphi 0, %s540
    $region4: #{tpu_custom_call.1} parent=1 // loop_header_branch
      %41 = sbr.rel (%p39) target = $region8
    $region5: #{tpu_custom_call.1} parent=1 // loop_body
      %s43 = ssub.s32 %s38, 1
      %s44 = ssub.s32 %s38, 2
      %s51 = sadd.s32 1, %s46
      %p52 = scmp.ge.s32.totalorder %s51, 1
      %s53 = scalar_select %p52, 0, %s51
      %s54 = sadd.s32 1, %s45
      %s55 = scalar_select %p52, %s54, %s45
      %p56 = scmp.ge.s32.totalorder %s55, 2
      %s57 = scalar_select %p56, 0, %s55
      %s58 = ssub.s32 %s45, %s57
      %s59 = ssub.s32 %s46, %s53
      %s60 = sor.u32 %s58, %s59
      %p61 = scmp.eq.s32.totalorder %s60, 0
      %s63 = sadd.s32 %s62, 1
      %s64 = scalar_select %p61, %s62, %s63
      %p67 = pneg %p61
      %p68 = scmp.eq.s32.totalorder %s38, 1
      %p69 = por %p67, %p68
      %p70 = scmp.ne.s32.totalorder %s62, %s65
      %p71 = scmp.eq.s32.totalorder %s38, 0
      %p72 = por %p70, %p71
      %p73 = scmp.ne.s32.totalorder %s62, %s65
      %p74 = scmp.eq.s32.totalorder %s43, 1
      %p75 = por %p73, %p74
      %p76 = scmp.ne.s32.totalorder %s65, %s66
      %p77 = scmp.eq.s32.totalorder %s43, 0
      %p78 = por %p76, %p77
      %p79 = scmp.ne.s32.totalorder %s65, %s66
      %p80 = scmp.eq.s32.totalorder %s44, 1
      %p81 = por %p79, %p80
      %p83 = scmp.ne.s32.totalorder %s66, %s82
      %p84 = scmp.eq.s32.totalorder %s44, 0
      %p85 = por %p83, %p84
      %s86 = ssub.s32 %s45, %s57
      %p87 = scmp.eq.s32.totalorder %s86, 0
      %s89 = sadd.s32 %s88, 1
      %s90 = scalar_select %p87, %s88, %s89
      %p93 = pneg %p87
      %p94 = scmp.eq.s32.totalorder %s38, 1
      %p95 = por %p93, %p94
      %p96 = scmp.ne.s32.totalorder %s88, %s91
      %p97 = scmp.eq.s32.totalorder %s38, 0
      %p98 = por %p96, %p97
      %p99 = scmp.ne.s32.totalorder %s88, %s91
      %p100 = scmp.eq.s32.totalorder %s43, 1
      %p101 = por %p99, %p100
      %p102 = scmp.ne.s32.totalorder %s91, %s92
      %p103 = scmp.eq.s32.totalorder %s43, 0
      %p104 = por %p102, %p103
      %p105 = scmp.ne.s32.totalorder %s91, %s92
      %p106 = scmp.eq.s32.totalorder %s44, 1
      %p107 = por %p105, %p106
      %p109 = scmp.ne.s32.totalorder %s92, %s108
      %p110 = scmp.eq.s32.totalorder %s44, 0
      %p111 = por %p109, %p110
      %s112 = ssub.s32 %s45, %s57
      %s113 = ssub.s32 %s46, %s53
      %s114 = sor.u32 %s112, %s113
      %p115 = scmp.eq.s32.totalorder %s114, 0
      %s117 = sadd.s32 %s116, 1
      %s118 = scalar_select %p115, %s116, %s117
      %p121 = pneg %p115
      %p122 = scmp.eq.s32.totalorder %s38, 1
      %p123 = por %p121, %p122
      %p124 = scmp.ne.s32.totalorder %s116, %s119
      %p125 = scmp.eq.s32.totalorder %s38, 0
      %p126 = por %p124, %p125
      %p127 = scmp.ne.s32.totalorder %s116, %s119
      %p128 = scmp.eq.s32.totalorder %s43, 1
      %p129 = por %p127, %p128
      %p130 = scmp.ne.s32.totalorder %s119, %s120
      %p131 = scmp.eq.s32.totalorder %s43, 0
      %p132 = por %p130, %p131
      %p133 = scmp.ne.s32.totalorder %s119, %s120
      %p134 = scmp.eq.s32.totalorder %s44, 1
      %p135 = por %p133, %p134
      %p137 = scmp.ne.s32.totalorder %s120, %s136
      %p138 = scmp.eq.s32.totalorder %s44, 0
      %p139 = por %p137, %p138
      %s140 = ssub.s32 %s45, %s57
      %s141 = ssub.s32 %s46, %s53
      %s142 = sor.u32 %s140, %s141
      %p143 = scmp.eq.s32.totalorder %s142, 0
      %s145 = sadd.s32 %s144, 1
      %s146 = scalar_select %p143, %s144, %s145
      %p149 = pneg %p143
      %p150 = scmp.eq.s32.totalorder %s38, 1
      %p151 = por %p149, %p150
      %p152 = scmp.ne.s32.totalorder %s144, %s147
      %p153 = scmp.eq.s32.totalorder %s38, 0
      %p154 = por %p152, %p153
      %p155 = scmp.ne.s32.totalorder %s144, %s147
      %p156 = scmp.eq.s32.totalorder %s43, 1
      %p157 = por %p155, %p156
      %p158 = scmp.ne.s32.totalorder %s147, %s148
      %p159 = scmp.eq.s32.totalorder %s43, 0
      %p160 = por %p158, %p159
      %p161 = scmp.ne.s32.totalorder %s147, %s148
      %p162 = scmp.eq.s32.totalorder %s44, 1
      %p163 = por %p161, %p162
      %p165 = scmp.ne.s32.totalorder %s148, %s164
      %p166 = scmp.eq.s32.totalorder %s44, 0
      %p167 = por %p165, %p166
      %s169 = sadd.s32 %s168, 1
      %p172 = scmp.eq.s32.totalorder %s38, 1
      %p173 = scmp.ne.s32.totalorder %s168, %s170
      %p174 = scmp.eq.s32.totalorder %s38, 0
      %p175 = por %p173, %p174
      %p176 = scmp.ne.s32.totalorder %s168, %s170
      %p177 = scmp.eq.s32.totalorder %s43, 1
      %p178 = por %p176, %p177
      %p179 = scmp.ne.s32.totalorder %s170, %s171
      %p180 = scmp.eq.s32.totalorder %s43, 0
      %p181 = por %p179, %p180
      %p182 = scmp.ne.s32.totalorder %s170, %s171
      %p183 = scmp.eq.s32.totalorder %s44, 1
      %p184 = por %p182, %p183
      %p186 = scmp.ne.s32.totalorder %s171, %s185
      %p187 = scmp.eq.s32.totalorder %s44, 0
      %p188 = por %p186, %p187
      %s190 = sadd.s32 %s189, 1
      %p193 = scmp.eq.s32.totalorder %s38, 1
      %p194 = scmp.ne.s32.totalorder %s189, %s191
      %p195 = scmp.eq.s32.totalorder %s38, 0
      %p196 = por %p194, %p195
      %p197 = scmp.ne.s32.totalorder %s189, %s191
      %p198 = scmp.eq.s32.totalorder %s43, 1
      %p199 = por %p197, %p198
      %p200 = scmp.ne.s32.totalorder %s191, %s192
      %p201 = scmp.eq.s32.totalorder %s43, 0
      %p202 = por %p200, %p201
      %p203 = scmp.ne.s32.totalorder %s191, %s192
      %p204 = scmp.eq.s32.totalorder %s44, 1
      %p205 = por %p203, %p204
      %p207 = scmp.ne.s32.totalorder %s192, %s206
      %p208 = scmp.eq.s32.totalorder %s44, 0
      %p209 = por %p207, %p208
      %s211 = sadd.s32 %s210, 1
      %p214 = scmp.eq.s32.totalorder %s38, 1
      %p215 = scmp.ne.s32.totalorder %s210, %s212
      %p216 = scmp.eq.s32.totalorder %s38, 0
      %p217 = por %p215, %p216
      %p218 = scmp.ne.s32.totalorder %s210, %s212
      %p219 = scmp.eq.s32.totalorder %s43, 1
      %p220 = por %p218, %p219
      %p221 = scmp.ne.s32.totalorder %s212, %s213
      %p222 = scmp.eq.s32.totalorder %s43, 0
      %p223 = por %p221, %p222
      %p224 = scmp.ne.s32.totalorder %s212, %s213
      %p225 = scmp.eq.s32.totalorder %s44, 1
      %p226 = por %p224, %p225
      %p228 = scmp.ne.s32.totalorder %s213, %s227
      %p229 = scmp.eq.s32.totalorder %s44, 0
      %p230 = por %p228, %p229
      %s232 = sadd.s32 %s231, 1
      %p235 = scmp.eq.s32.totalorder %s38, 1
      %p236 = scmp.ne.s32.totalorder %s231, %s233
      %p237 = scmp.eq.s32.totalorder %s38, 0
      %p238 = por %p236, %p237
      %p239 = scmp.ne.s32.totalorder %s231, %s233
      %p240 = scmp.eq.s32.totalorder %s43, 1
      %p241 = por %p239, %p240
      %p242 = scmp.ne.s32.totalorder %s233, %s234
      %p243 = scmp.eq.s32.totalorder %s43, 0
      %p244 = por %p242, %p243
      %p245 = scmp.ne.s32.totalorder %s233, %s234
      %p246 = scmp.eq.s32.totalorder %s44, 1
      %p247 = por %p245, %p246
      %p249 = scmp.ne.s32.totalorder %s234, %s248
      %p250 = scmp.eq.s32.totalorder %s44, 0
      %p251 = por %p249, %p250
      %s253 = sadd.s32 %s252, 1
      %p256 = scmp.eq.s32.totalorder %s38, 1
      %p257 = scmp.ne.s32.totalorder %s252, %s254
      %p258 = scmp.eq.s32.totalorder %s38, 0
      %p259 = por %p257, %p258
      %p260 = scmp.ne.s32.totalorder %s252, %s254
      %p261 = scmp.eq.s32.totalorder %s43, 1
      %p262 = por %p260, %p261
      %p263 = scmp.ne.s32.totalorder %s254, %s255
      %p264 = scmp.eq.s32.totalorder %s43, 0
      %p265 = por %p263, %p264
      %p266 = scmp.ne.s32.totalorder %s254, %s255
      %p267 = scmp.eq.s32.totalorder %s44, 1
      %p268 = por %p266, %p267
      %p270 = scmp.ne.s32.totalorder %s255, %s269
      %p271 = scmp.eq.s32.totalorder %s44, 0
      %p272 = por %p270, %p271
      %s274 = sadd.s32 %s273, 1
      %p277 = scmp.eq.s32.totalorder %s38, 1
      %p278 = scmp.ne.s32.totalorder %s273, %s275
      %p279 = scmp.eq.s32.totalorder %s38, 0
      %p280 = por %p278, %p279
      %p281 = scmp.ne.s32.totalorder %s273, %s275
      %p282 = scmp.eq.s32.totalorder %s43, 1
      %p283 = por %p281, %p282
      %p284 = scmp.ne.s32.totalorder %s275, %s276
      %p285 = scmp.eq.s32.totalorder %s43, 0
      %p286 = por %p284, %p285
      %p287 = scmp.ne.s32.totalorder %s275, %s276
      %p288 = scmp.eq.s32.totalorder %s44, 1
      %p289 = por %p287, %p288
      %p291 = scmp.ne.s32.totalorder %s276, %s290
      %p292 = scmp.eq.s32.totalorder %s44, 0
      %p293 = por %p291, %p292
      %s295 = sadd.s32 %s294, 1
      %p298 = scmp.eq.s32.totalorder %s38, 1
      %p299 = scmp.ne.s32.totalorder %s294, %s296
      %p300 = scmp.eq.s32.totalorder %s38, 0
      %p301 = por %p299, %p300
      %p302 = scmp.ne.s32.totalorder %s294, %s296
      %p303 = scmp.eq.s32.totalorder %s43, 1
      %p304 = por %p302, %p303
      %p305 = scmp.ne.s32.totalorder %s296, %s297
      %p306 = scmp.eq.s32.totalorder %s43, 0
      %p307 = por %p305, %p306
      %p308 = scmp.ne.s32.totalorder %s296, %s297
      %p309 = scmp.eq.s32.totalorder %s44, 1
      %p310 = por %p308, %p309
      %p312 = scmp.ne.s32.totalorder %s297, %s311
      %p313 = scmp.eq.s32.totalorder %s44, 0
      %p314 = por %p312, %p313
      %s316 = sadd.s32 %s315, 1
      %p319 = scmp.eq.s32.totalorder %s38, 1
      %p320 = scmp.ne.s32.totalorder %s315, %s317
      %p321 = scmp.eq.s32.totalorder %s38, 0
      %p322 = por %p320, %p321
      %p323 = scmp.ne.s32.totalorder %s315, %s317
      %p324 = scmp.eq.s32.totalorder %s43, 1
      %p325 = por %p323, %p324
      %p326 = scmp.ne.s32.totalorder %s317, %s318
      %p327 = scmp.eq.s32.totalorder %s43, 0
      %p328 = por %p326, %p327
      %p329 = scmp.ne.s32.totalorder %s317, %s318
      %p330 = scmp.eq.s32.totalorder %s44, 1
      %p331 = por %p329, %p330
      %p333 = scmp.ne.s32.totalorder %s318, %s332
      %p334 = scmp.eq.s32.totalorder %s44, 0
      %p335 = por %p333, %p334
      %s337 = sadd.s32 %s336, 1
      %p340 = scmp.eq.s32.totalorder %s38, 1
      %p341 = scmp.ne.s32.totalorder %s336, %s338
      %p342 = scmp.eq.s32.totalorder %s38, 0
      %p343 = por %p341, %p342
      %p344 = scmp.ne.s32.totalorder %s336, %s338
      %p345 = scmp.eq.s32.totalorder %s43, 1
      %p346 = por %p344, %p345
      %p347 = scmp.ne.s32.totalorder %s338, %s339
      %p348 = scmp.eq.s32.totalorder %s43, 0
      %p349 = por %p347, %p348
      %p350 = scmp.ne.s32.totalorder %s338, %s339
      %p351 = scmp.eq.s32.totalorder %s44, 1
      %p352 = por %p350, %p351
      %p354 = scmp.ne.s32.totalorder %s339, %s353
      %p355 = scmp.eq.s32.totalorder %s44, 0
      %p356 = por %p354, %p355
      %s358 = sadd.s32 %s357, 1
      %p361 = scmp.eq.s32.totalorder %s38, 1
      %p362 = scmp.ne.s32.totalorder %s357, %s359
      %p363 = scmp.eq.s32.totalorder %s38, 0
      %p364 = por %p362, %p363
      %p365 = scmp.ne.s32.totalorder %s357, %s359
      %p366 = scmp.eq.s32.totalorder %s43, 1
      %p367 = por %p365, %p366
      %p368 = scmp.ne.s32.totalorder %s359, %s360
      %p369 = scmp.eq.s32.totalorder %s43, 0
      %p370 = por %p368, %p369
      %p371 = scmp.ne.s32.totalorder %s359, %s360
      %p372 = scmp.eq.s32.totalorder %s44, 1
      %p373 = por %p371, %p372
      %p375 = scmp.ne.s32.totalorder %s360, %s374
      %p376 = scmp.eq.s32.totalorder %s44, 0
      %p377 = por %p375, %p376
      %s379 = sadd.s32 %s378, 1
      %p382 = scmp.eq.s32.totalorder %s38, 1
      %p383 = scmp.ne.s32.totalorder %s378, %s380
      %p384 = scmp.eq.s32.totalorder %s38, 0
      %p385 = por %p383, %p384
      %p386 = scmp.ne.s32.totalorder %s378, %s380
      %p387 = scmp.eq.s32.totalorder %s43, 1
      %p388 = por %p386, %p387
      %p389 = scmp.ne.s32.totalorder %s380, %s381
      %p390 = scmp.eq.s32.totalorder %s43, 0
      %p391 = por %p389, %p390
      %p392 = scmp.ne.s32.totalorder %s380, %s381
      %p393 = scmp.eq.s32.totalorder %s44, 1
      %p394 = por %p392, %p393
      %p396 = scmp.ne.s32.totalorder %s381, %s395
      %p397 = scmp.eq.s32.totalorder %s44, 0
      %p398 = por %p396, %p397
      %s400 = sadd.s32 %s399, 1
      %p403 = scmp.eq.s32.totalorder %s38, 1
      %p404 = scmp.ne.s32.totalorder %s399, %s401
      %p405 = scmp.eq.s32.totalorder %s38, 0
      %p406 = por %p404, %p405
      %p407 = scmp.ne.s32.totalorder %s399, %s401
      %p408 = scmp.eq.s32.totalorder %s43, 1
      %p409 = por %p407, %p408
      %p410 = scmp.ne.s32.totalorder %s401, %s402
      %p411 = scmp.eq.s32.totalorder %s43, 0
      %p412 = por %p410, %p411
      %p413 = scmp.ne.s32.totalorder %s401, %s402
      %p414 = scmp.eq.s32.totalorder %s44, 1
      %p415 = por %p413, %p414
      %p417 = scmp.ne.s32.totalorder %s402, %s416
      %p418 = scmp.eq.s32.totalorder %s44, 0
      %p419 = por %p417, %p418
      %s421 = sadd.s32 %s420, 1
      %p424 = scmp.eq.s32.totalorder %s38, 1
      %p425 = scmp.ne.s32.totalorder %s420, %s422
      %p426 = scmp.eq.s32.totalorder %s38, 0
      %p427 = por %p425, %p426
      %p428 = scmp.ne.s32.totalorder %s420, %s422
      %p429 = scmp.eq.s32.totalorder %s43, 1
      %p430 = por %p428, %p429
      %p431 = scmp.ne.s32.totalorder %s422, %s423
      %p432 = scmp.eq.s32.totalorder %s43, 0
      %p433 = por %p431, %p432
      %p434 = scmp.ne.s32.totalorder %s422, %s423
      %p435 = scmp.eq.s32.totalorder %s44, 1
      %p436 = por %p434, %p435
      %p438 = scmp.ne.s32.totalorder %s423, %s437
      %p439 = scmp.eq.s32.totalorder %s44, 0
      %p440 = por %p438, %p439
      %s442 = sadd.s32 %s441, 1
      %p445 = scmp.eq.s32.totalorder %s38, 1
      %p446 = scmp.ne.s32.totalorder %s441, %s443
      %p447 = scmp.eq.s32.totalorder %s38, 0
      %p448 = por %p446, %p447
      %p449 = scmp.ne.s32.totalorder %s441, %s443
      %p450 = scmp.eq.s32.totalorder %s43, 1
      %p451 = por %p449, %p450
      %p452 = scmp.ne.s32.totalorder %s443, %s444
      %p453 = scmp.eq.s32.totalorder %s43, 0
      %p454 = por %p452, %p453
      %p455 = scmp.ne.s32.totalorder %s443, %s444
      %p456 = scmp.eq.s32.totalorder %s44, 1
      %p457 = por %p455, %p456
      %p459 = scmp.ne.s32.totalorder %s444, %s458
      %p460 = scmp.eq.s32.totalorder %s44, 0
      %p461 = por %p459, %p460
      %s463 = sadd.s32 %s462, 1
      %p466 = scmp.eq.s32.totalorder %s38, 1
      %p467 = scmp.ne.s32.totalorder %s462, %s464
      %p468 = scmp.eq.s32.totalorder %s38, 0
      %p469 = por %p467, %p468
      %p470 = scmp.ne.s32.totalorder %s462, %s464
      %p471 = scmp.eq.s32.totalorder %s43, 1
      %p472 = por %p470, %p471
      %p473 = scmp.ne.s32.totalorder %s464, %s465
      %p474 = scmp.eq.s32.totalorder %s43, 0
      %p475 = por %p473, %p474
      %p476 = scmp.ne.s32.totalorder %s464, %s465
      %p477 = scmp.eq.s32.totalorder %s44, 1
      %p478 = por %p476, %p477
      %p480 = scmp.ne.s32.totalorder %s465, %s479
      %p481 = scmp.eq.s32.totalorder %s44, 0
      %p482 = por %p480, %p481
      %s484 = sadd.s32 %s483, 1
      %p487 = scmp.eq.s32.totalorder %s38, 1
      %p488 = scmp.ne.s32.totalorder %s483, %s485
      %p489 = scmp.eq.s32.totalorder %s38, 0
      %p490 = por %p488, %p489
      %p491 = scmp.ne.s32.totalorder %s483, %s485
      %p492 = scmp.eq.s32.totalorder %s43, 1
      %p493 = por %p491, %p492
      %p494 = scmp.ne.s32.totalorder %s485, %s486
      %p495 = scmp.eq.s32.totalorder %s43, 0
      %p496 = por %p494, %p495
      %p497 = scmp.ne.s32.totalorder %s485, %s486
      %p498 = scmp.eq.s32.totalorder %s44, 1
      %p499 = por %p497, %p498
      %p501 = scmp.ne.s32.totalorder %s486, %s500
      %p502 = scmp.eq.s32.totalorder %s44, 0
      %p503 = por %p501, %p502
      %s504 = ssub.s32 %s45, %s57
      %s505 = ssub.s32 %s46, %s53
      %s506 = sor.u32 %s504, %s505
      %p507 = scmp.eq.s32.totalorder %s506, 0
      %s509 = sadd.s32 %s508, 1
      %s510 = scalar_select %p507, %s508, %s509
      %p513 = pneg %p507
      %p514 = scmp.eq.s32.totalorder %s38, 1
      %p515 = por %p513, %p514
      %p516 = scmp.ne.s32.totalorder %s508, %s511
      %p517 = scmp.eq.s32.totalorder %s38, 0
      %p518 = por %p516, %p517
      %p519 = scmp.ne.s32.totalorder %s508, %s511
      %p520 = scmp.eq.s32.totalorder %s43, 1
      %p521 = por %p519, %p520
      %p522 = scmp.ne.s32.totalorder %s511, %s512
      %p523 = scmp.eq.s32.totalorder %s43, 0
      %p524 = por %p522, %p523
      %p525 = scmp.ne.s32.totalorder %s511, %s512
      %p526 = scmp.eq.s32.totalorder %s44, 1
      %p527 = por %p525, %p526
      %p529 = scmp.ne.s32.totalorder %s512, %s528
      %p530 = scmp.eq.s32.totalorder %s44, 0
      %p531 = por %p529, %p530
      %s532 = ssub.s32 %s45, %s57
      %s533 = ssub.s32 %s46, %s53
      %s534 = sor.u32 %s532, %s533
      %p535 = scmp.eq.s32.totalorder %s534, 0
      %s537 = sadd.s32 %s536, 1
      %s538 = scalar_select %p535, %s536, %s537
      %p541 = pneg %p535
      %p542 = scmp.eq.s32.totalorder %s38, 1
      %p543 = por %p541, %p542
      %p544 = scmp.ne.s32.totalorder %s536, %s539
      %p545 = scmp.eq.s32.totalorder %s38, 0
      %p546 = por %p544, %p545
      %p547 = scmp.ne.s32.totalorder %s536, %s539
      %p548 = scmp.eq.s32.totalorder %s43, 1
      %p549 = por %p547, %p548
      %p550 = scmp.ne.s32.totalorder %s539, %s540
      %p551 = scmp.eq.s32.totalorder %s43, 0
      %p552 = por %p550, %p551
      %p553 = scmp.ne.s32.totalorder %s539, %s540
      %p554 = scmp.eq.s32.totalorder %s44, 1
      %p555 = por %p553, %p554
      %p557 = scmp.ne.s32.totalorder %s540, %s556
      %p558 = scmp.eq.s32.totalorder %s44, 0
      %p559 = por %p557, %p558
      %p560 = scmp.le.s32.totalorder 1, %s38
      %p561 = scmp.lt.s32.totalorder %s38, 3
      %p562 = pnand %p560, %p561
      %p563 = pneg %p562
      // Predicated region
      $region9: #{tpu_custom_call.1} parent=5 // pred_check
        _
      $region10: #{tpu_custom_call.1} parent=5 // pred_check_branch
        %565 = sbr.rel (%p562) target = $region12
      $region11: #{tpu_custom_call.1} parent=5 // pred_region
        %s566 = ssub.s32 %s38, 1
        // Predicated region
        $region13: #{tpu_custom_call.1} parent=11 // pred_check
          %p567 = pneg %p181
        $region14: #{tpu_custom_call.1} parent=11 // pred_check_branch
          %569 = sbr.rel (%p567) target = $region16
        $region15: #{tpu_custom_call.1} parent=11 // pred_region
          _
        $region16: #{tpu_custom_call.1} parent=11 // pred_fallthru
          _
        // Predicated region
        $region17: #{tpu_custom_call.1} parent=11 // pred_check
          %p570 = pneg %p202
        $region18: #{tpu_custom_call.1} parent=11 // pred_check_branch
          %572 = sbr.rel (%p570) target = $region20
        $region19: #{tpu_custom_call.1} parent=11 // pred_region
          %s574 = ssub.s32 16, 16
          %575 = vsyncadd [#allocation3], %s574
          %s577 = sshll.u32 [#allocation2], 4
          %s578 = int_to_ptr.vmem [resolvable:$true] %s577
          %580 = dma.hbm_to_vmem [thread:$0]  %s5, 16, %s578, [#allocation3]
        $region20: #{tpu_custom_call.1} parent=11 // pred_fallthru
          _
        // Predicated region
        $region21: #{tpu_custom_call.1} parent=11 // pred_check
          %p581 = pneg %p223
        $region22: #{tpu_custom_call.1} parent=11 // pred_check_branch
          %583 = sbr.rel (%p581) target = $region24
        $region23: #{tpu_custom_call.1} parent=11 // pred_region
          %s585 = ssub.s32 256, 256
          %586 = vsyncadd [#allocation6], %s585
          %s587 = sshll.u32 [#allocation5], 4
          %s588 = int_to_ptr.vmem [resolvable:$true] %s587
          %593 = dma.hbm_to_vmem [thread:$0]  %s6, 256, %s588, [#allocation6], 64, 64, 4
        $region24: #{tpu_custom_call.1} parent=11 // pred_fallthru
          _
        // Predicated region
        $region25: #{tpu_custom_call.1} parent=11 // pred_check
          %p594 = pneg %p244
        $region26: #{tpu_custom_call.1} parent=11 // pred_check_branch
          %596 = sbr.rel (%p594) target = $region28
        $region27: #{tpu_custom_call.1} parent=11 // pred_region
          %s598 = ssub.s32 16, 16
          %599 = vsyncadd [#allocation6], %s598
          %s601 = sshll.u32 [#allocation7], 4
          %s602 = int_to_ptr.vmem [resolvable:$true] %s601
          %604 = dma.hbm_to_vmem [thread:$0]  %s7, 16, %s602, [#allocation6]
        $region28: #{tpu_custom_call.1} parent=11 // pred_fallthru
          _
        // Predicated region
        $region29: #{tpu_custom_call.1} parent=11 // pred_check
          %p605 = pneg %p265
        $region30: #{tpu_custom_call.1} parent=11 // pred_check_branch
          %607 = sbr.rel (%p605) target = $region32
        $region31: #{tpu_custom_call.1} parent=11 // pred_region
          %s609 = ssub.s32 256, 256
          %610 = vsyncadd [#allocation9], %s609
          %s611 = sshll.u32 [#allocation8], 4
          %s612 = int_to_ptr.vmem [resolvable:$true] %s611
          %617 = dma.hbm_to_vmem [thread:$0]  %s8, 256, %s612, [#allocation9], 64, 64, 4
        $region32: #{tpu_custom_call.1} parent=11 // pred_fallthru
          _
        // Predicated region
        $region33: #{tpu_custom_call.1} parent=11 // pred_check
          %p618 = pneg %p286
        $region34: #{tpu_custom_call.1} parent=11 // pred_check_branch
          %620 = sbr.rel (%p618) target = $region36
        $region35: #{tpu_custom_call.1} parent=11 // pred_region
          _
        $region36: #{tpu_custom_call.1} parent=11 // pred_fallthru
          _
        // Predicated region
        $region37: #{tpu_custom_call.1} parent=11 // pred_check
          %p621 = pneg %p307
        $region38: #{tpu_custom_call.1} parent=11 // pred_check_branch
          %623 = sbr.rel (%p621) target = $region40
        $region39: #{tpu_custom_call.1} parent=11 // pred_region
          %s625 = ssub.s32 256, 256
          %626 = vsyncadd [#allocation9], %s625
          %s627 = sshll.u32 [#allocation10], 4
          %s628 = int_to_ptr.vmem [resolvable:$true] %s627
          %633 = dma.hbm_to_vmem [thread:$0]  %s10, 256, %s628, [#allocation9], 64, 64, 4
        $region40: #{tpu_custom_call.1} parent=11 // pred_fallthru
          _
        // Predicated region
        $region41: #{tpu_custom_call.1} parent=11 // pred_check
          %p634 = pneg %p328
        $region42: #{tpu_custom_call.1} parent=11 // pred_check_branch
          %636 = sbr.rel (%p634) target = $region44
        $region43: #{tpu_custom_call.1} parent=11 // pred_region
          _
        $region44: #{tpu_custom_call.1} parent=11 // pred_fallthru
          _
        // Predicated region
        $region45: #{tpu_custom_call.1} parent=11 // pred_check
          %p637 = pneg %p349
        $region46: #{tpu_custom_call.1} parent=11 // pred_check_branch
          %639 = sbr.rel (%p637) target = $region48
        $region47: #{tpu_custom_call.1} parent=11 // pred_region
          _
        $region48: #{tpu_custom_call.1} parent=11 // pred_fallthru
          _
        // Predicated region
        $region49: #{tpu_custom_call.1} parent=11 // pred_check
          %p640 = pneg %p370
        $region50: #{tpu_custom_call.1} parent=11 // pred_check_branch
          %642 = sbr.rel (%p640) target = $region52
        $region51: #{tpu_custom_call.1} parent=11 // pred_region
          _
        $region52: #{tpu_custom_call.1} parent=11 // pred_fallthru
          _
        // Predicated region
        $region53: #{tpu_custom_call.1} parent=11 // pred_check
          %p643 = pneg %p391
        $region54: #{tpu_custom_call.1} parent=11 // pred_check_branch
          %645 = sbr.rel (%p643) target = $region56
        $region55: #{tpu_custom_call.1} parent=11 // pred_region
          %s647 = ssub.s32 256, 256
          %648 = vsyncadd [#allocation12], %s647
          %s649 = sshll.u32 [#allocation11], 4
          %s650 = int_to_ptr.vmem [resolvable:$true] %s649
          %655 = dma.hbm_to_vmem [thread:$0]  %s14, 256, %s650, [#allocation12], 64, 64, 4
        $region56: #{tpu_custom_call.1} parent=11 // pred_fallthru
          _
        // Predicated region
        $region57: #{tpu_custom_call.1} parent=11 // pred_check
          %p656 = pneg %p412
        $region58: #{tpu_custom_call.1} parent=11 // pred_check_branch
          %658 = sbr.rel (%p656) target = $region60
        $region59: #{tpu_custom_call.1} parent=11 // pred_region
          _
        $region60: #{tpu_custom_call.1} parent=11 // pred_fallthru
          _
        // Predicated region
        $region61: #{tpu_custom_call.1} parent=11 // pred_check
          %p659 = pneg %p433
        $region62: #{tpu_custom_call.1} parent=11 // pred_check_branch
          %661 = sbr.rel (%p659) target = $region64
        $region63: #{tpu_custom_call.1} parent=11 // pred_region
          _
        $region64: #{tpu_custom_call.1} parent=11 // pred_fallthru
          _
        // Predicated region
        $region65: #{tpu_custom_call.1} parent=11 // pred_check
          %p662 = pneg %p454
        $region66: #{tpu_custom_call.1} parent=11 // pred_check_branch
          %664 = sbr.rel (%p662) target = $region68
        $region67: #{tpu_custom_call.1} parent=11 // pred_region
          _
        $region68: #{tpu_custom_call.1} parent=11 // pred_fallthru
          _
        // Predicated region
        $region69: #{tpu_custom_call.1} parent=11 // pred_check
          %p665 = pneg %p475
        $region70: #{tpu_custom_call.1} parent=11 // pred_check_branch
          %667 = sbr.rel (%p665) target = $region72
        $region71: #{tpu_custom_call.1} parent=11 // pred_region
          _
        $region72: #{tpu_custom_call.1} parent=11 // pred_fallthru
          _
        // Predicated region
        $region73: #{tpu_custom_call.1} parent=11 // pred_check
          %p668 = pneg %p496
        $region74: #{tpu_custom_call.1} parent=11 // pred_check_branch
          %670 = sbr.rel (%p668) target = $region76
        $region75: #{tpu_custom_call.1} parent=11 // pred_region
          _
        $region76: #{tpu_custom_call.1} parent=11 // pred_fallthru
          _
      $region12: #{tpu_custom_call.1} parent=5 // pred_fallthru
        _
      %p671 = scmp.lt.s32.totalorder %s38, 2
      // Predicated region
      $region77: #{tpu_custom_call.1} parent=5 // pred_check
        %p672 = pneg %p671
      $region78: #{tpu_custom_call.1} parent=5 // pred_check_branch
        %674 = sbr.rel (%p672) target = $region80
      $region79: #{tpu_custom_call.1} parent=5 // pred_region
        // Predicated region
        $region81: #{tpu_custom_call.1} parent=79 // pred_check
          %p675 = pneg %p72
        $region82: #{tpu_custom_call.1} parent=79 // pred_check_branch
          %677 = sbr.rel (%p675) target = $region84
        $region83: #{tpu_custom_call.1} parent=79 // pred_region
          %p678 = scmp.lt.s32.totalorder %s45, 1
          %s679 = scalar_select %p678, %s45, 1
          %p680 = scmp.lt.s32.totalorder %s46, 0
          %s681 = scalar_select %p680, %s46, 0
          %s682 = sadd.s32 %s681, %s679
          %s683 = smul.addr %s682, 8
          %s684 = scalar_lea.vmem %s0, %s683
        $region84: #{tpu_custom_call.1} parent=79 // pred_fallthru
          _
        // Predicated region
        $region85: #{tpu_custom_call.1} parent=79 // pred_check
          %p685 = pneg %p98
        $region86: #{tpu_custom_call.1} parent=79 // pred_check_branch
          %687 = sbr.rel (%p685) target = $region88
        $region87: #{tpu_custom_call.1} parent=79 // pred_region
          %p688 = scmp.lt.s32.totalorder %s45, 1
          %s689 = scalar_select %p688, %s45, 1
          %s690 = smul.addr %s689, 8
          %s691 = scalar_lea.vmem %s1, %s690
        $region88: #{tpu_custom_call.1} parent=79 // pred_fallthru
          _
        // Predicated region
        $region89: #{tpu_custom_call.1} parent=79 // pred_check
          %p692 = pneg %p126
        $region90: #{tpu_custom_call.1} parent=79 // pred_check_branch
          %694 = sbr.rel (%p692) target = $region92
        $region91: #{tpu_custom_call.1} parent=79 // pred_region
          %p695 = scmp.lt.s32.totalorder %s45, 1
          %s696 = scalar_select %p695, %s45, 1
          %p697 = scmp.lt.s32.totalorder %s46, 0
          %s698 = scalar_select %p697, %s46, 0
          %s699 = sadd.s32 %s698, %s696
          %s700 = smul.addr %s699, 8
          %s701 = scalar_lea.vmem %s2, %s700
        $region92: #{tpu_custom_call.1} parent=79 // pred_fallthru
          _
        // Predicated region
        $region93: #{tpu_custom_call.1} parent=79 // pred_check
          %p702 = pneg %p154
        $region94: #{tpu_custom_call.1} parent=79 // pred_check_branch
          %704 = sbr.rel (%p702) target = $region96
        $region95: #{tpu_custom_call.1} parent=79 // pred_region
          %p705 = scmp.lt.s32.totalorder %s45, 1
          %s706 = scalar_select %p705, %s45, 1
          %p707 = scmp.lt.s32.totalorder %s46, 0
          %s708 = scalar_select %p707, %s46, 0
          %s709 = sadd.s32 %s708, %s706
          %s710 = smul.addr %s709, 8
          %s711 = scalar_lea.vmem %s3, %s710
        $region96: #{tpu_custom_call.1} parent=79 // pred_fallthru
          _
      $region80: #{tpu_custom_call.1} parent=5 // pred_fallthru
        _
      %p712 = scmp.le.s32.totalorder 1, %s38
      %p713 = scmp.lt.s32.totalorder %s38, 3
      %p714 = pnand %p712, %p713
      %p715 = pneg %p714
      // Predicated region
      $region97: #{tpu_custom_call.1} parent=5 // pred_check
        _
      $region98: #{tpu_custom_call.1} parent=5 // pred_check_branch
        %717 = sbr.rel (%p714) target = $region100
      $region99: #{tpu_custom_call.1} parent=5 // pred_region
        %s718 = ssub.s32 %s38, 1
        // Predicated region
        $region101: #{tpu_custom_call.1} parent=99 // pred_check
          %p719 = pneg %p202
        $region102: #{tpu_custom_call.1} parent=99 // pred_check_branch
          %721 = sbr.rel (%p719) target = $region104
        $region103: #{tpu_custom_call.1} parent=99 // pred_region
          %722 = dma.done [#allocation3], 16
        $region104: #{tpu_custom_call.1} parent=99 // pred_fallthru
          _
        // Predicated region
        $region105: #{tpu_custom_call.1} parent=99 // pred_check
          %p723 = pneg %p223
        $region106: #{tpu_custom_call.1} parent=99 // pred_check_branch
          %725 = sbr.rel (%p723) target = $region108
        $region107: #{tpu_custom_call.1} parent=99 // pred_region
          %726 = dma.done [#allocation6], 256
        $region108: #{tpu_custom_call.1} parent=99 // pred_fallthru
          _
        // Predicated region
        $region109: #{tpu_custom_call.1} parent=99 // pred_check
          %p727 = pneg %p244
        $region110: #{tpu_custom_call.1} parent=99 // pred_check_branch
          %729 = sbr.rel (%p727) target = $region112
        $region111: #{tpu_custom_call.1} parent=99 // pred_region
          %730 = dma.done [#allocation6], 16
        $region112: #{tpu_custom_call.1} parent=99 // pred_fallthru
          _
        // Predicated region
        $region113: #{tpu_custom_call.1} parent=99 // pred_check
          %p731 = pneg %p265
        $region114: #{tpu_custom_call.1} parent=99 // pred_check_branch
          %733 = sbr.rel (%p731) target = $region116
        $region115: #{tpu_custom_call.1} parent=99 // pred_region
          %734 = dma.done [#allocation9], 256
        $region116: #{tpu_custom_call.1} parent=99 // pred_fallthru
          _
        // Predicated region
        $region117: #{tpu_custom_call.1} parent=99 // pred_check
          %p735 = pneg %p307
        $region118: #{tpu_custom_call.1} parent=99 // pred_check_branch
          %737 = sbr.rel (%p735) target = $region120
        $region119: #{tpu_custom_call.1} parent=99 // pred_region
          %738 = dma.done [#allocation9], 256
        $region120: #{tpu_custom_call.1} parent=99 // pred_fallthru
          _
        // Predicated region
        $region121: #{tpu_custom_call.1} parent=99 // pred_check
          %p739 = pneg %p391
        $region122: #{tpu_custom_call.1} parent=99 // pred_check_branch
          %741 = sbr.rel (%p739) target = $region124
        $region123: #{tpu_custom_call.1} parent=99 // pred_region
          %742 = dma.done [#allocation12], 256
        $region124: #{tpu_custom_call.1} parent=99 // pred_fallthru
          _
        %p743 = scmp.lt.s32.totalorder %s47, 1
        %s744 = scalar_select %p743, %s47, 1
        %p745 = scmp.lt.s32.totalorder %s48, 0
        %s746 = scalar_select %p745, %s48, 0
        %s747 = sadd.s32 %s746, %s744
        %s748 = smul.addr %s747, 8
        %s749 = scalar_lea.vmem %s0, %s748
        %p750 = pneg %p78
        %p751 = pneg %p75
        %p752 = scmp.lt.s32.totalorder %s47, 1
        %s753 = scalar_select %p752, %s47, 1
        %s754 = smul.addr %s753, 8
        %s755 = scalar_lea.vmem %s1, %s754
        %p756 = pneg %p104
        %p757 = pneg %p101
        %p758 = scmp.lt.s32.totalorder %s47, 1
        %s759 = scalar_select %p758, %s47, 1
        %p760 = scmp.lt.s32.totalorder %s48, 0
        %s761 = scalar_select %p760, %s48, 0
        %s762 = sadd.s32 %s761, %s759
        %s763 = smul.addr %s762, 8
        %s764 = scalar_lea.vmem %s2, %s763
        %p765 = pneg %p132
        %p766 = pneg %p129
        %p767 = scmp.lt.s32.totalorder %s47, 1
        %s768 = scalar_select %p767, %s47, 1
        %p769 = scmp.lt.s32.totalorder %s48, 0
        %s770 = scalar_select %p769, %s48, 0
        %s771 = sadd.s32 %s770, %s768
        %s772 = smul.addr %s771, 8
        %s773 = scalar_lea.vmem %s3, %s772
        %p774 = pneg %p160
        %p775 = pneg %p157
        %p776 = pneg %p181
        %p777 = pneg %p178
        %p778 = pneg %p202
        %p779 = pneg %p199
        %p780 = pneg %p223
        %p781 = pneg %p220
        %p782 = pneg %p244
        %p783 = pneg %p241
        %p784 = pneg %p265
        %p785 = pneg %p262
        %p786 = pneg %p286
        %p787 = pneg %p283
        %p788 = pneg %p307
        %p789 = pneg %p304
        %p790 = pneg %p328
        %p791 = pneg %p325
        %p792 = pneg %p349
        %p793 = pneg %p346
        %p794 = pneg %p370
        %p795 = pneg %p367
        %p796 = pneg %p391
        %p797 = pneg %p388
        %p798 = pneg %p412
        %p799 = pneg %p409
        %p800 = pneg %p433
        %p801 = pneg %p430
        %p802 = pneg %p454
        %p803 = pneg %p451
        %p804 = pneg %p475
        %p805 = pneg %p472
        %p806 = pneg %p496
        %p807 = pneg %p493
        %p808 = pneg %p524
        %p809 = pneg %p521
        %s810 = sand.u32 %s511, 1
        %s811 = scalar_lea.sflag [#allocation4], %s810
        %s812 = sand.u32 %s511, 1
        %s813 = smul.addr %s812, 8
        %s814 = scalar_lea.vmem [#allocation13], %s813
        %p815 = pneg %p552
        %p816 = pneg %p549
        %s817 = sand.u32 %s539, 1
        %s818 = scalar_lea.sflag [#allocation15], %s817
        %s819 = sand.u32 %s539, 1
        %s820 = smul.addr %s819, 32
        %s821 = scalar_lea.vmem [#allocation14], %s820
        %p822 = scmp.lt.s32.totalorder %s47, 1
        %s823 = scalar_select %p822, %s47, 1
        %p824 = scmp.lt.s32.totalorder %s48, 0
        %s825 = scalar_select %p824, %s48, 0
        %s826 = sadd.s32 %s825, %s823
        %s827 = smul.addr %s826, 8
        %s828 = scalar_lea.vmem %s0, %s827
        %p829 = scmp.lt.s32.totalorder %s47, 1
        %s830 = scalar_select %p829, %s47, 1
        %s831 = smul.addr %s830, 8
        %s832 = scalar_lea.vmem %s1, %s831
        %p833 = scmp.lt.s32.totalorder %s47, 1
        %s834 = scalar_select %p833, %s47, 1
        %p835 = scmp.lt.s32.totalorder %s48, 0
        %s836 = scalar_select %p835, %s48, 0
        %s837 = sadd.s32 %s836, %s834
        %s838 = smul.addr %s837, 8
        %s839 = scalar_lea.vmem %s2, %s838
        %p840 = scmp.lt.s32.totalorder %s47, 1
        %s841 = scalar_select %p840, %s47, 1
        %p842 = scmp.lt.s32.totalorder %s48, 0
        %s843 = scalar_select %p842, %s48, 0
        %s844 = sadd.s32 %s843, %s841
        %s845 = smul.addr %s844, 8
        %s846 = scalar_lea.vmem %s3, %s845
        %v848 = vld [vmem:[%s828] sm:$0xff]
        %v849 = vpack.c.bf16 %v848, %v848
        %v850 = vld [vmem:[%s832] sm:$0xff]
        %v851 = vpack.c.bf16 %v850, %v850
        %v852 = vld [vmem:[%s839] sm:$0xff]
        %v853 = vmul.f32 %v852, -1e+30
        %v854 = vld [vmem:[%s846] sm:$0xff]
        %v855 = vld [vmem:[%s4] sm:$0xf]
        %v856 = vld [vmem:[%s4 + $0x4] sm:$0xf]
        %v857 = vld [vmem:[%s4 + $0x8] sm:$0xf]
        %v858 = vld [vmem:[%s4 + $0xc] sm:$0xf]
        %v859 = vld [vmem:[#allocation2] sm:$0x1]
        %v861 = vlaneseq
        %v862 = vshrl.u32 %v861, 7
        %v863 = vsub.s32 0, %v862
        %v864 = vrot.slane %v859, %v863
        %v870 = vunpack.c.l.b16 %v855
        %v871 = vunpack.c.l.b16 %v856
        %v872 = vunpack.c.l.b16 %v857
        %v873 = vunpack.c.l.b16 %v858
        %v874 = vpack.c.b16 %v871, %v870
        %v875 = vpack.c.b16 %v873, %v872
        %vm878 = vcmask 261120
        %v880 = vsel %vm878, %v849, 0
        %882 = vmatprep.subr.bf16.mxu0 0
        %883 = vmatpush1.bf16.msra.mxu0 0
        %884 = vmatprep.subr.bf16.mxu0 0
        %885 = vmatpush1.bf16.msra.mxu0 0
        %886 = vmatprep.subr.bf16.mxu0 0
        %887 = vmatpush1.bf16.msra.mxu0 0
        %888 = vmatprep.subr.bf16.mxu0 0
        %889 = vmatpush1.bf16.msra.mxu0 0
        %890 = vmatprep.subr.bf16.mxu0 0
        %891 = vmatpush1.bf16.msra.mxu0 0
        %892 = vmatprep.subr.bf16.mxu0 0
        %893 = vmatpush1.bf16.msra.mxu0 0
        %894 = vmatprep.subr.bf16.mxu0 0
        %895 = vmatpush1.bf16.msra.mxu0 %v875
        %896 = vmatprep.subr.bf16.mxu0 0
        %897 = vmatpush1.bf16.msra.mxu0 %v874
        %898 = vmatprep.subr.bf16.mxu0 0
        %899 = vmatpush2.bf16.msra.mxu0 0
        %900 = vmatprep.subr.bf16.mxu0 0
        %901 = vmatpush2.bf16.msra.mxu0 0
        %902 = vmatprep.subr.bf16.mxu0 0
        %903 = vmatpush2.bf16.msra.mxu0 0
        %904 = vmatprep.subr.bf16.mxu0 0
        %905 = vmatpush2.bf16.msra.mxu0 0
        %906 = vmatprep.subr.bf16.mxu0 0
        %907 = vmatpush2.bf16.msra.mxu0 0
        %908 = vmatprep.subr.bf16.mxu0 0
        %909 = vmatpush2.bf16.msra.mxu0 0
        %910 = vmatprep.subr.bf16.mxu0 0
        %911 = vmatpush2.bf16.msra.mxu0 0
        %912 = vmatprep.subr.bf16.mxu0 0
        %913 = vmatpush2.bf16.msra.mxu0 0
        %914 = vmatprep.mubr.bf16.mxu0 0
        %915 = vmatmul.mubr.bf16.gmra.mxu0 %v880
        %v916 = vpop.f32.mrf.mxu0
        %v917 = vadd.f32 %v864, %v916
        %v918 = vpop.f32.mrf.mxu0
        %v919 = vpop.f32.mrf.mxu0
        %v920 = vpop.f32.mrf.mxu0
        %921 = vdwg.mxu0
        %v922 = vld [vmem:[#allocation5] sm:$0xf]
        %v923 = vld [vmem:[#allocation5 + $0x4] sm:$0xf]
        %v924 = vld [vmem:[#allocation5 + $0x8] sm:$0xf]
        %v925 = vld [vmem:[#allocation5 + $0xc] sm:$0xf]
        %v926 = vld [vmem:[#allocation7] sm:$0x1]
        %v928 = vlaneseq
        %v929 = vshrl.u32 %v928, 7
        %v930 = vsub.s32 0, %v929
        %v931 = vrot.slane %v926, %v930
        %v937 = vunpack.c.l.b16 %v922
        %v938 = vunpack.c.l.b16 %v923
        %v939 = vunpack.c.l.b16 %v924
        %v940 = vunpack.c.l.b16 %v925
        %v941 = vpack.c.b16 %v938, %v937
        %v942 = vpack.c.b16 %v940, %v939
        %v946 = vsel %vm878, %v851, 0
        %948 = vmatprep.subr.bf16.mxu0 0
        %949 = vmatpush1.bf16.msra.mxu0 0
        %950 = vmatprep.subr.bf16.mxu0 0
        %951 = vmatpush1.bf16.msra.mxu0 0
        %952 = vmatprep.subr.bf16.mxu0 0
        %953 = vmatpush1.bf16.msra.mxu0 0
        %954 = vmatprep.subr.bf16.mxu0 0
        %955 = vmatpush1.bf16.msra.mxu0 0
        %956 = vmatprep.subr.bf16.mxu0 0
        %957 = vmatpush1.bf16.msra.mxu0 0
        %958 = vmatprep.subr.bf16.mxu0 0
        %959 = vmatpush1.bf16.msra.mxu0 0
        %960 = vmatprep.subr.bf16.mxu0 0
        %961 = vmatpush1.bf16.msra.mxu0 %v942
        %962 = vmatprep.subr.bf16.mxu0 0
        %963 = vmatpush1.bf16.msra.mxu0 %v941
        %964 = vmatprep.subr.bf16.mxu0 0
        %965 = vmatpush2.bf16.msra.mxu0 0
        %966 = vmatprep.subr.bf16.mxu0 0
        %967 = vmatpush2.bf16.msra.mxu0 0
        %968 = vmatprep.subr.bf16.mxu0 0
        %969 = vmatpush2.bf16.msra.mxu0 0
        %970 = vmatprep.subr.bf16.mxu0 0
        %971 = vmatpush2.bf16.msra.mxu0 0
        %972 = vmatprep.subr.bf16.mxu0 0
        %973 = vmatpush2.bf16.msra.mxu0 0
        %974 = vmatprep.subr.bf16.mxu0 0
        %975 = vmatpush2.bf16.msra.mxu0 0
        %976 = vmatprep.subr.bf16.mxu0 0
        %977 = vmatpush2.bf16.msra.mxu0 0
        %978 = vmatprep.subr.bf16.mxu0 0
        %979 = vmatpush2.bf16.msra.mxu0 0
        %980 = vmatprep.mubr.bf16.mxu0 0
        %981 = vmatmul.mubr.bf16.gmra.mxu0 %v946
        %v982 = vpop.f32.mrf.mxu0
        %v983 = vadd.f32 %v931, %v982
        %v984 = vpop.f32.mrf.mxu0
        %v985 = vpop.f32.mrf.mxu0
        %v986 = vpop.f32.mrf.mxu0
        %987 = vdwg.mxu0
        %v988 = vld [vmem:[#allocation8] sm:$0xf]
        %v989 = vld [vmem:[#allocation8 + $0x4] sm:$0xf]
        %v990 = vld [vmem:[#allocation8 + $0x8] sm:$0xf]
        %v991 = vld [vmem:[#allocation8 + $0xc] sm:$0xf]
        %v992 = vld [vmem:[%s9] sm:$0x1]
        %v994 = vlaneseq
        %v995 = vshrl.u32 %v994, 7
        %v996 = vsub.s32 0, %v995
        %v997 = vrot.slane %v992, %v996
        %v1003 = vunpack.c.l.b16 %v988
        %v1004 = vunpack.c.l.b16 %v989
        %v1005 = vunpack.c.l.b16 %v990
        %v1006 = vunpack.c.l.b16 %v991
        %v1007 = vpack.c.b16 %v1004, %v1003
        %v1008 = vpack.c.b16 %v1006, %v1005
        %1011 = vmatprep.subr.bf16.mxu0 0
        %1012 = vmatpush1.bf16.msra.mxu0 0
        %1013 = vmatprep.subr.bf16.mxu0 0
        %1014 = vmatpush1.bf16.msra.mxu0 0
        %1015 = vmatprep.subr.bf16.mxu0 0
        %1016 = vmatpush1.bf16.msra.mxu0 0
        %1017 = vmatprep.subr.bf16.mxu0 0
        %1018 = vmatpush1.bf16.msra.mxu0 0
        %1019 = vmatprep.subr.bf16.mxu0 0
        %1020 = vmatpush1.bf16.msra.mxu0 0
        %1021 = vmatprep.subr.bf16.mxu0 0
        %1022 = vmatpush1.bf16.msra.mxu0 0
        %1023 = vmatprep.subr.bf16.mxu0 0
        %1024 = vmatpush1.bf16.msra.mxu0 %v1008
        %1025 = vmatprep.subr.bf16.mxu0 0
        %1026 = vmatpush1.bf16.msra.mxu0 %v1007
        %1027 = vmatprep.subr.bf16.mxu0 0
        %1028 = vmatpush2.bf16.msra.mxu0 0
        %1029 = vmatprep.subr.bf16.mxu0 0
        %1030 = vmatpush2.bf16.msra.mxu0 0
        %1031 = vmatprep.subr.bf16.mxu0 0
        %1032 = vmatpush2.bf16.msra.mxu0 0
        %1033 = vmatprep.subr.bf16.mxu0 0
        %1034 = vmatpush2.bf16.msra.mxu0 0
        %1035 = vmatprep.subr.bf16.mxu0 0
        %1036 = vmatpush2.bf16.msra.mxu0 0
        %1037 = vmatprep.subr.bf16.mxu0 0
        %1038 = vmatpush2.bf16.msra.mxu0 0
        %1039 = vmatprep.subr.bf16.mxu0 0
        %1040 = vmatpush2.bf16.msra.mxu0 0
        %1041 = vmatprep.subr.bf16.mxu0 0
        %1042 = vmatpush2.bf16.msra.mxu0 0
        %1043 = vmatprep.mubr.bf16.mxu0 0
        %1044 = vmatmul.mubr.bf16.gmra.mxu0 %v946
        %v1045 = vpop.f32.mrf.mxu0
        %v1046 = vadd.f32 %v997, %v1045
        %v1047 = vpop.f32.mrf.mxu0
        %v1048 = vpop.f32.mrf.mxu0
        %v1049 = vpop.f32.mrf.mxu0
        %1050 = vdwg.mxu0
        %v1051 = vpack.c.bf16 %v917, %v917
        %v1052 = vpack.c.bf16 %v983, %v983
        %vm1053 = vcmask 64512
        %v1055 = vsel %vm1053, %v1051, 0
        %v1058 = vsel %vm1053, %v1052, 0
        %1060 = vmatprep.subr.bf16.mxu0 0
        %1061 = vmatpush1.bf16.xpose.msra.mxu0 0
        %1062 = vmatprep.subr.bf16.mxu0 0
        %1063 = vmatpush1.bf16.xpose.msra.mxu0 0
        %1064 = vmatprep.subr.bf16.mxu0 0
        %1065 = vmatpush1.bf16.xpose.msra.mxu0 0
        %1066 = vmatprep.subr.bf16.mxu0 0
        %1067 = vmatpush1.bf16.xpose.msra.mxu0 0
        %1068 = vmatprep.subr.bf16.mxu0 0
        %1069 = vmatpush1.bf16.xpose.msra.mxu0 0
        %1070 = vmatprep.subr.bf16.mxu0 0
        %1071 = vmatpush1.bf16.xpose.msra.mxu0 0
        %1072 = vmatprep.subr.bf16.mxu0 0
        %1073 = vmatpush1.bf16.xpose.msra.mxu0 0
        %1074 = vmatprep.subr.bf16.mxu0 0
        %1075 = vmatpush1.bf16.xpose.msra.mxu0 %v1058
        %1076 = vmatprep.subr.bf16.mxu0 0
        %1077 = vmatpush2.bf16.xpose.msra.mxu0 0
        %1078 = vmatprep.subr.bf16.mxu0 0
        %1079 = vmatpush2.bf16.xpose.msra.mxu0 0
        %1080 = vmatprep.subr.bf16.mxu0 0
        %1081 = vmatpush2.bf16.xpose.msra.mxu0 0
        %1082 = vmatprep.subr.bf16.mxu0 0
        %1083 = vmatpush2.bf16.xpose.msra.mxu0 0
        %1084 = vmatprep.subr.bf16.mxu0 0
        %1085 = vmatpush2.bf16.xpose.msra.mxu0 0
        %1086 = vmatprep.subr.bf16.mxu0 0
        %1087 = vmatpush2.bf16.xpose.msra.mxu0 0
        %1088 = vmatprep.subr.bf16.mxu0 0
        %1089 = vmatpush2.bf16.xpose.msra.mxu0 0
        %1090 = vmatprep.subr.bf16.mxu0 0
        %1091 = vmatpush2.bf16.xpose.msra.mxu0 0
        %1092 = vmatprep.mubr.bf16.mxu0 0
        %1093 = vmatmul.mubr.bf16.gmra.mxu0 %v1055
        %v1094 = vpop.f32.mrf.mxu0
        %v1095 = vadd.f32 %v853, %v1094
        %v1096 = vpop.f32.mrf.mxu0
        %v1097 = vpop.f32.mrf.mxu0
        %v1098 = vpop.f32.mrf.mxu0
        %1099 = vdwg.mxu0
        %v1100 = vsel %vm1053, %v1095, -inf
        %1101 = vmax.xlane.f32.xlu0 %v1100
        %v1102 = vpop.xlane.xlu0 %1101
        %v1103 = vsub.f32 %v1095, %v1102
        %v1104 = vmul.f32 %v1103, 1.442695
        %v1105 = vpow.pop %v1104
        %v1106 = vsel %vm1053, %v1105, 0.0
        %1107 = vadd.xlane.f32.xlu0 %v1106
        %v1108 = vpop.xlane.xlu0 %1107
        %v1109 = vrcp.pop %v1108
        %v1110 = vmul.f32 %v1105, %v1109
        %1111 = vst.msk [vmem:[%s821] sm:$0xff] %vm1053, %v1110
        %v1112 = vpack.c.bf16 %v1110, %v1110
        %v1113 = vpack.c.bf16 %v1046, %v1046
        %v1115 = vsel %vm1053, %v1112, 0
        %vm1117 = vcmask 1043456
        %v1119 = vsel %vm1117, %v1113, 0
        %1121 = vmatprep.subr.bf16.mxu0 0
        %1122 = vmatpush1.bf16.msra.mxu0 0
        %1123 = vmatprep.subr.bf16.mxu0 0
        %1124 = vmatpush1.bf16.msra.mxu0 0
        %1125 = vmatprep.subr.bf16.mxu0 0
        %1126 = vmatpush1.bf16.msra.mxu0 0
        %1127 = vmatprep.subr.bf16.mxu0 0
        %1128 = vmatpush1.bf16.msra.mxu0 0
        %1129 = vmatprep.subr.bf16.mxu0 0
        %1130 = vmatpush1.bf16.msra.mxu0 0
        %1131 = vmatprep.subr.bf16.mxu0 0
        %1132 = vmatpush1.bf16.msra.mxu0 0
        %1133 = vmatprep.subr.bf16.mxu0 0
        %1134 = vmatpush1.bf16.msra.mxu0 0
        %1135 = vmatprep.subr.bf16.mxu0 0
        %1136 = vmatpush1.bf16.msra.mxu0 %v1119
        %1137 = vmatprep.subr.bf16.mxu0 0
        %1138 = vmatpush2.bf16.msra.mxu0 0
        %1139 = vmatprep.subr.bf16.mxu0 0
        %1140 = vmatpush2.bf16.msra.mxu0 0
        %1141 = vmatprep.subr.bf16.mxu0 0
        %1142 = vmatpush2.bf16.msra.mxu0 0
        %1143 = vmatprep.subr.bf16.mxu0 0
        %1144 = vmatpush2.bf16.msra.mxu0 0
        %1145 = vmatprep.subr.bf16.mxu0 0
        %1146 = vmatpush2.bf16.msra.mxu0 0
        %1147 = vmatprep.subr.bf16.mxu0 0
        %1148 = vmatpush2.bf16.msra.mxu0 0
        %1149 = vmatprep.subr.bf16.mxu0 0
        %1150 = vmatpush2.bf16.msra.mxu0 0
        %1151 = vmatprep.subr.bf16.mxu0 0
        %1152 = vmatpush2.bf16.msra.mxu0 0
        %1153 = vmatprep.mubr.bf16.mxu0 0
        %1154 = vmatmul.mubr.bf16.gmra.mxu0 %v1115
        %v1155 = vpop.f32.mrf.mxu0
        %v1156 = vadd.f32 0.0, %v1155
        %v1157 = vpop.f32.mrf.mxu0
        %v1158 = vpop.f32.mrf.mxu0
        %v1159 = vpop.f32.mrf.mxu0
        %1160 = vdwg.mxu0
        %v1161 = vpack.c.bf16 %v1156, %v1156
        %v1162 = vld [vmem:[#allocation10] sm:$0xf]
        %v1163 = vld [vmem:[%s4] sm:$0xf]
        %v1164 = vld [vmem:[%s4 + $0x4] sm:$0xf]
        %v1165 = vld [vmem:[%s4 + $0x8] sm:$0xf]
        %v1166 = vld [vmem:[%s4 + $0xc] sm:$0xf]
        %v1167 = vld [vmem:[#allocation2] sm:$0x1]
        %v1169 = vlaneseq
        %v1170 = vshrl.u32 %v1169, 7
        %v1171 = vsub.s32 0, %v1170
        %v1172 = vrot.slane %v1167, %v1171
        %v1177 = vunpack.c.l.b16 %v1163
        %v1178 = vunpack.c.l.b16 %v1164
        %v1179 = vunpack.c.l.b16 %v1165
        %v1180 = vunpack.c.l.b16 %v1166
        %v1181 = vpack.c.b16 %v1178, %v1177
        %v1182 = vpack.c.b16 %v1180, %v1179
        %1183 = vrot.lane.b32.xlu0 %v1181, 120
        %v1184 = vpop.permute.xlu0 %1183
        %1185 = vrot.lane.b32.xlu0 %v1182, 120
        %v1186 = vpop.permute.xlu0 %1185
        %1189 = vrot.lane.b32.xlu0 %v1172, 120
        %v1190 = vpop.permute.xlu0 %1189
        %1192 = vmatprep.subr.bf16.mxu0 0
        %1193 = vmatpush1.bf16.msra.mxu0 0
        %1194 = vmatprep.subr.bf16.mxu0 0
        %1195 = vmatpush1.bf16.msra.mxu0 0
        %1196 = vmatprep.subr.bf16.mxu0 0
        %1197 = vmatpush1.bf16.msra.mxu0 0
        %1198 = vmatprep.subr.bf16.mxu0 0
        %1199 = vmatpush1.bf16.msra.mxu0 0
        %1200 = vmatprep.subr.bf16.mxu0 0
        %1201 = vmatpush1.bf16.msra.mxu0 0
        %1202 = vmatprep.subr.bf16.mxu0 0
        %1203 = vmatpush1.bf16.msra.mxu0 0
        %1204 = vmatprep.subr.bf16.mxu0 0
        %1205 = vmatpush1.bf16.msra.mxu0 %v1186
        %1206 = vmatprep.subr.bf16.mxu0 0
        %1207 = vmatpush1.bf16.msra.mxu0 %v1184
        %1208 = vmatprep.subr.bf16.mxu0 0
        %1209 = vmatpush2.bf16.msra.mxu0 0
        %1210 = vmatprep.subr.bf16.mxu0 0
        %1211 = vmatpush2.bf16.msra.mxu0 0
        %1212 = vmatprep.subr.bf16.mxu0 0
        %1213 = vmatpush2.bf16.msra.mxu0 0
        %1214 = vmatprep.subr.bf16.mxu0 0
        %1215 = vmatpush2.bf16.msra.mxu0 0
        %1216 = vmatprep.subr.bf16.mxu0 0
        %1217 = vmatpush2.bf16.msra.mxu0 0
        %1218 = vmatprep.subr.bf16.mxu0 0
        %1219 = vmatpush2.bf16.msra.mxu0 0
        %1220 = vmatprep.subr.bf16.mxu0 0
        %1221 = vmatpush2.bf16.msra.mxu0 0
        %1222 = vmatprep.subr.bf16.mxu0 0
        %1223 = vmatpush2.bf16.msra.mxu0 0
        %1224 = vmatprep.mubr.bf16.mxu0 0
        %1225 = vmatmul.mubr.bf16.gmra.mxu0 %v880
        %v1226 = vpop.f32.mrf.mxu0
        %v1227 = vadd.f32 %v1190, %v1226
        %v1228 = vpop.f32.mrf.mxu0
        %v1229 = vpop.f32.mrf.mxu0
        %v1230 = vpop.f32.mrf.mxu0
        %1231 = vdwg.mxu0
        %v1232 = vld [vmem:[#allocation5] sm:$0xf]
        %v1233 = vld [vmem:[#allocation5 + $0x4] sm:$0xf]
        %v1234 = vld [vmem:[#allocation5 + $0x8] sm:$0xf]
        %v1235 = vld [vmem:[#allocation5 + $0xc] sm:$0xf]
        %v1236 = vld [vmem:[#allocation7] sm:$0x1]
        %v1238 = vlaneseq
        %v1239 = vshrl.u32 %v1238, 7
        %v1240 = vsub.s32 0, %v1239
        %v1241 = vrot.slane %v1236, %v1240
        %v1246 = vunpack.c.l.b16 %v1232
        %v1247 = vunpack.c.l.b16 %v1233
        %v1248 = vunpack.c.l.b16 %v1234
        %v1249 = vunpack.c.l.b16 %v1235
        %v1250 = vpack.c.b16 %v1247, %v1246
        %v1251 = vpack.c.b16 %v1249, %v1248
        %1252 = vrot.lane.b32.xlu0 %v1250, 120
        %v1253 = vpop.permute.xlu0 %1252
        %1254 = vrot.lane.b32.xlu0 %v1251, 120
        %v1255 = vpop.permute.xlu0 %1254
        %1258 = vrot.lane.b32.xlu0 %v1241, 120
        %v1259 = vpop.permute.xlu0 %1258
        %1261 = vmatprep.subr.bf16.mxu0 0
        %1262 = vmatpush1.bf16.msra.mxu0 0
        %1263 = vmatprep.subr.bf16.mxu0 0
        %1264 = vmatpush1.bf16.msra.mxu0 0
        %1265 = vmatprep.subr.bf16.mxu0 0
        %1266 = vmatpush1.bf16.msra.mxu0 0
        %1267 = vmatprep.subr.bf16.mxu0 0
        %1268 = vmatpush1.bf16.msra.mxu0 0
        %1269 = vmatprep.subr.bf16.mxu0 0
        %1270 = vmatpush1.bf16.msra.mxu0 0
        %1271 = vmatprep.subr.bf16.mxu0 0
        %1272 = vmatpush1.bf16.msra.mxu0 0
        %1273 = vmatprep.subr.bf16.mxu0 0
        %1274 = vmatpush1.bf16.msra.mxu0 %v1255
        %1275 = vmatprep.subr.bf16.mxu0 0
        %1276 = vmatpush1.bf16.msra.mxu0 %v1253
        %1277 = vmatprep.subr.bf16.mxu0 0
        %1278 = vmatpush2.bf16.msra.mxu0 0
        %1279 = vmatprep.subr.bf16.mxu0 0
        %1280 = vmatpush2.bf16.msra.mxu0 0
        %1281 = vmatprep.subr.bf16.mxu0 0
        %1282 = vmatpush2.bf16.msra.mxu0 0
        %1283 = vmatprep.subr.bf16.mxu0 0
        %1284 = vmatpush2.bf16.msra.mxu0 0
        %1285 = vmatprep.subr.bf16.mxu0 0
        %1286 = vmatpush2.bf16.msra.mxu0 0
        %1287 = vmatprep.subr.bf16.mxu0 0
        %1288 = vmatpush2.bf16.msra.mxu0 0
        %1289 = vmatprep.subr.bf16.mxu0 0
        %1290 = vmatpush2.bf16.msra.mxu0 0
        %1291 = vmatprep.subr.bf16.mxu0 0
        %1292 = vmatpush2.bf16.msra.mxu0 0
        %1293 = vmatprep.mubr.bf16.mxu0 0
        %1294 = vmatmul.mubr.bf16.gmra.mxu0 %v946
        %v1295 = vpop.f32.mrf.mxu0
        %v1296 = vadd.f32 %v1259, %v1295
        %v1297 = vpop.f32.mrf.mxu0
        %v1298 = vpop.f32.mrf.mxu0
        %v1299 = vpop.f32.mrf.mxu0
        %1300 = vdwg.mxu0
        %v1301 = vld [vmem:[#allocation8] sm:$0xf]
        %v1302 = vld [vmem:[#allocation8 + $0x4] sm:$0xf]
        %v1303 = vld [vmem:[#allocation8 + $0x8] sm:$0xf]
        %v1304 = vld [vmem:[#allocation8 + $0xc] sm:$0xf]
        %v1305 = vld [vmem:[%s9] sm:$0x1]
        %v1307 = vlaneseq
        %v1308 = vshrl.u32 %v1307, 7
        %v1309 = vsub.s32 0, %v1308
        %v1310 = vrot.slane %v1305, %v1309
        %v1315 = vunpack.c.l.b16 %v1301
        %v1316 = vunpack.c.l.b16 %v1302
        %v1317 = vunpack.c.l.b16 %v1303
        %v1318 = vunpack.c.l.b16 %v1304
        %v1319 = vpack.c.b16 %v1316, %v1315
        %v1320 = vpack.c.b16 %v1318, %v1317
        %1321 = vrot.lane.b32.xlu0 %v1319, 120
        %v1322 = vpop.permute.xlu0 %1321
        %1323 = vrot.lane.b32.xlu0 %v1320, 120
        %v1324 = vpop.permute.xlu0 %1323
        %1327 = vrot.lane.b32.xlu0 %v1310, 120
        %v1328 = vpop.permute.xlu0 %1327
        %1330 = vmatprep.subr.bf16.mxu0 0
        %1331 = vmatpush1.bf16.msra.mxu0 0
        %1332 = vmatprep.subr.bf16.mxu0 0
        %1333 = vmatpush1.bf16.msra.mxu0 0
        %1334 = vmatprep.subr.bf16.mxu0 0
        %1335 = vmatpush1.bf16.msra.mxu0 0
        %1336 = vmatprep.subr.bf16.mxu0 0
        %1337 = vmatpush1.bf16.msra.mxu0 0
        %1338 = vmatprep.subr.bf16.mxu0 0
        %1339 = vmatpush1.bf16.msra.mxu0 0
        %1340 = vmatprep.subr.bf16.mxu0 0
        %1341 = vmatpush1.bf16.msra.mxu0 0
        %1342 = vmatprep.subr.bf16.mxu0 0
        %1343 = vmatpush1.bf16.msra.mxu0 %v1324
        %1344 = vmatprep.subr.bf16.mxu0 0
        %1345 = vmatpush1.bf16.msra.mxu0 %v1322
        %1346 = vmatprep.subr.bf16.mxu0 0
        %1347 = vmatpush2.bf16.msra.mxu0 0
        %1348 = vmatprep.subr.bf16.mxu0 0
        %1349 = vmatpush2.bf16.msra.mxu0 0
        %1350 = vmatprep.subr.bf16.mxu0 0
        %1351 = vmatpush2.bf16.msra.mxu0 0
        %1352 = vmatprep.subr.bf16.mxu0 0
        %1353 = vmatpush2.bf16.msra.mxu0 0
        %1354 = vmatprep.subr.bf16.mxu0 0
        %1355 = vmatpush2.bf16.msra.mxu0 0
        %1356 = vmatprep.subr.bf16.mxu0 0
        %1357 = vmatpush2.bf16.msra.mxu0 0
        %1358 = vmatprep.subr.bf16.mxu0 0
        %1359 = vmatpush2.bf16.msra.mxu0 0
        %1360 = vmatprep.subr.bf16.mxu0 0
        %1361 = vmatpush2.bf16.msra.mxu0 0
        %1362 = vmatprep.mubr.bf16.mxu0 0
        %1363 = vmatmul.mubr.bf16.gmra.mxu0 %v946
        %v1364 = vpop.f32.mrf.mxu0
        %v1365 = vadd.f32 %v1328, %v1364
        %v1366 = vpop.f32.mrf.mxu0
        %v1367 = vpop.f32.mrf.mxu0
        %v1368 = vpop.f32.mrf.mxu0
        %1369 = vdwg.mxu0
        %v1370 = vpack.c.bf16 %v1227, %v1227
        %v1371 = vpack.c.bf16 %v1296, %v1296
        %v1373 = vsel %vm1053, %v1370, 0
        %v1376 = vsel %vm1053, %v1371, 0
        %1378 = vmatprep.subr.bf16.mxu0 0
        %1379 = vmatpush1.bf16.xpose.msra.mxu0 0
        %1380 = vmatprep.subr.bf16.mxu0 0
        %1381 = vmatpush1.bf16.xpose.msra.mxu0 0
        %1382 = vmatprep.subr.bf16.mxu0 0
        %1383 = vmatpush1.bf16.xpose.msra.mxu0 0
        %1384 = vmatprep.subr.bf16.mxu0 0
        %1385 = vmatpush1.bf16.xpose.msra.mxu0 0
        %1386 = vmatprep.subr.bf16.mxu0 0
        %1387 = vmatpush1.bf16.xpose.msra.mxu0 0
        %1388 = vmatprep.subr.bf16.mxu0 0
        %1389 = vmatpush1.bf16.xpose.msra.mxu0 0
        %1390 = vmatprep.subr.bf16.mxu0 0
        %1391 = vmatpush1.bf16.xpose.msra.mxu0 0
        %1392 = vmatprep.subr.bf16.mxu0 0
        %1393 = vmatpush1.bf16.xpose.msra.mxu0 %v1376
        %1394 = vmatprep.subr.bf16.mxu0 0
        %1395 = vmatpush2.bf16.xpose.msra.mxu0 0
        %1396 = vmatprep.subr.bf16.mxu0 0
        %1397 = vmatpush2.bf16.xpose.msra.mxu0 0
        %1398 = vmatprep.subr.bf16.mxu0 0
        %1399 = vmatpush2.bf16.xpose.msra.mxu0 0
        %1400 = vmatprep.subr.bf16.mxu0 0
        %1401 = vmatpush2.bf16.xpose.msra.mxu0 0
        %1402 = vmatprep.subr.bf16.mxu0 0
        %1403 = vmatpush2.bf16.xpose.msra.mxu0 0
        %1404 = vmatprep.subr.bf16.mxu0 0
        %1405 = vmatpush2.bf16.xpose.msra.mxu0 0
        %1406 = vmatprep.subr.bf16.mxu0 0
        %1407 = vmatpush2.bf16.xpose.msra.mxu0 0
        %1408 = vmatprep.subr.bf16.mxu0 0
        %1409 = vmatpush2.bf16.xpose.msra.mxu0 0
        %1410 = vmatprep.mubr.bf16.mxu0 0
        %1411 = vmatmul.mubr.bf16.gmra.mxu0 %v1373
        %v1412 = vpop.f32.mrf.mxu0
        %v1413 = vadd.f32 %v853, %v1412
        %v1414 = vpop.f32.mrf.mxu0
        %v1415 = vpop.f32.mrf.mxu0
        %v1416 = vpop.f32.mrf.mxu0
        %1417 = vdwg.mxu0
        %v1418 = vsel %vm1053, %v1413, -inf
        %1419 = vmax.xlane.f32.xlu0 %v1418
        %v1420 = vpop.xlane.xlu0 %1419
        %v1421 = vsub.f32 %v1413, %v1420
        %v1422 = vmul.f32 %v1421, 1.442695
        %v1423 = vpow.pop %v1422
        %v1424 = vsel %vm1053, %v1423, 0.0
        %1425 = vadd.xlane.f32.xlu0 %v1424
        %v1426 = vpop.xlane.xlu0 %1425
        %v1427 = vrcp.pop %v1426
        %v1428 = vmul.f32 %v1423, %v1427
        %s1429 = scalar_lea.vmem %s821, 8 [#allocation14]
        %1430 = vst.msk [vmem:[%s1429] sm:$0xff] %vm1053, %v1428
        %v1431 = vpack.c.bf16 %v1428, %v1428
        %v1432 = vpack.c.bf16 %v1365, %v1365
        %v1434 = vsel %vm1053, %v1431, 0
        %v1437 = vsel %vm1117, %v1432, 0
        %1439 = vmatprep.subr.bf16.mxu0 0
        %1440 = vmatpush1.bf16.msra.mxu0 0
        %1441 = vmatprep.subr.bf16.mxu0 0
        %1442 = vmatpush1.bf16.msra.mxu0 0
        %1443 = vmatprep.subr.bf16.mxu0 0
        %1444 = vmatpush1.bf16.msra.mxu0 0
        %1445 = vmatprep.subr.bf16.mxu0 0
        %1446 = vmatpush1.bf16.msra.mxu0 0
        %1447 = vmatprep.subr.bf16.mxu0 0
        %1448 = vmatpush1.bf16.msra.mxu0 0
        %1449 = vmatprep.subr.bf16.mxu0 0
        %1450 = vmatpush1.bf16.msra.mxu0 0
        %1451 = vmatprep.subr.bf16.mxu0 0
        %1452 = vmatpush1.bf16.msra.mxu0 0
        %1453 = vmatprep.subr.bf16.mxu0 0
        %1454 = vmatpush1.bf16.msra.mxu0 %v1437
        %1455 = vmatprep.subr.bf16.mxu0 0
        %1456 = vmatpush2.bf16.msra.mxu0 0
        %1457 = vmatprep.subr.bf16.mxu0 0
        %1458 = vmatpush2.bf16.msra.mxu0 0
        %1459 = vmatprep.subr.bf16.mxu0 0
        %1460 = vmatpush2.bf16.msra.mxu0 0
        %1461 = vmatprep.subr.bf16.mxu0 0
        %1462 = vmatpush2.bf16.msra.mxu0 0
        %1463 = vmatprep.subr.bf16.mxu0 0
        %1464 = vmatpush2.bf16.msra.mxu0 0
        %1465 = vmatprep.subr.bf16.mxu0 0
        %1466 = vmatpush2.bf16.msra.mxu0 0
        %1467 = vmatprep.subr.bf16.mxu0 0
        %1468 = vmatpush2.bf16.msra.mxu0 0
        %1469 = vmatprep.subr.bf16.mxu0 0
        %1470 = vmatpush2.bf16.msra.mxu0 0
        %1471 = vmatprep.mubr.bf16.mxu0 0
        %1472 = vmatmul.mubr.bf16.gmra.mxu0 %v1434
        %v1473 = vpop.f32.mrf.mxu0
        %v1474 = vadd.f32 0.0, %v1473
        %v1475 = vpop.f32.mrf.mxu0
        %v1476 = vpop.f32.mrf.mxu0
        %v1477 = vpop.f32.mrf.mxu0
        %1478 = vdwg.mxu0
        %v1479 = vpack.c.bf16 %v1474, %v1474
        %v1480 = vld [vmem:[#allocation10 + $0x4] sm:$0xf]
        %v1482 = vsel %vm1053, %v1479, 0
        %v1485 = vsel %vm1117, %v1480, 0
        %1487 = vmatprep.subr.bf16.mxu0 0
        %1488 = vmatpush1.bf16.msra.mxu0 0
        %1489 = vmatprep.subr.bf16.mxu0 0
        %1490 = vmatpush1.bf16.msra.mxu0 0
        %1491 = vmatprep.subr.bf16.mxu0 0
        %1492 = vmatpush1.bf16.msra.mxu0 0
        %1493 = vmatprep.subr.bf16.mxu0 0
        %1494 = vmatpush1.bf16.msra.mxu0 0
        %1495 = vmatprep.subr.bf16.mxu0 0
        %1496 = vmatpush1.bf16.msra.mxu0 0
        %1497 = vmatprep.subr.bf16.mxu0 0
        %1498 = vmatpush1.bf16.msra.mxu0 0
        %1499 = vmatprep.subr.bf16.mxu0 0
        %1500 = vmatpush1.bf16.msra.mxu0 0
        %1501 = vmatprep.subr.bf16.mxu0 0
        %1502 = vmatpush1.bf16.msra.mxu0 %v1485
        %1503 = vmatprep.subr.bf16.mxu0 0
        %1504 = vmatpush2.bf16.msra.mxu0 0
        %1505 = vmatprep.subr.bf16.mxu0 0
        %1506 = vmatpush2.bf16.msra.mxu0 0
        %1507 = vmatprep.subr.bf16.mxu0 0
        %1508 = vmatpush2.bf16.msra.mxu0 0
        %1509 = vmatprep.subr.bf16.mxu0 0
        %1510 = vmatpush2.bf16.msra.mxu0 0
        %1511 = vmatprep.subr.bf16.mxu0 0
        %1512 = vmatpush2.bf16.msra.mxu0 0
        %1513 = vmatprep.subr.bf16.mxu0 0
        %1514 = vmatpush2.bf16.msra.mxu0 0
        %1515 = vmatprep.subr.bf16.mxu0 0
        %1516 = vmatpush2.bf16.msra.mxu0 0
        %1517 = vmatprep.subr.bf16.mxu0 0
        %1518 = vmatpush2.bf16.msra.mxu0 0
        %1519 = vmatprep.mubr.bf16.mxu0 0
        %1520 = vmatmul.mubr.bf16.gmra.mxu0 %v1482
        %v1521 = vpop.f32.mrf.mxu0
        %v1522 = vadd.f32 0.0, %v1521
        %v1523 = vpop.f32.mrf.mxu0
        %v1524 = vpop.f32.mrf.mxu0
        %v1525 = vpop.f32.mrf.mxu0
        %1526 = vdwg.mxu0
        %v1528 = vsel %vm1053, %v1161, 0
        %v1531 = vsel %vm1117, %v1162, 0
        %1533 = vmatprep.subr.bf16.mxu0 0
        %1534 = vmatpush1.bf16.msra.mxu0 0
        %1535 = vmatprep.subr.bf16.mxu0 0
        %1536 = vmatpush1.bf16.msra.mxu0 0
        %1537 = vmatprep.subr.bf16.mxu0 0
        %1538 = vmatpush1.bf16.msra.mxu0 0
        %1539 = vmatprep.subr.bf16.mxu0 0
        %1540 = vmatpush1.bf16.msra.mxu0 0
        %1541 = vmatprep.subr.bf16.mxu0 0
        %1542 = vmatpush1.bf16.msra.mxu0 0
        %1543 = vmatprep.subr.bf16.mxu0 0
        %1544 = vmatpush1.bf16.msra.mxu0 0
        %1545 = vmatprep.subr.bf16.mxu0 0
        %1546 = vmatpush1.bf16.msra.mxu0 0
        %1547 = vmatprep.subr.bf16.mxu0 0
        %1548 = vmatpush1.bf16.msra.mxu0 %v1531
        %1549 = vmatprep.subr.bf16.mxu0 0
        %1550 = vmatpush2.bf16.msra.mxu0 0
        %1551 = vmatprep.subr.bf16.mxu0 0
        %1552 = vmatpush2.bf16.msra.mxu0 0
        %1553 = vmatprep.subr.bf16.mxu0 0
        %1554 = vmatpush2.bf16.msra.mxu0 0
        %1555 = vmatprep.subr.bf16.mxu0 0
        %1556 = vmatpush2.bf16.msra.mxu0 0
        %1557 = vmatprep.subr.bf16.mxu0 0
        %1558 = vmatpush2.bf16.msra.mxu0 0
        %1559 = vmatprep.subr.bf16.mxu0 0
        %1560 = vmatpush2.bf16.msra.mxu0 0
        %1561 = vmatprep.subr.bf16.mxu0 0
        %1562 = vmatpush2.bf16.msra.mxu0 0
        %1563 = vmatprep.subr.bf16.mxu0 0
        %1564 = vmatpush2.bf16.msra.mxu0 0
        %1565 = vmatprep.mubr.bf16.mxu0 0
        %1566 = vmatmul.mubr.bf16.gmra.mxu0 %v1528
        %v1567 = vpop.f32.mrf.mxu0
        %v1568 = vadd.f32 %v1522, %v1567
        %v1569 = vpop.f32.mrf.mxu0
        %v1570 = vpop.f32.mrf.mxu0
        %v1571 = vpop.f32.mrf.mxu0
        %1572 = vdwg.mxu0
        %v1573 = vld [vmem:[%s4] sm:$0xf]
        %v1574 = vld [vmem:[%s4 + $0x4] sm:$0xf]
        %v1575 = vld [vmem:[%s4 + $0x8] sm:$0xf]
        %v1576 = vld [vmem:[%s4 + $0xc] sm:$0xf]
        %v1577 = vld [vmem:[#allocation2] sm:$0x1]
        %v1579 = vlaneseq
        %v1580 = vshrl.u32 %v1579, 7
        %v1581 = vsub.s32 0, %v1580
        %v1582 = vrot.slane %v1577, %v1581
        %v1587 = vunpack.c.l.b16 %v1573
        %v1588 = vunpack.c.l.b16 %v1574
        %v1589 = vunpack.c.l.b16 %v1575
        %v1590 = vunpack.c.l.b16 %v1576
        %v1591 = vpack.c.b16 %v1588, %v1587
        %v1592 = vpack.c.b16 %v1590, %v1589
        %1593 = vrot.lane.b32.xlu0 %v1591, 112
        %v1594 = vpop.permute.xlu0 %1593
        %1595 = vrot.lane.b32.xlu0 %v1592, 112
        %v1596 = vpop.permute.xlu0 %1595
        %1599 = vrot.lane.b32.xlu0 %v1582, 112
        %v1600 = vpop.permute.xlu0 %1599
        %1602 = vmatprep.subr.bf16.mxu0 0
        %1603 = vmatpush1.bf16.msra.mxu0 0
        %1604 = vmatprep.subr.bf16.mxu0 0
        %1605 = vmatpush1.bf16.msra.mxu0 0
        %1606 = vmatprep.subr.bf16.mxu0 0
        %1607 = vmatpush1.bf16.msra.mxu0 0
        %1608 = vmatprep.subr.bf16.mxu0 0
        %1609 = vmatpush1.bf16.msra.mxu0 0
        %1610 = vmatprep.subr.bf16.mxu0 0
        %1611 = vmatpush1.bf16.msra.mxu0 0
        %1612 = vmatprep.subr.bf16.mxu0 0
        %1613 = vmatpush1.bf16.msra.mxu0 0
        %1614 = vmatprep.subr.bf16.mxu0 0
        %1615 = vmatpush1.bf16.msra.mxu0 %v1596
        %1616 = vmatprep.subr.bf16.mxu0 0
        %1617 = vmatpush1.bf16.msra.mxu0 %v1594
        %1618 = vmatprep.subr.bf16.mxu0 0
        %1619 = vmatpush2.bf16.msra.mxu0 0
        %1620 = vmatprep.subr.bf16.mxu0 0
        %1621 = vmatpush2.bf16.msra.mxu0 0
        %1622 = vmatprep.subr.bf16.mxu0 0
        %1623 = vmatpush2.bf16.msra.mxu0 0
        %1624 = vmatprep.subr.bf16.mxu0 0
        %1625 = vmatpush2.bf16.msra.mxu0 0
        %1626 = vmatprep.subr.bf16.mxu0 0
        %1627 = vmatpush2.bf16.msra.mxu0 0
        %1628 = vmatprep.subr.bf16.mxu0 0
        %1629 = vmatpush2.bf16.msra.mxu0 0
        %1630 = vmatprep.subr.bf16.mxu0 0
        %1631 = vmatpush2.bf16.msra.mxu0 0
        %1632 = vmatprep.subr.bf16.mxu0 0
        %1633 = vmatpush2.bf16.msra.mxu0 0
        %1634 = vmatprep.mubr.bf16.mxu0 0
        %1635 = vmatmul.mubr.bf16.gmra.mxu0 %v880
        %v1636 = vpop.f32.mrf.mxu0
        %v1637 = vadd.f32 %v1600, %v1636
        %v1638 = vpop.f32.mrf.mxu0
        %v1639 = vpop.f32.mrf.mxu0
        %v1640 = vpop.f32.mrf.mxu0
        %1641 = vdwg.mxu0
        %v1642 = vld [vmem:[#allocation5] sm:$0xf]
        %v1643 = vld [vmem:[#allocation5 + $0x4] sm:$0xf]
        %v1644 = vld [vmem:[#allocation5 + $0x8] sm:$0xf]
        %v1645 = vld [vmem:[#allocation5 + $0xc] sm:$0xf]
        %v1646 = vld [vmem:[#allocation7] sm:$0x1]
        %v1648 = vlaneseq
        %v1649 = vshrl.u32 %v1648, 7
        %v1650 = vsub.s32 0, %v1649
        %v1651 = vrot.slane %v1646, %v1650
        %v1656 = vunpack.c.l.b16 %v1642
        %v1657 = vunpack.c.l.b16 %v1643
        %v1658 = vunpack.c.l.b16 %v1644
        %v1659 = vunpack.c.l.b16 %v1645
        %v1660 = vpack.c.b16 %v1657, %v1656
        %v1661 = vpack.c.b16 %v1659, %v1658
        %1662 = vrot.lane.b32.xlu0 %v1660, 112
        %v1663 = vpop.permute.xlu0 %1662
        %1664 = vrot.lane.b32.xlu0 %v1661, 112
        %v1665 = vpop.permute.xlu0 %1664
        %1668 = vrot.lane.b32.xlu0 %v1651, 112
        %v1669 = vpop.permute.xlu0 %1668
        %1671 = vmatprep.subr.bf16.mxu0 0
        %1672 = vmatpush1.bf16.msra.mxu0 0
        %1673 = vmatprep.subr.bf16.mxu0 0
        %1674 = vmatpush1.bf16.msra.mxu0 0
        %1675 = vmatprep.subr.bf16.mxu0 0
        %1676 = vmatpush1.bf16.msra.mxu0 0
        %1677 = vmatprep.subr.bf16.mxu0 0
        %1678 = vmatpush1.bf16.msra.mxu0 0
        %1679 = vmatprep.subr.bf16.mxu0 0
        %1680 = vmatpush1.bf16.msra.mxu0 0
        %1681 = vmatprep.subr.bf16.mxu0 0
        %1682 = vmatpush1.bf16.msra.mxu0 0
        %1683 = vmatprep.subr.bf16.mxu0 0
        %1684 = vmatpush1.bf16.msra.mxu0 %v1665
        %1685 = vmatprep.subr.bf16.mxu0 0
        %1686 = vmatpush1.bf16.msra.mxu0 %v1663
        %1687 = vmatprep.subr.bf16.mxu0 0
        %1688 = vmatpush2.bf16.msra.mxu0 0
        %1689 = vmatprep.subr.bf16.mxu0 0
        %1690 = vmatpush2.bf16.msra.mxu0 0
        %1691 = vmatprep.subr.bf16.mxu0 0
        %1692 = vmatpush2.bf16.msra.mxu0 0
        %1693 = vmatprep.subr.bf16.mxu0 0
        %1694 = vmatpush2.bf16.msra.mxu0 0
        %1695 = vmatprep.subr.bf16.mxu0 0
        %1696 = vmatpush2.bf16.msra.mxu0 0
        %1697 = vmatprep.subr.bf16.mxu0 0
        %1698 = vmatpush2.bf16.msra.mxu0 0
        %1699 = vmatprep.subr.bf16.mxu0 0
        %1700 = vmatpush2.bf16.msra.mxu0 0
        %1701 = vmatprep.subr.bf16.mxu0 0
        %1702 = vmatpush2.bf16.msra.mxu0 0
        %1703 = vmatprep.mubr.bf16.mxu0 0
        %1704 = vmatmul.mubr.bf16.gmra.mxu0 %v946
        %v1705 = vpop.f32.mrf.mxu0
        %v1706 = vadd.f32 %v1669, %v1705
        %v1707 = vpop.f32.mrf.mxu0
        %v1708 = vpop.f32.mrf.mxu0
        %v1709 = vpop.f32.mrf.mxu0
        %1710 = vdwg.mxu0
        %v1711 = vld [vmem:[#allocation8] sm:$0xf]
        %v1712 = vld [vmem:[#allocation8 + $0x4] sm:$0xf]
        %v1713 = vld [vmem:[#allocation8 + $0x8] sm:$0xf]
        %v1714 = vld [vmem:[#allocation8 + $0xc] sm:$0xf]
        %v1715 = vld [vmem:[%s9] sm:$0x1]
        %v1717 = vlaneseq
        %v1718 = vshrl.u32 %v1717, 7
        %v1719 = vsub.s32 0, %v1718
        %v1720 = vrot.slane %v1715, %v1719
        %v1725 = vunpack.c.l.b16 %v1711
        %v1726 = vunpack.c.l.b16 %v1712
        %v1727 = vunpack.c.l.b16 %v1713
        %v1728 = vunpack.c.l.b16 %v1714
        %v1729 = vpack.c.b16 %v1726, %v1725
        %v1730 = vpack.c.b16 %v1728, %v1727
        %1731 = vrot.lane.b32.xlu0 %v1729, 112
        %v1732 = vpop.permute.xlu0 %1731
        %1733 = vrot.lane.b32.xlu0 %v1730, 112
        %v1734 = vpop.permute.xlu0 %1733
        %1737 = vrot.lane.b32.xlu0 %v1720, 112
        %v1738 = vpop.permute.xlu0 %1737
        %1740 = vmatprep.subr.bf16.mxu0 0
        %1741 = vmatpush1.bf16.msra.mxu0 0
        %1742 = vmatprep.subr.bf16.mxu0 0
        %1743 = vmatpush1.bf16.msra.mxu0 0
        %1744 = vmatprep.subr.bf16.mxu0 0
        %1745 = vmatpush1.bf16.msra.mxu0 0
        %1746 = vmatprep.subr.bf16.mxu0 0
        %1747 = vmatpush1.bf16.msra.mxu0 0
        %1748 = vmatprep.subr.bf16.mxu0 0
        %1749 = vmatpush1.bf16.msra.mxu0 0
        %1750 = vmatprep.subr.bf16.mxu0 0
        %1751 = vmatpush1.bf16.msra.mxu0 0
        %1752 = vmatprep.subr.bf16.mxu0 0
        %1753 = vmatpush1.bf16.msra.mxu0 %v1734
        %1754 = vmatprep.subr.bf16.mxu0 0
        %1755 = vmatpush1.bf16.msra.mxu0 %v1732
        %1756 = vmatprep.subr.bf16.mxu0 0
        %1757 = vmatpush2.bf16.msra.mxu0 0
        %1758 = vmatprep.subr.bf16.mxu0 0
        %1759 = vmatpush2.bf16.msra.mxu0 0
        %1760 = vmatprep.subr.bf16.mxu0 0
        %1761 = vmatpush2.bf16.msra.mxu0 0
        %1762 = vmatprep.subr.bf16.mxu0 0
        %1763 = vmatpush2.bf16.msra.mxu0 0
        %1764 = vmatprep.subr.bf16.mxu0 0
        %1765 = vmatpush2.bf16.msra.mxu0 0
        %1766 = vmatprep.subr.bf16.mxu0 0
        %1767 = vmatpush2.bf16.msra.mxu0 0
        %1768 = vmatprep.subr.bf16.mxu0 0
        %1769 = vmatpush2.bf16.msra.mxu0 0
        %1770 = vmatprep.subr.bf16.mxu0 0
        %1771 = vmatpush2.bf16.msra.mxu0 0
        %1772 = vmatprep.mubr.bf16.mxu0 0
        %1773 = vmatmul.mubr.bf16.gmra.mxu0 %v946
        %v1774 = vpop.f32.mrf.mxu0
        %v1775 = vadd.f32 %v1738, %v1774
        %v1776 = vpop.f32.mrf.mxu0
        %v1777 = vpop.f32.mrf.mxu0
        %v1778 = vpop.f32.mrf.mxu0
        %1779 = vdwg.mxu0
        %v1780 = vpack.c.bf16 %v1637, %v1637
        %v1781 = vpack.c.bf16 %v1706, %v1706
        %v1783 = vsel %vm1053, %v1780, 0
        %v1786 = vsel %vm1053, %v1781, 0
        %1788 = vmatprep.subr.bf16.mxu0 0
        %1789 = vmatpush1.bf16.xpose.msra.mxu0 0
        %1790 = vmatprep.subr.bf16.mxu0 0
        %1791 = vmatpush1.bf16.xpose.msra.mxu0 0
        %1792 = vmatprep.subr.bf16.mxu0 0
        %1793 = vmatpush1.bf16.xpose.msra.mxu0 0
        %1794 = vmatprep.subr.bf16.mxu0 0
        %1795 = vmatpush1.bf16.xpose.msra.mxu0 0
        %1796 = vmatprep.subr.bf16.mxu0 0
        %1797 = vmatpush1.bf16.xpose.msra.mxu0 0
        %1798 = vmatprep.subr.bf16.mxu0 0
        %1799 = vmatpush1.bf16.xpose.msra.mxu0 0
        %1800 = vmatprep.subr.bf16.mxu0 0
        %1801 = vmatpush1.bf16.xpose.msra.mxu0 0
        %1802 = vmatprep.subr.bf16.mxu0 0
        %1803 = vmatpush1.bf16.xpose.msra.mxu0 %v1786
        %1804 = vmatprep.subr.bf16.mxu0 0
        %1805 = vmatpush2.bf16.xpose.msra.mxu0 0
        %1806 = vmatprep.subr.bf16.mxu0 0
        %1807 = vmatpush2.bf16.xpose.msra.mxu0 0
        %1808 = vmatprep.subr.bf16.mxu0 0
        %1809 = vmatpush2.bf16.xpose.msra.mxu0 0
        %1810 = vmatprep.subr.bf16.mxu0 0
        %1811 = vmatpush2.bf16.xpose.msra.mxu0 0
        %1812 = vmatprep.subr.bf16.mxu0 0
        %1813 = vmatpush2.bf16.xpose.msra.mxu0 0
        %1814 = vmatprep.subr.bf16.mxu0 0
        %1815 = vmatpush2.bf16.xpose.msra.mxu0 0
        %1816 = vmatprep.subr.bf16.mxu0 0
        %1817 = vmatpush2.bf16.xpose.msra.mxu0 0
        %1818 = vmatprep.subr.bf16.mxu0 0
        %1819 = vmatpush2.bf16.xpose.msra.mxu0 0
        %1820 = vmatprep.mubr.bf16.mxu0 0
        %1821 = vmatmul.mubr.bf16.gmra.mxu0 %v1783
        %v1822 = vpop.f32.mrf.mxu0
        %v1823 = vadd.f32 %v853, %v1822
        %v1824 = vpop.f32.mrf.mxu0
        %v1825 = vpop.f32.mrf.mxu0
        %v1826 = vpop.f32.mrf.mxu0
        %1827 = vdwg.mxu0
        %v1828 = vsel %vm1053, %v1823, -inf
        %1829 = vmax.xlane.f32.xlu0 %v1828
        %v1830 = vpop.xlane.xlu0 %1829
        %v1831 = vsub.f32 %v1823, %v1830
        %v1832 = vmul.f32 %v1831, 1.442695
        %v1833 = vpow.pop %v1832
        %v1834 = vsel %vm1053, %v1833, 0.0
        %1835 = vadd.xlane.f32.xlu0 %v1834
        %v1836 = vpop.xlane.xlu0 %1835
        %v1837 = vrcp.pop %v1836
        %v1838 = vmul.f32 %v1833, %v1837
        %s1839 = scalar_lea.vmem %s821, 16 [#allocation14]
        %1840 = vst.msk [vmem:[%s1839] sm:$0xff] %vm1053, %v1838
        %v1841 = vpack.c.bf16 %v1838, %v1838
        %v1842 = vpack.c.bf16 %v1775, %v1775
        %v1844 = vsel %vm1053, %v1841, 0
        %v1847 = vsel %vm1117, %v1842, 0
        %1849 = vmatprep.subr.bf16.mxu0 0
        %1850 = vmatpush1.bf16.msra.mxu0 0
        %1851 = vmatprep.subr.bf16.mxu0 0
        %1852 = vmatpush1.bf16.msra.mxu0 0
        %1853 = vmatprep.subr.bf16.mxu0 0
        %1854 = vmatpush1.bf16.msra.mxu0 0
        %1855 = vmatprep.subr.bf16.mxu0 0
        %1856 = vmatpush1.bf16.msra.mxu0 0
        %1857 = vmatprep.subr.bf16.mxu0 0
        %1858 = vmatpush1.bf16.msra.mxu0 0
        %1859 = vmatprep.subr.bf16.mxu0 0
        %1860 = vmatpush1.bf16.msra.mxu0 0
        %1861 = vmatprep.subr.bf16.mxu0 0
        %1862 = vmatpush1.bf16.msra.mxu0 0
        %1863 = vmatprep.subr.bf16.mxu0 0
        %1864 = vmatpush1.bf16.msra.mxu0 %v1847
        %1865 = vmatprep.subr.bf16.mxu0 0
        %1866 = vmatpush2.bf16.msra.mxu0 0
        %1867 = vmatprep.subr.bf16.mxu0 0
        %1868 = vmatpush2.bf16.msra.mxu0 0
        %1869 = vmatprep.subr.bf16.mxu0 0
        %1870 = vmatpush2.bf16.msra.mxu0 0
        %1871 = vmatprep.subr.bf16.mxu0 0
        %1872 = vmatpush2.bf16.msra.mxu0 0
        %1873 = vmatprep.subr.bf16.mxu0 0
        %1874 = vmatpush2.bf16.msra.mxu0 0
        %1875 = vmatprep.subr.bf16.mxu0 0
        %1876 = vmatpush2.bf16.msra.mxu0 0
        %1877 = vmatprep.subr.bf16.mxu0 0
        %1878 = vmatpush2.bf16.msra.mxu0 0
        %1879 = vmatprep.subr.bf16.mxu0 0
        %1880 = vmatpush2.bf16.msra.mxu0 0
        %1881 = vmatprep.mubr.bf16.mxu0 0
        %1882 = vmatmul.mubr.bf16.gmra.mxu0 %v1844
        %v1883 = vpop.f32.mrf.mxu0
        %v1884 = vadd.f32 0.0, %v1883
        %v1885 = vpop.f32.mrf.mxu0
        %v1886 = vpop.f32.mrf.mxu0
        %v1887 = vpop.f32.mrf.mxu0
        %1888 = vdwg.mxu0
        %v1889 = vpack.c.bf16 %v1884, %v1884
        %v1890 = vld [vmem:[#allocation10 + $0x8] sm:$0xf]
        %v1892 = vsel %vm1053, %v1889, 0
        %v1895 = vsel %vm1117, %v1890, 0
        %1897 = vmatprep.subr.bf16.mxu0 0
        %1898 = vmatpush1.bf16.msra.mxu0 0
        %1899 = vmatprep.subr.bf16.mxu0 0
        %1900 = vmatpush1.bf16.msra.mxu0 0
        %1901 = vmatprep.subr.bf16.mxu0 0
        %1902 = vmatpush1.bf16.msra.mxu0 0
        %1903 = vmatprep.subr.bf16.mxu0 0
        %1904 = vmatpush1.bf16.msra.mxu0 0
        %1905 = vmatprep.subr.bf16.mxu0 0
        %1906 = vmatpush1.bf16.msra.mxu0 0
        %1907 = vmatprep.subr.bf16.mxu0 0
        %1908 = vmatpush1.bf16.msra.mxu0 0
        %1909 = vmatprep.subr.bf16.mxu0 0
        %1910 = vmatpush1.bf16.msra.mxu0 0
        %1911 = vmatprep.subr.bf16.mxu0 0
        %1912 = vmatpush1.bf16.msra.mxu0 %v1895
        %1913 = vmatprep.subr.bf16.mxu0 0
        %1914 = vmatpush2.bf16.msra.mxu0 0
        %1915 = vmatprep.subr.bf16.mxu0 0
        %1916 = vmatpush2.bf16.msra.mxu0 0
        %1917 = vmatprep.subr.bf16.mxu0 0
        %1918 = vmatpush2.bf16.msra.mxu0 0
        %1919 = vmatprep.subr.bf16.mxu0 0
        %1920 = vmatpush2.bf16.msra.mxu0 0
        %1921 = vmatprep.subr.bf16.mxu0 0
        %1922 = vmatpush2.bf16.msra.mxu0 0
        %1923 = vmatprep.subr.bf16.mxu0 0
        %1924 = vmatpush2.bf16.msra.mxu0 0
        %1925 = vmatprep.subr.bf16.mxu0 0
        %1926 = vmatpush2.bf16.msra.mxu0 0
        %1927 = vmatprep.subr.bf16.mxu0 0
        %1928 = vmatpush2.bf16.msra.mxu0 0
        %1929 = vmatprep.mubr.bf16.mxu0 0
        %1930 = vmatmul.mubr.bf16.gmra.mxu0 %v1892
        %v1931 = vpop.f32.mrf.mxu0
        %v1932 = vadd.f32 0.0, %v1931
        %v1933 = vpop.f32.mrf.mxu0
        %v1934 = vpop.f32.mrf.mxu0
        %v1935 = vpop.f32.mrf.mxu0
        %1936 = vdwg.mxu0
        %v1937 = vadd.f32 %v1568, %v1932
        %v1938 = vld [vmem:[%s4] sm:$0xf]
        %v1939 = vld [vmem:[%s4 + $0x4] sm:$0xf]
        %v1940 = vld [vmem:[%s4 + $0x8] sm:$0xf]
        %v1941 = vld [vmem:[%s4 + $0xc] sm:$0xf]
        %v1942 = vld [vmem:[#allocation2] sm:$0x1]
        %v1944 = vlaneseq
        %v1945 = vshrl.u32 %v1944, 7
        %v1946 = vsub.s32 0, %v1945
        %v1947 = vrot.slane %v1942, %v1946
        %v1952 = vunpack.c.l.b16 %v1938
        %v1953 = vunpack.c.l.b16 %v1939
        %v1954 = vunpack.c.l.b16 %v1940
        %v1955 = vunpack.c.l.b16 %v1941
        %v1956 = vpack.c.b16 %v1953, %v1952
        %v1957 = vpack.c.b16 %v1955, %v1954
        %1958 = vrot.lane.b32.xlu0 %v1956, 104
        %v1959 = vpop.permute.xlu0 %1958
        %1960 = vrot.lane.b32.xlu0 %v1957, 104
        %v1961 = vpop.permute.xlu0 %1960
        %1964 = vrot.lane.b32.xlu0 %v1947, 104
        %v1965 = vpop.permute.xlu0 %1964
        %1967 = vmatprep.subr.bf16.mxu0 0
        %1968 = vmatpush1.bf16.msra.mxu0 0
        %1969 = vmatprep.subr.bf16.mxu0 0
        %1970 = vmatpush1.bf16.msra.mxu0 0
        %1971 = vmatprep.subr.bf16.mxu0 0
        %1972 = vmatpush1.bf16.msra.mxu0 0
        %1973 = vmatprep.subr.bf16.mxu0 0
        %1974 = vmatpush1.bf16.msra.mxu0 0
        %1975 = vmatprep.subr.bf16.mxu0 0
        %1976 = vmatpush1.bf16.msra.mxu0 0
        %1977 = vmatprep.subr.bf16.mxu0 0
        %1978 = vmatpush1.bf16.msra.mxu0 0
        %1979 = vmatprep.subr.bf16.mxu0 0
        %1980 = vmatpush1.bf16.msra.mxu0 %v1961
        %1981 = vmatprep.subr.bf16.mxu0 0
        %1982 = vmatpush1.bf16.msra.mxu0 %v1959
        %1983 = vmatprep.subr.bf16.mxu0 0
        %1984 = vmatpush2.bf16.msra.mxu0 0
        %1985 = vmatprep.subr.bf16.mxu0 0
        %1986 = vmatpush2.bf16.msra.mxu0 0
        %1987 = vmatprep.subr.bf16.mxu0 0
        %1988 = vmatpush2.bf16.msra.mxu0 0
        %1989 = vmatprep.subr.bf16.mxu0 0
        %1990 = vmatpush2.bf16.msra.mxu0 0
        %1991 = vmatprep.subr.bf16.mxu0 0
        %1992 = vmatpush2.bf16.msra.mxu0 0
        %1993 = vmatprep.subr.bf16.mxu0 0
        %1994 = vmatpush2.bf16.msra.mxu0 0
        %1995 = vmatprep.subr.bf16.mxu0 0
        %1996 = vmatpush2.bf16.msra.mxu0 0
        %1997 = vmatprep.subr.bf16.mxu0 0
        %1998 = vmatpush2.bf16.msra.mxu0 0
        %1999 = vmatprep.mubr.bf16.mxu0 0
        %2000 = vmatmul.mubr.bf16.gmra.mxu0 %v880
        %v2001 = vpop.f32.mrf.mxu0
        %v2002 = vadd.f32 %v1965, %v2001
        %v2003 = vpop.f32.mrf.mxu0
        %v2004 = vpop.f32.mrf.mxu0
        %v2005 = vpop.f32.mrf.mxu0
        %2006 = vdwg.mxu0
        %v2007 = vld [vmem:[#allocation5] sm:$0xf]
        %v2008 = vld [vmem:[#allocation5 + $0x4] sm:$0xf]
        %v2009 = vld [vmem:[#allocation5 + $0x8] sm:$0xf]
        %v2010 = vld [vmem:[#allocation5 + $0xc] sm:$0xf]
        %v2011 = vld [vmem:[#allocation7] sm:$0x1]
        %v2013 = vlaneseq
        %v2014 = vshrl.u32 %v2013, 7
        %v2015 = vsub.s32 0, %v2014
        %v2016 = vrot.slane %v2011, %v2015
        %v2021 = vunpack.c.l.b16 %v2007
        %v2022 = vunpack.c.l.b16 %v2008
        %v2023 = vunpack.c.l.b16 %v2009
        %v2024 = vunpack.c.l.b16 %v2010
        %v2025 = vpack.c.b16 %v2022, %v2021
        %v2026 = vpack.c.b16 %v2024, %v2023
        %2027 = vrot.lane.b32.xlu0 %v2025, 104
        %v2028 = vpop.permute.xlu0 %2027
        %2029 = vrot.lane.b32.xlu0 %v2026, 104
        %v2030 = vpop.permute.xlu0 %2029
        %2033 = vrot.lane.b32.xlu0 %v2016, 104
        %v2034 = vpop.permute.xlu0 %2033
        %2036 = vmatprep.subr.bf16.mxu0 0
        %2037 = vmatpush1.bf16.msra.mxu0 0
        %2038 = vmatprep.subr.bf16.mxu0 0
        %2039 = vmatpush1.bf16.msra.mxu0 0
        %2040 = vmatprep.subr.bf16.mxu0 0
        %2041 = vmatpush1.bf16.msra.mxu0 0
        %2042 = vmatprep.subr.bf16.mxu0 0
        %2043 = vmatpush1.bf16.msra.mxu0 0
        %2044 = vmatprep.subr.bf16.mxu0 0
        %2045 = vmatpush1.bf16.msra.mxu0 0
        %2046 = vmatprep.subr.bf16.mxu0 0
        %2047 = vmatpush1.bf16.msra.mxu0 0
        %2048 = vmatprep.subr.bf16.mxu0 0
        %2049 = vmatpush1.bf16.msra.mxu0 %v2030
        %2050 = vmatprep.subr.bf16.mxu0 0
        %2051 = vmatpush1.bf16.msra.mxu0 %v2028
        %2052 = vmatprep.subr.bf16.mxu0 0
        %2053 = vmatpush2.bf16.msra.mxu0 0
        %2054 = vmatprep.subr.bf16.mxu0 0
        %2055 = vmatpush2.bf16.msra.mxu0 0
        %2056 = vmatprep.subr.bf16.mxu0 0
        %2057 = vmatpush2.bf16.msra.mxu0 0
        %2058 = vmatprep.subr.bf16.mxu0 0
        %2059 = vmatpush2.bf16.msra.mxu0 0
        %2060 = vmatprep.subr.bf16.mxu0 0
        %2061 = vmatpush2.bf16.msra.mxu0 0
        %2062 = vmatprep.subr.bf16.mxu0 0
        %2063 = vmatpush2.bf16.msra.mxu0 0
        %2064 = vmatprep.subr.bf16.mxu0 0
        %2065 = vmatpush2.bf16.msra.mxu0 0
        %2066 = vmatprep.subr.bf16.mxu0 0
        %2067 = vmatpush2.bf16.msra.mxu0 0
        %2068 = vmatprep.mubr.bf16.mxu0 0
        %2069 = vmatmul.mubr.bf16.gmra.mxu0 %v946
        %v2070 = vpop.f32.mrf.mxu0
        %v2071 = vadd.f32 %v2034, %v2070
        %v2072 = vpop.f32.mrf.mxu0
        %v2073 = vpop.f32.mrf.mxu0
        %v2074 = vpop.f32.mrf.mxu0
        %2075 = vdwg.mxu0
        %v2076 = vld [vmem:[#allocation8] sm:$0xf]
        %v2077 = vld [vmem:[#allocation8 + $0x4] sm:$0xf]
        %v2078 = vld [vmem:[#allocation8 + $0x8] sm:$0xf]
        %v2079 = vld [vmem:[#allocation8 + $0xc] sm:$0xf]
        %v2080 = vld [vmem:[%s9] sm:$0x1]
        %v2082 = vlaneseq
        %v2083 = vshrl.u32 %v2082, 7
        %v2084 = vsub.s32 0, %v2083
        %v2085 = vrot.slane %v2080, %v2084
        %v2090 = vunpack.c.l.b16 %v2076
        %v2091 = vunpack.c.l.b16 %v2077
        %v2092 = vunpack.c.l.b16 %v2078
        %v2093 = vunpack.c.l.b16 %v2079
        %v2094 = vpack.c.b16 %v2091, %v2090
        %v2095 = vpack.c.b16 %v2093, %v2092
        %2096 = vrot.lane.b32.xlu0 %v2094, 104
        %v2097 = vpop.permute.xlu0 %2096
        %2098 = vrot.lane.b32.xlu0 %v2095, 104
        %v2099 = vpop.permute.xlu0 %2098
        %2102 = vrot.lane.b32.xlu0 %v2085, 104
        %v2103 = vpop.permute.xlu0 %2102
        %2105 = vmatprep.subr.bf16.mxu0 0
        %2106 = vmatpush1.bf16.msra.mxu0 0
        %2107 = vmatprep.subr.bf16.mxu0 0
        %2108 = vmatpush1.bf16.msra.mxu0 0
        %2109 = vmatprep.subr.bf16.mxu0 0
        %2110 = vmatpush1.bf16.msra.mxu0 0
        %2111 = vmatprep.subr.bf16.mxu0 0
        %2112 = vmatpush1.bf16.msra.mxu0 0
        %2113 = vmatprep.subr.bf16.mxu0 0
        %2114 = vmatpush1.bf16.msra.mxu0 0
        %2115 = vmatprep.subr.bf16.mxu0 0
        %2116 = vmatpush1.bf16.msra.mxu0 0
        %2117 = vmatprep.subr.bf16.mxu0 0
        %2118 = vmatpush1.bf16.msra.mxu0 %v2099
        %2119 = vmatprep.subr.bf16.mxu0 0
        %2120 = vmatpush1.bf16.msra.mxu0 %v2097
        %2121 = vmatprep.subr.bf16.mxu0 0
        %2122 = vmatpush2.bf16.msra.mxu0 0
        %2123 = vmatprep.subr.bf16.mxu0 0
        %2124 = vmatpush2.bf16.msra.mxu0 0
        %2125 = vmatprep.subr.bf16.mxu0 0
        %2126 = vmatpush2.bf16.msra.mxu0 0
        %2127 = vmatprep.subr.bf16.mxu0 0
        %2128 = vmatpush2.bf16.msra.mxu0 0
        %2129 = vmatprep.subr.bf16.mxu0 0
        %2130 = vmatpush2.bf16.msra.mxu0 0
        %2131 = vmatprep.subr.bf16.mxu0 0
        %2132 = vmatpush2.bf16.msra.mxu0 0
        %2133 = vmatprep.subr.bf16.mxu0 0
        %2134 = vmatpush2.bf16.msra.mxu0 0
        %2135 = vmatprep.subr.bf16.mxu0 0
        %2136 = vmatpush2.bf16.msra.mxu0 0
        %2137 = vmatprep.mubr.bf16.mxu0 0
        %2138 = vmatmul.mubr.bf16.gmra.mxu0 %v946
        %v2139 = vpop.f32.mrf.mxu0
        %v2140 = vadd.f32 %v2103, %v2139
        %v2141 = vpop.f32.mrf.mxu0
        %v2142 = vpop.f32.mrf.mxu0
        %v2143 = vpop.f32.mrf.mxu0
        %2144 = vdwg.mxu0
        %v2145 = vpack.c.bf16 %v2002, %v2002
        %v2146 = vpack.c.bf16 %v2071, %v2071
        %v2148 = vsel %vm1053, %v2145, 0
        %v2151 = vsel %vm1053, %v2146, 0
        %2153 = vmatprep.subr.bf16.mxu0 0
        %2154 = vmatpush1.bf16.xpose.msra.mxu0 0
        %2155 = vmatprep.subr.bf16.mxu0 0
        %2156 = vmatpush1.bf16.xpose.msra.mxu0 0
        %2157 = vmatprep.subr.bf16.mxu0 0
        %2158 = vmatpush1.bf16.xpose.msra.mxu0 0
        %2159 = vmatprep.subr.bf16.mxu0 0
        %2160 = vmatpush1.bf16.xpose.msra.mxu0 0
        %2161 = vmatprep.subr.bf16.mxu0 0
        %2162 = vmatpush1.bf16.xpose.msra.mxu0 0
        %2163 = vmatprep.subr.bf16.mxu0 0
        %2164 = vmatpush1.bf16.xpose.msra.mxu0 0
        %2165 = vmatprep.subr.bf16.mxu0 0
        %2166 = vmatpush1.bf16.xpose.msra.mxu0 0
        %2167 = vmatprep.subr.bf16.mxu0 0
        %2168 = vmatpush1.bf16.xpose.msra.mxu0 %v2151
        %2169 = vmatprep.subr.bf16.mxu0 0
        %2170 = vmatpush2.bf16.xpose.msra.mxu0 0
        %2171 = vmatprep.subr.bf16.mxu0 0
        %2172 = vmatpush2.bf16.xpose.msra.mxu0 0
        %2173 = vmatprep.subr.bf16.mxu0 0
        %2174 = vmatpush2.bf16.xpose.msra.mxu0 0
        %2175 = vmatprep.subr.bf16.mxu0 0
        %2176 = vmatpush2.bf16.xpose.msra.mxu0 0
        %2177 = vmatprep.subr.bf16.mxu0 0
        %2178 = vmatpush2.bf16.xpose.msra.mxu0 0
        %2179 = vmatprep.subr.bf16.mxu0 0
        %2180 = vmatpush2.bf16.xpose.msra.mxu0 0
        %2181 = vmatprep.subr.bf16.mxu0 0
        %2182 = vmatpush2.bf16.xpose.msra.mxu0 0
        %2183 = vmatprep.subr.bf16.mxu0 0
        %2184 = vmatpush2.bf16.xpose.msra.mxu0 0
        %2185 = vmatprep.mubr.bf16.mxu0 0
        %2186 = vmatmul.mubr.bf16.gmra.mxu0 %v2148
        %v2187 = vpop.f32.mrf.mxu0
        %v2188 = vadd.f32 %v853, %v2187
        %v2189 = vpop.f32.mrf.mxu0
        %v2190 = vpop.f32.mrf.mxu0
        %v2191 = vpop.f32.mrf.mxu0
        %2192 = vdwg.mxu0
        %v2193 = vsel %vm1053, %v2188, -inf
        %2194 = vmax.xlane.f32.xlu0 %v2193
        %v2195 = vpop.xlane.xlu0 %2194
        %v2196 = vsub.f32 %v2188, %v2195
        %v2197 = vmul.f32 %v2196, 1.442695
        %v2198 = vpow.pop %v2197
        %v2199 = vsel %vm1053, %v2198, 0.0
        %2200 = vadd.xlane.f32.xlu0 %v2199
        %v2201 = vpop.xlane.xlu0 %2200
        %v2202 = vrcp.pop %v2201
        %v2203 = vmul.f32 %v2198, %v2202
        %s2204 = scalar_lea.vmem %s821, 24 [#allocation14]
        %2205 = vst.msk [vmem:[%s2204] sm:$0xff] %vm1053, %v2203
        %v2206 = vpack.c.bf16 %v2203, %v2203
        %v2207 = vpack.c.bf16 %v2140, %v2140
        %v2209 = vsel %vm1053, %v2206, 0
        %v2212 = vsel %vm1117, %v2207, 0
        %2214 = vmatprep.subr.bf16.mxu0 0
        %2215 = vmatpush1.bf16.msra.mxu0 0
        %2216 = vmatprep.subr.bf16.mxu0 0
        %2217 = vmatpush1.bf16.msra.mxu0 0
        %2218 = vmatprep.subr.bf16.mxu0 0
        %2219 = vmatpush1.bf16.msra.mxu0 0
        %2220 = vmatprep.subr.bf16.mxu0 0
        %2221 = vmatpush1.bf16.msra.mxu0 0
        %2222 = vmatprep.subr.bf16.mxu0 0
        %2223 = vmatpush1.bf16.msra.mxu0 0
        %2224 = vmatprep.subr.bf16.mxu0 0
        %2225 = vmatpush1.bf16.msra.mxu0 0
        %2226 = vmatprep.subr.bf16.mxu0 0
        %2227 = vmatpush1.bf16.msra.mxu0 0
        %2228 = vmatprep.subr.bf16.mxu0 0
        %2229 = vmatpush1.bf16.msra.mxu0 %v2212
        %2230 = vmatprep.subr.bf16.mxu0 0
        %2231 = vmatpush2.bf16.msra.mxu0 0
        %2232 = vmatprep.subr.bf16.mxu0 0
        %2233 = vmatpush2.bf16.msra.mxu0 0
        %2234 = vmatprep.subr.bf16.mxu0 0
        %2235 = vmatpush2.bf16.msra.mxu0 0
        %2236 = vmatprep.subr.bf16.mxu0 0
        %2237 = vmatpush2.bf16.msra.mxu0 0
        %2238 = vmatprep.subr.bf16.mxu0 0
        %2239 = vmatpush2.bf16.msra.mxu0 0
        %2240 = vmatprep.subr.bf16.mxu0 0
        %2241 = vmatpush2.bf16.msra.mxu0 0
        %2242 = vmatprep.subr.bf16.mxu0 0
        %2243 = vmatpush2.bf16.msra.mxu0 0
        %2244 = vmatprep.subr.bf16.mxu0 0
        %2245 = vmatpush2.bf16.msra.mxu0 0
        %2246 = vmatprep.mubr.bf16.mxu0 0
        %2247 = vmatmul.mubr.bf16.gmra.mxu0 %v2209
        %v2248 = vpop.f32.mrf.mxu0
        %v2249 = vadd.f32 0.0, %v2248
        %v2250 = vpop.f32.mrf.mxu0
        %v2251 = vpop.f32.mrf.mxu0
        %v2252 = vpop.f32.mrf.mxu0
        %2253 = vdwg.mxu0
        %v2254 = vpack.c.bf16 %v2249, %v2249
        %v2255 = vld [vmem:[#allocation10 + $0xc] sm:$0xf]
        %v2257 = vsel %vm1053, %v2254, 0
        %v2260 = vsel %vm1117, %v2255, 0
        %2262 = vmatprep.subr.bf16.mxu0 0
        %2263 = vmatpush1.bf16.msra.mxu0 0
        %2264 = vmatprep.subr.bf16.mxu0 0
        %2265 = vmatpush1.bf16.msra.mxu0 0
        %2266 = vmatprep.subr.bf16.mxu0 0
        %2267 = vmatpush1.bf16.msra.mxu0 0
        %2268 = vmatprep.subr.bf16.mxu0 0
        %2269 = vmatpush1.bf16.msra.mxu0 0
        %2270 = vmatprep.subr.bf16.mxu0 0
        %2271 = vmatpush1.bf16.msra.mxu0 0
        %2272 = vmatprep.subr.bf16.mxu0 0
        %2273 = vmatpush1.bf16.msra.mxu0 0
        %2274 = vmatprep.subr.bf16.mxu0 0
        %2275 = vmatpush1.bf16.msra.mxu0 0
        %2276 = vmatprep.subr.bf16.mxu0 0
        %2277 = vmatpush1.bf16.msra.mxu0 %v2260
        %2278 = vmatprep.subr.bf16.mxu0 0
        %2279 = vmatpush2.bf16.msra.mxu0 0
        %2280 = vmatprep.subr.bf16.mxu0 0
        %2281 = vmatpush2.bf16.msra.mxu0 0
        %2282 = vmatprep.subr.bf16.mxu0 0
        %2283 = vmatpush2.bf16.msra.mxu0 0
        %2284 = vmatprep.subr.bf16.mxu0 0
        %2285 = vmatpush2.bf16.msra.mxu0 0
        %2286 = vmatprep.subr.bf16.mxu0 0
        %2287 = vmatpush2.bf16.msra.mxu0 0
        %2288 = vmatprep.subr.bf16.mxu0 0
        %2289 = vmatpush2.bf16.msra.mxu0 0
        %2290 = vmatprep.subr.bf16.mxu0 0
        %2291 = vmatpush2.bf16.msra.mxu0 0
        %2292 = vmatprep.subr.bf16.mxu0 0
        %2293 = vmatpush2.bf16.msra.mxu0 0
        %2294 = vmatprep.mubr.bf16.mxu0 0
        %2295 = vmatmul.mubr.bf16.gmra.mxu0 %v2257
        %v2296 = vpop.f32.mrf.mxu0
        %v2297 = vadd.f32 0.0, %v2296
        %v2298 = vpop.f32.mrf.mxu0
        %v2299 = vpop.f32.mrf.mxu0
        %v2300 = vpop.f32.mrf.mxu0
        %2301 = vdwg.mxu0
        %v2302 = vadd.f32 %v1937, %v2297
        %v2303 = vld [vmem:[%s11] sm:$0x1]
        %v2305 = vlaneseq
        %v2306 = vshrl.u32 %v2305, 7
        %v2307 = vsub.s32 0, %v2306
        %v2308 = vrot.slane %v2303, %v2307
        %v2310 = vadd.f32 %v2302, %v2308
        %v2311 = vadd.f32 %v2310, %v848
        %v2312 = vsel %vm878, %v2311, 0.0
        %2313 = vadd.xlane.f32.xlu0 %v2312
        %v2314 = vpop.xlane.xlu0 %2313
        %v2315 = vrcp.pop 32.0
        %v2316 = vmul.f32 %v2314, %v2315
        %v2317 = vmul.f32 %v2311, %v2311
        %v2318 = vsel %vm878, %v2317, 0.0
        %2319 = vadd.xlane.f32.xlu0 %v2318
        %v2320 = vpop.xlane.xlu0 %2319
        %v2321 = vmul.f32 %v2320, %v2315
        %v2322 = vsub.f32 %v2311, %v2316
        %v2323 = vmul.f32 %v2316, %v2316
        %v2324 = vsub.f32 %v2321, %v2323
        %v2325 = vadd.f32 %v2324, 1e-05
        %v2326 = vrsqrt.pop %v2325
        %v2327 = vmul.f32 %v2322, %v2326
        %v2328 = vld [vmem:[%s12] sm:$0x1]
        %v2330 = vlaneseq
        %v2331 = vshrl.u32 %v2330, 7
        %v2332 = vsub.s32 0, %v2331
        %v2333 = vrot.slane %v2328, %v2332
        %v2335 = vmul.f32 %v2327, %v2333
        %v2336 = vld [vmem:[%s13] sm:$0x1]
        %v2338 = vlaneseq
        %v2339 = vshrl.u32 %v2338, 7
        %v2340 = vsub.s32 0, %v2339
        %v2341 = vrot.slane %v2336, %v2340
        %v2343 = vadd.f32 %v2335, %v2341
        %2345 = vset.pattern.permute.xlu0 0
        %2346 = vperm.xlu0 %2345, %v854
        %v2347 = vpop.permute.xlu0 %2346
        %v2349 = vmul.f32 %v2343, %v2347
        %v2350 = vpack.c.bf16 %v2349, %v2349
        %v2351 = vld [vmem:[#allocation11] sm:$0xf]
        %v2352 = vld [vmem:[#allocation11 + $0x4] sm:$0xf]
        %v2353 = vld [vmem:[#allocation11 + $0x8] sm:$0xf]
        %v2354 = vld [vmem:[#allocation11 + $0xc] sm:$0xf]
        %v2355 = vld [vmem:[%s15] sm:$0x1]
        %v2357 = vlaneseq
        %v2358 = vshrl.u32 %v2357, 7
        %v2359 = vsub.s32 0, %v2358
        %v2360 = vrot.slane %v2355, %v2359
        %v2366 = vunpack.c.l.b16 %v2351
        %v2367 = vunpack.c.l.b16 %v2352
        %v2368 = vunpack.c.l.b16 %v2353
        %v2369 = vunpack.c.l.b16 %v2354
        %v2370 = vpack.c.b16 %v2367, %v2366
        %v2371 = vpack.c.b16 %v2369, %v2368
        %v2375 = vsel %vm878, %v2350, 0
        %2377 = vmatprep.subr.bf16.mxu0 0
        %2378 = vmatpush1.bf16.msra.mxu0 0
        %2379 = vmatprep.subr.bf16.mxu0 0
        %2380 = vmatpush1.bf16.msra.mxu0 0
        %2381 = vmatprep.subr.bf16.mxu0 0
        %2382 = vmatpush1.bf16.msra.mxu0 0
        %2383 = vmatprep.subr.bf16.mxu0 0
        %2384 = vmatpush1.bf16.msra.mxu0 0
        %2385 = vmatprep.subr.bf16.mxu0 0
        %2386 = vmatpush1.bf16.msra.mxu0 0
        %2387 = vmatprep.subr.bf16.mxu0 0
        %2388 = vmatpush1.bf16.msra.mxu0 0
        %2389 = vmatprep.subr.bf16.mxu0 0
        %2390 = vmatpush1.bf16.msra.mxu0 %v2371
        %2391 = vmatprep.subr.bf16.mxu0 0
        %2392 = vmatpush1.bf16.msra.mxu0 %v2370
        %2393 = vmatprep.subr.bf16.mxu0 0
        %2394 = vmatpush2.bf16.msra.mxu0 0
        %2395 = vmatprep.subr.bf16.mxu0 0
        %2396 = vmatpush2.bf16.msra.mxu0 0
        %2397 = vmatprep.subr.bf16.mxu0 0
        %2398 = vmatpush2.bf16.msra.mxu0 0
        %2399 = vmatprep.subr.bf16.mxu0 0
        %2400 = vmatpush2.bf16.msra.mxu0 0
        %2401 = vmatprep.subr.bf16.mxu0 0
        %2402 = vmatpush2.bf16.msra.mxu0 0
        %2403 = vmatprep.subr.bf16.mxu0 0
        %2404 = vmatpush2.bf16.msra.mxu0 0
        %2405 = vmatprep.subr.bf16.mxu0 0
        %2406 = vmatpush2.bf16.msra.mxu0 0
        %2407 = vmatprep.subr.bf16.mxu0 0
        %2408 = vmatpush2.bf16.msra.mxu0 0
        %2409 = vmatprep.mubr.bf16.mxu0 0
        %2410 = vmatmul.mubr.bf16.gmra.mxu0 %v2375
        %v2411 = vpop.f32.mrf.mxu0
        %v2412 = vadd.f32 %v2360, %v2411
        %v2413 = vpop.f32.mrf.mxu0
        %v2414 = vpop.f32.mrf.mxu0
        %v2415 = vpop.f32.mrf.mxu0
        %2416 = vdwg.mxu0
        %v2417 = vmax.f32 %v2412, 0.0
        %v2418 = vpack.c.bf16 %v2417, %v2417
        %v2419 = vld [vmem:[%s16] sm:$0xf]
        %v2420 = vld [vmem:[%s16 + $0x4] sm:$0xf]
        %v2421 = vld [vmem:[%s16 + $0x8] sm:$0xf]
        %v2422 = vld [vmem:[%s16 + $0xc] sm:$0xf]
        %v2423 = vld [vmem:[%s16 + $0x10] sm:$0xf]
        %v2424 = vld [vmem:[%s16 + $0x14] sm:$0xf]
        %v2425 = vld [vmem:[%s16 + $0x18] sm:$0xf]
        %v2426 = vld [vmem:[%s16 + $0x1c] sm:$0xf]
        %v2427 = vld [vmem:[%s17] sm:$0x1]
        %v2429 = vlaneseq
        %v2430 = vshrl.u32 %v2429, 7
        %v2431 = vsub.s32 0, %v2430
        %v2432 = vrot.slane %v2427, %v2431
        %v2442 = vunpack.c.l.b16 %v2419
        %v2443 = vunpack.c.l.b16 %v2420
        %v2444 = vunpack.c.l.b16 %v2421
        %v2445 = vunpack.c.l.b16 %v2422
        %v2446 = vunpack.c.l.b16 %v2423
        %v2447 = vunpack.c.l.b16 %v2424
        %v2448 = vunpack.c.l.b16 %v2425
        %v2449 = vunpack.c.l.b16 %v2426
        %v2450 = vpack.c.b16 %v2443, %v2442
        %v2451 = vpack.c.b16 %v2445, %v2444
        %v2452 = vpack.c.b16 %v2447, %v2446
        %v2453 = vpack.c.b16 %v2449, %v2448
        %vm2458 = vcmask 523264
        %v2460 = vsel %vm2458, %v2418, 0
        %2462 = vmatprep.subr.bf16.mxu0 0
        %2463 = vmatpush1.bf16.msra.mxu0 0
        %2464 = vmatprep.subr.bf16.mxu0 0
        %2465 = vmatpush1.bf16.msra.mxu0 0
        %2466 = vmatprep.subr.bf16.mxu0 0
        %2467 = vmatpush1.bf16.msra.mxu0 0
        %2468 = vmatprep.subr.bf16.mxu0 0
        %2469 = vmatpush1.bf16.msra.mxu0 0
        %2470 = vmatprep.subr.bf16.mxu0 0
        %2471 = vmatpush1.bf16.msra.mxu0 %v2453
        %2472 = vmatprep.subr.bf16.mxu0 0
        %2473 = vmatpush1.bf16.msra.mxu0 %v2452
        %2474 = vmatprep.subr.bf16.mxu0 0
        %2475 = vmatpush1.bf16.msra.mxu0 %v2451
        %2476 = vmatprep.subr.bf16.mxu0 0
        %2477 = vmatpush1.bf16.msra.mxu0 %v2450
        %2478 = vmatprep.subr.bf16.mxu0 0
        %2479 = vmatpush2.bf16.msra.mxu0 0
        %2480 = vmatprep.subr.bf16.mxu0 0
        %2481 = vmatpush2.bf16.msra.mxu0 0
        %2482 = vmatprep.subr.bf16.mxu0 0
        %2483 = vmatpush2.bf16.msra.mxu0 0
        %2484 = vmatprep.subr.bf16.mxu0 0
        %2485 = vmatpush2.bf16.msra.mxu0 0
        %2486 = vmatprep.subr.bf16.mxu0 0
        %2487 = vmatpush2.bf16.msra.mxu0 0
        %2488 = vmatprep.subr.bf16.mxu0 0
        %2489 = vmatpush2.bf16.msra.mxu0 0
        %2490 = vmatprep.subr.bf16.mxu0 0
        %2491 = vmatpush2.bf16.msra.mxu0 0
        %2492 = vmatprep.subr.bf16.mxu0 0
        %2493 = vmatpush2.bf16.msra.mxu0 0
        %2494 = vmatprep.mubr.bf16.mxu0 0
        %2495 = vmatmul.mubr.bf16.gmra.mxu0 %v2460
        %v2496 = vpop.f32.mrf.mxu0
        %v2497 = vadd.f32 %v2432, %v2496
        %v2498 = vpop.f32.mrf.mxu0
        %v2499 = vpop.f32.mrf.mxu0
        %v2500 = vpop.f32.mrf.mxu0
        %2501 = vdwg.mxu0
        %v2502 = vadd.f32 %v2497, %v2349
        %v2503 = vsel %vm878, %v2502, 0.0
        %2504 = vadd.xlane.f32.xlu0 %v2503
        %v2505 = vpop.xlane.xlu0 %2504
        %v2506 = vmul.f32 %v2505, %v2315
        %v2507 = vmul.f32 %v2502, %v2502
        %v2508 = vsel %vm878, %v2507, 0.0
        %2509 = vadd.xlane.f32.xlu0 %v2508
        %v2510 = vpop.xlane.xlu0 %2509
        %v2511 = vmul.f32 %v2510, %v2315
        %v2512 = vsub.f32 %v2502, %v2506
        %v2513 = vmul.f32 %v2506, %v2506
        %v2514 = vsub.f32 %v2511, %v2513
        %v2515 = vadd.f32 %v2514, 1e-05
        %v2516 = vrsqrt.pop %v2515
        %v2517 = vmul.f32 %v2512, %v2516
        %v2518 = vld [vmem:[%s18] sm:$0x1]
        %v2520 = vlaneseq
        %v2521 = vshrl.u32 %v2520, 7
        %v2522 = vsub.s32 0, %v2521
        %v2523 = vrot.slane %v2518, %v2522
        %v2525 = vmul.f32 %v2517, %v2523
        %v2526 = vld [vmem:[%s19] sm:$0x1]
        %v2528 = vlaneseq
        %v2529 = vshrl.u32 %v2528, 7
        %v2530 = vsub.s32 0, %v2529
        %v2531 = vrot.slane %v2526, %v2530
        %v2533 = vadd.f32 %v2525, %v2531
        %v2534 = vmul.f32 %v2533, %v2347
        %2535 = vst.msk [vmem:[%s814] sm:$0xff] %vm878, %v2534
        %s2536 = sand.u32 %s511, 1
        %s2537 = scalar_lea.sflag [#allocation4], %s2536
        %s2538 = sand.u32 %s511, 1
        %s2539 = smul.addr %s2538, 8
        %s2540 = scalar_lea.vmem [#allocation13], %s2539
        %s2541 = sand.u32 %s539, 1
        %s2542 = scalar_lea.sflag [#allocation15], %s2541
        %s2543 = sand.u32 %s539, 1
        %s2544 = smul.addr %s2543, 32
        %s2545 = scalar_lea.vmem [#allocation14], %s2544
        // Predicated region
        $region125: #{tpu_custom_call.1} parent=99 // pred_check
          %p2546 = pneg %p521
        $region126: #{tpu_custom_call.1} parent=99 // pred_check_branch
          %2548 = sbr.rel (%p2546) target = $region128
        $region127: #{tpu_custom_call.1} parent=99 // pred_region
          %s2550 = ssub.s32 128, 128
          %2551 = vsyncadd %s2537, %s2550
          %s2552 = sadd.s32 %s48, %s47
          %s2553 = smul.addr %s2552, 128
          %s2554 = scalar_lea.hbm %s20, %s2553
          %s2556 = sshll.u32 %s2540, 4
          %s2557 = int_to_ptr.vmem [resolvable:$true] %s2556
          %2559 = dma.vmem_to_hbm [thread:$0]  %s2557, 128, %s2554, %s2537
        $region128: #{tpu_custom_call.1} parent=99 // pred_fallthru
          _
        // Predicated region
        $region129: #{tpu_custom_call.1} parent=99 // pred_check
          %p2560 = pneg %p549
        $region130: #{tpu_custom_call.1} parent=99 // pred_check_branch
          %2562 = sbr.rel (%p2560) target = $region132
        $region131: #{tpu_custom_call.1} parent=99 // pred_region
          %s2564 = ssub.s32 512, 512
          %2565 = vsyncadd %s2542, %s2564
          %s2566 = sadd.s32 %s48, %s47
          %s2567 = smul.addr %s2566, 128
          %s2568 = scalar_lea.hbm %s21, %s2567
          %s2569 = sshll.u32 %s2545, 4
          %s2570 = int_to_ptr.vmem [resolvable:$true] %s2569
          %2575 = dma.vmem_to_hbm [thread:$0]  %s2570, 512, %s2568, %s2542, 128, 256, 8
        $region132: #{tpu_custom_call.1} parent=99 // pred_fallthru
          _
      $region100: #{tpu_custom_call.1} parent=5 // pred_fallthru
        _
      %p2576 = scmp.le.s32.totalorder 2, %s38
      // Predicated region
      $region133: #{tpu_custom_call.1} parent=5 // pred_check
        %p2577 = pneg %p2576
      $region134: #{tpu_custom_call.1} parent=5 // pred_check_branch
        %2579 = sbr.rel (%p2577) target = $region136
      $region135: #{tpu_custom_call.1} parent=5 // pred_region
        %s2580 = ssub.s32 %s38, 2
        // Predicated region
        $region137: #{tpu_custom_call.1} parent=135 // pred_check
          %p2581 = pneg %p527
        $region138: #{tpu_custom_call.1} parent=135 // pred_check_branch
          %2583 = sbr.rel (%p2581) target = $region140
        $region139: #{tpu_custom_call.1} parent=135 // pred_region
          %s2584 = sand.u32 %s512, 1
          %s2585 = scalar_lea.sflag [#allocation4], %s2584
          %s2586 = sand.u32 %s512, 1
          %s2587 = smul.addr %s2586, 8
          %s2588 = scalar_lea.vmem [#allocation13], %s2587
          %2589 = dma.done %s2585, 128
        $region140: #{tpu_custom_call.1} parent=135 // pred_fallthru
          _
        // Predicated region
        $region141: #{tpu_custom_call.1} parent=135 // pred_check
          %p2590 = pneg %p555
        $region142: #{tpu_custom_call.1} parent=135 // pred_check_branch
          %2592 = sbr.rel (%p2590) target = $region144
        $region143: #{tpu_custom_call.1} parent=135 // pred_region
          %s2593 = sand.u32 %s540, 1
          %s2594 = scalar_lea.sflag [#allocation15], %s2593
          %s2595 = sand.u32 %s540, 1
          %s2596 = smul.addr %s2595, 32
          %s2597 = scalar_lea.vmem [#allocation14], %s2596
          %2598 = dma.done %s2594, 512
        $region144: #{tpu_custom_call.1} parent=135 // pred_fallthru
          _
      $region136: #{tpu_custom_call.1} parent=5 // pred_fallthru
        _
    $region6: #{tpu_custom_call.1} parent=1 // loop_footer
      %s42 = sadd.s32 1, %s38
    $region7: #{tpu_custom_call.1} parent=1 // loop_footer_branch
      %37 = sbr.rel target = $region3
    $region8: #{tpu_custom_call.1} parent=1 // loop_exit
      _
    %2599 = vsyncpa [#allocation3], 1
    %s2600 = scalar_lea.sflag [#allocation3], 1
    %2601 = vsyncpa %s2600, 1
    %2602 = vsyncpa [#allocation6], 1
    %2603 = vsyncpa [#allocation9], 1
    %2604 = vsyncpa [#allocation12], 1
    %2605 = vsyncpa [#allocation4], 1
    %s2606 = scalar_lea.sflag [#allocation4], 1
    %2607 = vsyncpa %s2606, 1
    %2608 = vsyncpa [#allocation15], 1
    %s2609 = scalar_lea.sflag [#allocation15], 1
    %2610 = vsyncpa %s2609, 1

</llo_original>
